<compile_context>
chip_gen: v6e
topology: v6e:2x2x1
jax: 0.10.0
libtpu: 0.0.40
codegen_flags: <defaults>
</compile_context>

<pallas_src>
import functools

import jax
import jax.numpy as jnp
from jax.experimental import pallas as pl
from jax.experimental.pallas import tpu as pltpu

LN_EPS = 1e-5        # PyTorch nn.LayerNorm default
ROW_CAP = 512        # target rows per tile before VMEM budgeting
CLASS_CAP = 2048     # max padded-class columns per tile


def _round_up(x, m):
    return ((x + m - 1) // m) * m


def _sublane_pack(dtype):
    """Rows per packed vreg sublane group: 8 f32 / 16 bf16 / 32 int8-fp8."""
    return max(8, 32 // jnp.dtype(dtype).itemsize)


def _vmem_capacity_bytes():
    try:
        info = pltpu.get_tpu_info()
        return int(getattr(info, "vmem_capacity_bytes", 64 << 20))
    except Exception:
        return 64 << 20      # conservative default: v7x per-TensorCore VMEM


def _spec(shape, index_map, *, single_buffer=False):
    """BlockSpec; optionally single-buffered for grid-constant operands."""
    if single_buffer and hasattr(pl, "Buffered"):
        try:
            return pl.BlockSpec(shape, index_map, pipeline_mode=pl.Buffered(1))
        except TypeError:
            pass
    return pl.BlockSpec(shape, index_map)


def _cls_head_kernel(x_ref, g_ref, b_ref, w_ref, bias_ref, o_ref):
    """Fused LayerNorm + Linear on one (row-tile, class-tile) block.

    x_ref:    (TM, E)   input rows
    g_ref:    (1, E)    LayerNorm gamma
    b_ref:    (1, E)    LayerNorm beta
    w_ref:    (E, TN)   Linear weight slice, (in, out) layout, lane-padded
    bias_ref: (1, TN)   Linear bias slice
    o_ref:    (TM, TN)  output tile
    """
    x = x_ref[...].astype(jnp.float32)

    # LayerNorm over the embedding axis (biased variance, like PyTorch), f32.
    mean = jnp.mean(x, axis=-1, keepdims=True)
    centered = x - mean
    var = jnp.mean(centered * centered, axis=-1, keepdims=True)
    xn = centered * jax.lax.rsqrt(var + LN_EPS)
    y = xn * g_ref[...].astype(jnp.float32) + b_ref[...].astype(jnp.float32)

    # MXU matmul in the weight's native dtype (bf16 fast path when params are
    # bf16), accumulated in f32.
    out = jnp.dot(y.astype(w_ref.dtype), w_ref[...],
                  preferred_element_type=jnp.float32)
    o_ref[...] = (out + bias_ref[...].astype(jnp.float32)).astype(o_ref.dtype)


def prepare_params(ln_w, ln_b, lin_w, lin_b):
    """One-time parameter layout: weight -> (E, C_pad), bias -> (1, C_pad).

    Hoisted out of the per-call forward so the transpose + lane-pad is not
    re-materialized in HBM on every call.
    """
    C, E = lin_w.shape
    C_pad = _round_up(C, 128)
    w = jnp.asarray(lin_w).T                       # (E, C): contract over embed
    b = jnp.asarray(lin_b).reshape(1, C)
    if C_pad != C:
        w = jnp.pad(w, ((0, 0), (0, C_pad - C)))
        b = jnp.pad(b, ((0, 0), (0, C_pad - C)))
    gamma = jnp.asarray(ln_w).reshape(1, E)
    beta = jnp.asarray(ln_b).reshape(1, E)
    return gamma, beta, w, b


@functools.partial(jax.jit, static_argnames=("n_classes",))
def classification_forward(x, gamma, beta, w_ec, bias_c, *, n_classes):
    """x: (B, N, E). Returns (B, N, n_classes) = Linear(LayerNorm(x)).

    `gamma, beta, w_ec, bias_c` come from `prepare_params`.
    """
    B, N, E = x.shape
    E_w, C_pad = w_ec.shape
    assert E_w == E and C_pad % 128 == 0
    M = B * N
    x_item = jnp.dtype(x.dtype).itemsize
    w_item = jnp.dtype(w_ec.dtype).itemsize
    sub = _sublane_pack(x.dtype)

    # No row padding of the activation; ragged last block -> masked writes.
    # (Rows are independent, so undefined tail rows never affect valid output.)
    x2 = x.reshape(M, E)
    if M < sub:                       # guard only for degenerate tiny inputs
        x2 = jnp.pad(x2, ((0, sub - M), (0, 0)))
    M_rows = x2.shape[0]

    # ---- tile selection under a generation-aware VMEM budget ---------------
    vmem_cap = _vmem_capacity_bytes()
    budget = max(16 << 20, int(vmem_cap * 0.45))

    def footprint(tm, tn):
        pipe = (2 * tm * E * x_item            # x, double-buffered
                + 2 * E * tn * w_item          # weight (<= 2 buffers)
                + 2 * tm * tn * x_item         # output, double-buffered
                + (2 * E + 2 * tn) * w_item)   # gamma/beta/bias
        scratch = (3 * tm * E + tm * tn) * 4   # f32 LN temps + f32 accumulator
        return pipe + scratch

    row_cap = _round_up(ROW_CAP, sub)
    tm = M_rows if M_rows <= row_cap else row_cap
    tn = min(C_pad, CLASS_CAP)
    # Shrink the class tile first (keeps the MXU row dim fat), then the rows.
    while tn > 128 and footprint(tm, tn) > budget:
        tn = max(128, _round_up(tn // 2, 128))
    while tm > sub and footprint(tm, tn) > budget:
        tm = max(sub, _round_up(tm // 2, sub))

    grid_m = pl.cdiv(M_rows, tm)
    grid_n = pl.cdiv(C_pad, tn)
    weight_is_resident = (grid_n == 1)

    cost = pl.CostEstimate(
        flops=2 * M_rows * E * C_pad + 8 * M_rows * E,
        transcendentals=M_rows,
        bytes_accessed=(grid_n * M_rows * E * x_item
                        + E * C_pad * w_item
                        + M_rows * C_pad * x_item
                        + (2 * E + C_pad) * w_item),
    )

    vmem_limit = int(min(max(2 * footprint(tm, tn), 32 << 20),
                         vmem_cap * 3 // 4))

    out2 = pl.pallas_call(
        _cls_head_kernel,
        out_shape=jax.ShapeDtypeStruct((M_rows, C_pad), x.dtype),
        grid_spec=pltpu.PrefetchScalarGridSpec(
            num_scalar_prefetch=0,
            grid=(grid_m, grid_n),
            in_specs=[
                _spec((tm, E), lambda i, j: (i, 0)),                       # x
                _spec((1, E), lambda i, j: (0, 0), single_buffer=True),    # gamma
                _spec((1, E), lambda i, j: (0, 0), single_buffer=True),    # beta
                _spec((E, tn), lambda i, j: (0, j),
                      single_buffer=weight_is_resident),                   # W
                _spec((1, tn), lambda i, j: (0, j),
                      single_buffer=weight_is_resident),                   # bias
            ],
            out_specs=pl.BlockSpec((tm, tn), lambda i, j: (i, j)),
        ),
        compiler_params=pltpu.CompilerParams(
            dimension_semantics=("parallel", "parallel"),
            vmem_limit_bytes=vmem_limit,
        ),
        cost_estimate=cost,
    )(x2, gamma, beta, w_ec, bias_c)

    # Drop class-dim lane padding (and the tiny-M guard rows); restore (B,N,C).
    return out2[:M, :n_classes].reshape(B, N, n_classes)


def reference_forward(x, ln_w, ln_b, lin_w, lin_b):
    """Pure-JAX reference matching PyTorch semantics."""
    xf = x.astype(jnp.float32)
    mean = jnp.mean(xf, axis=-1, keepdims=True)
    var = jnp.mean((xf - mean) ** 2, axis=-1, keepdims=True)
    y = (xf - mean) * jax.lax.rsqrt(var + LN_EPS) * ln_w + ln_b
    out = jnp.dot(y, lin_w.T.astype(jnp.float32),
                  precision=jax.lax.Precision.HIGHEST) + lin_b
    return out.astype(x.dtype)


if __name__ == "__main__":
    # Small ViT-like shapes: (b, n, e) -> (b, n, n_classes).
    # NOTE: the original forward's token-mean reduce is dead code (discarded).
    B, N, E, C = 2, 197, 256, 1000

    key = jax.random.PRNGKey(0)
    kx, kg, kb, kw, kc = jax.random.split(key, 5)

    x = jax.random.normal(kx, (B, N, E), dtype=jnp.float32)

    # LayerNorm params (perturbed from the PyTorch default init).
    ln_w = 1.0 + 0.02 * jax.random.normal(kg, (E,), jnp.float32)
    ln_b = 0.02 * jax.random.normal(kb, (E,), jnp.float32)

    # Linear params, torch layout (out, in).
    bound = 1.0 / (E ** 0.5)
    lin_w = jax.random.uniform(kw, (C, E), jnp.float32, -bound, bound)
    lin_b = jax.random.uniform(kc, (C,), jnp.float32, -bound, bound)

    # One-time parameter layout (hoisted out of the per-call forward).
    gamma, beta, w_ec, bias_c = prepare_params(ln_w, ln_b, lin_w, lin_b)

    out = classification_forward(x, gamma, beta, w_ec, bias_c, n_classes=C)
    out = jax.block_until_ready(out)

    ref = reference_forward(x, ln_w, ln_b, lin_w, lin_b)
    assert out.shape == (B, N, C)
    err = float(jnp.max(jnp.abs(out - ref)))
    assert jnp.allclose(out, ref, atol=1e-3, rtol=1e-3), f"max abs err {err}"

    print("KERNEL_OK")
</pallas_src>

<mosaic_0001>
module attributes {stable_mosaic.version = 11 : i64} {
  func.func @_cls_head_kernel(%arg0: i32, %arg1: i32, %arg2: memref<394x256xf32, #tpu.memory_space<vmem>>, %arg3: memref<1x256xf32, #tpu.memory_space<vmem>>, %arg4: memref<1x256xf32, #tpu.memory_space<vmem>>, %arg5: memref<256x1024xf32, #tpu.memory_space<vmem>>, %arg6: memref<1x1024xf32, #tpu.memory_space<vmem>>, %arg7: memref<394x1024xf32, #tpu.memory_space<vmem>>) attributes {dimension_semantics = [#tpu.dimension_semantics<parallel>, #tpu.dimension_semantics<parallel>], iteration_bounds = array<i64: 1, 1>, scalar_prefetch = 0 : i64, scratch_operands = 0 : i64, tpu.core_type = #tpu.core_type<tc>, window_params = [{transform_indices = @transform_0, window_bounds = array<i64: 394, 256>}, {pipeline_mode = #tpu.pipeline_mode<synchronous>, transform_indices = @transform_1, window_bounds = array<i64: 1, 256>}, {pipeline_mode = #tpu.pipeline_mode<synchronous>, transform_indices = @transform_2, window_bounds = array<i64: 1, 256>}, {pipeline_mode = #tpu.pipeline_mode<synchronous>, transform_indices = @transform_3, window_bounds = array<i64: 256, 1024>}, {pipeline_mode = #tpu.pipeline_mode<synchronous>, transform_indices = @transform_4, window_bounds = array<i64: 1, 1024>}, {transform_indices = @transform_5, window_bounds = array<i64: 394, 1024>}]} {
    %c0 = arith.constant 0 : index
    %c0_0 = arith.constant 0 : index
    %0 = vector.load %arg2[%c0, %c0_0] : memref<394x256xf32, #tpu.memory_space<vmem>>, vector<394x256xf32>
    %cst = arith.constant dense<0.000000e+00> : vector<394xf32>
    %1 = vector.multi_reduction <add>, %0, %cst [1] : vector<394x256xf32> to vector<394xf32>
    %2 = vector.shape_cast %1 : vector<394xf32> to vector<394x1xf32>
    %cst_1 = arith.constant 2.560000e+02 : f32
    %3 = vector.broadcast %cst_1 : f32 to vector<394x1xf32>
    %4 = arith.divf %2, %3 : vector<394x1xf32>
    %5 = vector.broadcast %4 : vector<394x1xf32> to vector<394x256xf32>
    %6 = arith.subf %0, %5 : vector<394x256xf32>
    %7 = arith.mulf %6, %6 : vector<394x256xf32>
    %cst_2 = arith.constant dense<0.000000e+00> : vector<394xf32>
    %8 = vector.multi_reduction <add>, %7, %cst_2 [1] : vector<394x256xf32> to vector<394xf32>
    %9 = vector.shape_cast %8 : vector<394xf32> to vector<394x1xf32>
    %cst_3 = arith.constant 2.560000e+02 : f32
    %10 = vector.broadcast %cst_3 : f32 to vector<394x1xf32>
    %11 = arith.divf %9, %10 : vector<394x1xf32>
    %cst_4 = arith.constant 9.99999974E-6 : f32
    %12 = vector.broadcast %cst_4 : f32 to vector<394x1xf32>
    %13 = arith.addf %11, %12 : vector<394x1xf32>
    %14 = math.rsqrt %13 : vector<394x1xf32>
    %15 = vector.broadcast %14 : vector<394x1xf32> to vector<394x256xf32>
    %16 = arith.mulf %6, %15 : vector<394x256xf32>
    %c0_5 = arith.constant 0 : index
    %c0_6 = arith.constant 0 : index
    %17 = vector.load %arg3[%c0_5, %c0_6] : memref<1x256xf32, #tpu.memory_space<vmem>>, vector<1x256xf32>
    %18 = vector.broadcast %17 : vector<1x256xf32> to vector<394x256xf32>
    %19 = arith.mulf %16, %18 : vector<394x256xf32>
    %c0_7 = arith.constant 0 : index
    %c0_8 = arith.constant 0 : index
    %20 = vector.load %arg4[%c0_7, %c0_8] : memref<1x256xf32, #tpu.memory_space<vmem>>, vector<1x256xf32>
    %21 = vector.broadcast %20 : vector<1x256xf32> to vector<394x256xf32>
    %22 = arith.addf %19, %21 : vector<394x256xf32>
    %c0_9 = arith.constant 0 : index
    %c0_10 = arith.constant 0 : index
    %23 = vector.load %arg5[%c0_9, %c0_10] : memref<256x1024xf32, #tpu.memory_space<vmem>>, vector<256x1024xf32>
    %cst_11 = arith.constant dense<0.000000e+00> : vector<394x1024xf32>
    %24 = tpu.matmul %22, %23, %cst_11 {dimension_numbers = #tpu.dot_dimension_numbers<[1], [0], [0], [1], [0, 0, 1, 1], [], []>} : vector<394x256xf32>, vector<256x1024xf32>, vector<394x1024xf32> -> vector<394x1024xf32>
    %c0_12 = arith.constant 0 : index
    %c0_13 = arith.constant 0 : index
    %25 = vector.load %arg6[%c0_12, %c0_13] : memref<1x1024xf32, #tpu.memory_space<vmem>>, vector<1x1024xf32>
    %26 = vector.broadcast %25 : vector<1x1024xf32> to vector<394x1024xf32>
    %27 = arith.addf %24, %26 : vector<394x1024xf32>
    %c0_14 = arith.constant 0 : index
    %c0_15 = arith.constant 0 : index
    %28 = vector.load %arg7[%c0_14, %c0_15] : memref<394x1024xf32, #tpu.memory_space<vmem>>, vector<394x1024xf32>
    tpu.vector_store %arg7[%c0_14, %c0_15], %27 {strides = array<i32>} : memref<394x1024xf32, #tpu.memory_space<vmem>>, vector<394x1024xf32>,
    return
  }
  func.func @transform_0(%arg0: i32, %arg1: i32) -> (i32, i32) {
    %c0_i32 = arith.constant 0 : i32
    %c0_i32_0 = arith.constant 0 : i32
    return %arg0, %c0_i32 : i32, i32
  }
  func.func @transform_1(%arg0: i32, %arg1: i32) -> (i32, i32) {
    %c0_i32 = arith.constant 0 : i32
    %c0_i32_0 = arith.constant 0 : i32
    %c0_i32_1 = arith.constant 0 : i32
    return %c0_i32, %c0_i32_0 : i32, i32
  }
  func.func @transform_2(%arg0: i32, %arg1: i32) -> (i32, i32) {
    %c0_i32 = arith.constant 0 : i32
    %c0_i32_0 = arith.constant 0 : i32
    %c0_i32_1 = arith.constant 0 : i32
    return %c0_i32, %c0_i32_0 : i32, i32
  }
  func.func @transform_3(%arg0: i32, %arg1: i32) -> (i32, i32) {
    %c0_i32 = arith.constant 0 : i32
    %c0_i32_0 = arith.constant 0 : i32
    return %c0_i32, %arg1 : i32, i32
  }
  func.func @transform_4(%arg0: i32, %arg1: i32) -> (i32, i32) {
    %c0_i32 = arith.constant 0 : i32
    %c0_i32_0 = arith.constant 0 : i32
    return %c0_i32, %arg1 : i32, i32
  }
  func.func @transform_5(%arg0: i32, %arg1: i32) -> (i32, i32) {
    %c0_i32 = arith.constant 0 : i32
    return %arg0, %arg1 : i32, i32
  }
}

</mosaic_0001>

<llo_original>
// kernel: classification_forward.1
$region0: #{classification_forward.1}
  #allocation0 [shape = 'u32[]', space=smem, size = 0x4, offset = 0x4, fixed_abs, tag = 'smem constant byte address 0x4 - core index']
  #allocation1 [shape = 'u32[144,128]{1,0:T(1,128)}', space=vmem, size = 0x12000, scoped, tag = 'internal scratch']
  %s0 = inlined_call_operand.vmem [shape: f32[394,256], index: 0, kind: input, shape index: {}]
  %s1 = inlined_call_operand.hbm [shape: f32[1,256], index: 1, kind: input, shape index: {}]
  %s2 = inlined_call_operand.hbm [shape: f32[1,256], index: 2, kind: input, shape index: {}]
  %s3 = inlined_call_operand.vmem [shape: f32[256,1024], index: 3, kind: input, shape index: {}]
  %s4 = inlined_call_operand.vmem [shape: f32[1,1024], index: 4, kind: input, shape index: {}]
  %s5 = inlined_call_operand.vmem [shape: f32[394,1024], index: 5, kind: output, shape index: {}]
  %s6 = sld [smem:[#allocation0]]
  $region38: #{classification_forward.1} parent=0
    _
  %s8 = ssub.s32 1, %s6
  %s9 = scalar_select 0, %s8, %s6
  $region1: #{classification_forward.1} parent=0
    #allocation2 [shape = 'u8[1024]{0}', space=vmem, size = 0x400, scoped, tag = 'input window, operand 1, single buffered']
    #allocation3 [shape = 's32[1]{0}', space=sflag, size = 0x4, scoped, tag = 'scoped memory for classification_forward.1']
    #allocation4 [shape = 'u8[1024]{0}', space=vmem, size = 0x400, scoped, tag = 'input window, operand 2, single buffered']
    #allocation5 [shape = 's32[1]{0}', space=sflag, size = 0x4, scoped, tag = 'scoped memory for classification_forward.1']
    %10 = vsyncpa [#allocation3], 0
    %11 = vsyncpa [#allocation5], 0
    // Predicated region
    $region2: #{classification_forward.1} parent=1 // pred_check
      _
    $region3: #{classification_forward.1} parent=1 // pred_check_branch
      %13 = sbr.rel (0) target = $region5
    $region4: #{classification_forward.1} parent=1 // pred_region
      _
    $region5: #{classification_forward.1} parent=1 // pred_fallthru
      _
    // Predicated region
    $region6: #{classification_forward.1} parent=1 // pred_check
      _
    $region7: #{classification_forward.1} parent=1 // pred_check_branch
      %15 = sbr.rel (0) target = $region9
    $region8: #{classification_forward.1} parent=1 // pred_region
      %s17 = ssub.s32 32, 32
      %18 = vsyncadd [#allocation3], %s17
      %s20 = sshll.u32 [#allocation2], 4
      %s21 = int_to_ptr.vmem [resolvable:$true] %s20
      %23 = dma.hbm_to_vmem [thread:$0]  %s1, 32, %s21, [#allocation3]
    $region9: #{classification_forward.1} parent=1 // pred_fallthru
      _
    // Predicated region
    $region10: #{classification_forward.1} parent=1 // pred_check
      _
    $region11: #{classification_forward.1} parent=1 // pred_check_branch
      %25 = sbr.rel (0) target = $region13
    $region12: #{classification_forward.1} parent=1 // pred_region
      %s27 = ssub.s32 32, 32
      %28 = vsyncadd [#allocation5], %s27
      %s30 = sshll.u32 [#allocation4], 4
      %s31 = int_to_ptr.vmem [resolvable:$true] %s30
      %33 = dma.hbm_to_vmem [thread:$0]  %s2, 32, %s31, [#allocation5]
    $region13: #{classification_forward.1} parent=1 // pred_fallthru
      _
    // Predicated region
    $region14: #{classification_forward.1} parent=1 // pred_check
      _
    $region15: #{classification_forward.1} parent=1 // pred_check_branch
      %35 = sbr.rel (0) target = $region17
    $region16: #{classification_forward.1} parent=1 // pred_region
      _
    $region17: #{classification_forward.1} parent=1 // pred_fallthru
      _
    // Predicated region
    $region18: #{classification_forward.1} parent=1 // pred_check
      _
    $region19: #{classification_forward.1} parent=1 // pred_check_branch
      %37 = sbr.rel (0) target = $region21
    $region20: #{classification_forward.1} parent=1 // pred_region
      _
    $region21: #{classification_forward.1} parent=1 // pred_fallthru
      _
    // Predicated region
    $region22: #{classification_forward.1} parent=1 // pred_check
      _
    $region23: #{classification_forward.1} parent=1 // pred_check_branch
      %39 = sbr.rel (0) target = $region25
    $region24: #{classification_forward.1} parent=1 // pred_region
      %40 = dma.done [#allocation3], 32
    $region25: #{classification_forward.1} parent=1 // pred_fallthru
      _
    // Predicated region
    $region26: #{classification_forward.1} parent=1 // pred_check
      _
    $region27: #{classification_forward.1} parent=1 // pred_check_branch
      %42 = sbr.rel (0) target = $region29
    $region28: #{classification_forward.1} parent=1 // pred_region
      %43 = dma.done [#allocation5], 32
    $region29: #{classification_forward.1} parent=1 // pred_fallthru
      _
    %v44 = vld [vmem:[%s0] sm:$0xff]
    %v45 = vld [vmem:[%s0 + $0x8] sm:$0xff]
    %v46 = vld [vmem:[%s0 + $0x10] sm:$0xff]
    %v47 = vld [vmem:[%s0 + $0x18] sm:$0xff]
    %v48 = vld [vmem:[%s0 + $0x20] sm:$0xff]
    %v49 = vld [vmem:[%s0 + $0x28] sm:$0xff]
    %v50 = vld [vmem:[%s0 + $0x30] sm:$0xff]
    %v51 = vld [vmem:[%s0 + $0x38] sm:$0xff]
    %v52 = vld [vmem:[%s0 + $0x40] sm:$0xff]
    %v53 = vld [vmem:[%s0 + $0x48] sm:$0xff]
    %v54 = vld [vmem:[%s0 + $0x50] sm:$0xff]
    %v55 = vld [vmem:[%s0 + $0x58] sm:$0xff]
    %v56 = vld [vmem:[%s0 + $0x60] sm:$0xff]
    %v57 = vld [vmem:[%s0 + $0x68] sm:$0xff]
    %v58 = vld [vmem:[%s0 + $0x70] sm:$0xff]
    %v59 = vld [vmem:[%s0 + $0x78] sm:$0xff]
    %v60 = vld [vmem:[%s0 + $0x80] sm:$0xff]
    %v61 = vld [vmem:[%s0 + $0x88] sm:$0xff]
    %v62 = vld [vmem:[%s0 + $0x90] sm:$0xff]
    %v63 = vld [vmem:[%s0 + $0x98] sm:$0xff]
    %v64 = vld [vmem:[%s0 + $0xa0] sm:$0xff]
    %v65 = vld [vmem:[%s0 + $0xa8] sm:$0xff]
    %v66 = vld [vmem:[%s0 + $0xb0] sm:$0xff]
    %v67 = vld [vmem:[%s0 + $0xb8] sm:$0xff]
    %v68 = vld [vmem:[%s0 + $0xc0] sm:$0xff]
    %v69 = vld [vmem:[%s0 + $0xc8] sm:$0xff]
    %v70 = vld [vmem:[%s0 + $0xd0] sm:$0xff]
    %v71 = vld [vmem:[%s0 + $0xd8] sm:$0xff]
    %v72 = vld [vmem:[%s0 + $0xe0] sm:$0xff]
    %v73 = vld [vmem:[%s0 + $0xe8] sm:$0xff]
    %v74 = vld [vmem:[%s0 + $0xf0] sm:$0xff]
    %v75 = vld [vmem:[%s0 + $0xf8] sm:$0xff]
    %v76 = vld [vmem:[%s0 + $0x100] sm:$0xff]
    %v77 = vld [vmem:[%s0 + $0x108] sm:$0xff]
    %v78 = vld [vmem:[%s0 + $0x110] sm:$0xff]
    %v79 = vld [vmem:[%s0 + $0x118] sm:$0xff]
    %v80 = vld [vmem:[%s0 + $0x120] sm:$0xff]
    %v81 = vld [vmem:[%s0 + $0x128] sm:$0xff]
    %v82 = vld [vmem:[%s0 + $0x130] sm:$0xff]
    %v83 = vld [vmem:[%s0 + $0x138] sm:$0xff]
    %v84 = vld [vmem:[%s0 + $0x140] sm:$0xff]
    %v85 = vld [vmem:[%s0 + $0x148] sm:$0xff]
    %v86 = vld [vmem:[%s0 + $0x150] sm:$0xff]
    %v87 = vld [vmem:[%s0 + $0x158] sm:$0xff]
    %v88 = vld [vmem:[%s0 + $0x160] sm:$0xff]
    %v89 = vld [vmem:[%s0 + $0x168] sm:$0xff]
    %v90 = vld [vmem:[%s0 + $0x170] sm:$0xff]
    %v91 = vld [vmem:[%s0 + $0x178] sm:$0xff]
    %v92 = vld [vmem:[%s0 + $0x180] sm:$0xff]
    %v93 = vld [vmem:[%s0 + $0x188] sm:$0xff]
    %v94 = vld [vmem:[%s0 + $0x190] sm:$0xff]
    %v95 = vld [vmem:[%s0 + $0x198] sm:$0xff]
    %v96 = vld [vmem:[%s0 + $0x1a0] sm:$0xff]
    %v97 = vld [vmem:[%s0 + $0x1a8] sm:$0xff]
    %v98 = vld [vmem:[%s0 + $0x1b0] sm:$0xff]
    %v99 = vld [vmem:[%s0 + $0x1b8] sm:$0xff]
    %v100 = vld [vmem:[%s0 + $0x1c0] sm:$0xff]
    %v101 = vld [vmem:[%s0 + $0x1c8] sm:$0xff]
    %v102 = vld [vmem:[%s0 + $0x1d0] sm:$0xff]
    %v103 = vld [vmem:[%s0 + $0x1d8] sm:$0xff]
    %v104 = vld [vmem:[%s0 + $0x1e0] sm:$0xff]
    %v105 = vld [vmem:[%s0 + $0x1e8] sm:$0xff]
    %v106 = vld [vmem:[%s0 + $0x1f0] sm:$0xff]
    %v107 = vld [vmem:[%s0 + $0x1f8] sm:$0xff]
    %v108 = vld [vmem:[%s0 + $0x200] sm:$0xff]
    %v109 = vld [vmem:[%s0 + $0x208] sm:$0xff]
    %v110 = vld [vmem:[%s0 + $0x210] sm:$0xff]
    %v111 = vld [vmem:[%s0 + $0x218] sm:$0xff]
    %v112 = vld [vmem:[%s0 + $0x220] sm:$0xff]
    %v113 = vld [vmem:[%s0 + $0x228] sm:$0xff]
    %v114 = vld [vmem:[%s0 + $0x230] sm:$0xff]
    %v115 = vld [vmem:[%s0 + $0x238] sm:$0xff]
    %v116 = vld [vmem:[%s0 + $0x240] sm:$0xff]
    %v117 = vld [vmem:[%s0 + $0x248] sm:$0xff]
    %v118 = vld [vmem:[%s0 + $0x250] sm:$0xff]
    %v119 = vld [vmem:[%s0 + $0x258] sm:$0xff]
    %v120 = vld [vmem:[%s0 + $0x260] sm:$0xff]
    %v121 = vld [vmem:[%s0 + $0x268] sm:$0xff]
    %v122 = vld [vmem:[%s0 + $0x270] sm:$0xff]
    %v123 = vld [vmem:[%s0 + $0x278] sm:$0xff]
    %v124 = vld [vmem:[%s0 + $0x280] sm:$0xff]
    %v125 = vld [vmem:[%s0 + $0x288] sm:$0xff]
    %v126 = vld [vmem:[%s0 + $0x290] sm:$0xff]
    %v127 = vld [vmem:[%s0 + $0x298] sm:$0xff]
    %v128 = vld [vmem:[%s0 + $0x2a0] sm:$0xff]
    %v129 = vld [vmem:[%s0 + $0x2a8] sm:$0xff]
    %v130 = vld [vmem:[%s0 + $0x2b0] sm:$0xff]
    %v131 = vld [vmem:[%s0 + $0x2b8] sm:$0xff]
    %v132 = vld [vmem:[%s0 + $0x2c0] sm:$0xff]
    %v133 = vld [vmem:[%s0 + $0x2c8] sm:$0xff]
    %v134 = vld [vmem:[%s0 + $0x2d0] sm:$0xff]
    %v135 = vld [vmem:[%s0 + $0x2d8] sm:$0xff]
    %v136 = vld [vmem:[%s0 + $0x2e0] sm:$0xff]
    %v137 = vld [vmem:[%s0 + $0x2e8] sm:$0xff]
    %v138 = vld [vmem:[%s0 + $0x2f0] sm:$0xff]
    %v139 = vld [vmem:[%s0 + $0x2f8] sm:$0xff]
    %v140 = vld [vmem:[%s0 + $0x300] sm:$0xff]
    %v141 = vld [vmem:[%s0 + $0x308] sm:$0xff]
    %v142 = vld [vmem:[%s0 + $0x310] sm:$0x3]
    %v143 = vld [vmem:[%s0 + $0x318] sm:$0x3]
    %v144 = vadd.f32 %v44, %v45
    %145 = vadd.xlane.f32.xlu0 %v144
    %v146 = vpop.xlane.xlu0 %145
    %v147 = vadd.f32 %v46, %v47
    %148 = vadd.xlane.f32.xlu0 %v147
    %v149 = vpop.xlane.xlu0 %148
    %v150 = vadd.f32 %v48, %v49
    %151 = vadd.xlane.f32.xlu0 %v150
    %v152 = vpop.xlane.xlu0 %151
    %v153 = vadd.f32 %v50, %v51
    %154 = vadd.xlane.f32.xlu0 %v153
    %v155 = vpop.xlane.xlu0 %154
    %v156 = vadd.f32 %v52, %v53
    %157 = vadd.xlane.f32.xlu0 %v156
    %v158 = vpop.xlane.xlu0 %157
    %v159 = vadd.f32 %v54, %v55
    %160 = vadd.xlane.f32.xlu0 %v159
    %v161 = vpop.xlane.xlu0 %160
    %v162 = vadd.f32 %v56, %v57
    %163 = vadd.xlane.f32.xlu0 %v162
    %v164 = vpop.xlane.xlu0 %163
    %v165 = vadd.f32 %v58, %v59
    %166 = vadd.xlane.f32.xlu0 %v165
    %v167 = vpop.xlane.xlu0 %166
    %v168 = vadd.f32 %v60, %v61
    %169 = vadd.xlane.f32.xlu0 %v168
    %v170 = vpop.xlane.xlu0 %169
    %v171 = vadd.f32 %v62, %v63
    %172 = vadd.xlane.f32.xlu0 %v171
    %v173 = vpop.xlane.xlu0 %172
    %v174 = vadd.f32 %v64, %v65
    %175 = vadd.xlane.f32.xlu0 %v174
    %v176 = vpop.xlane.xlu0 %175
    %v177 = vadd.f32 %v66, %v67
    %178 = vadd.xlane.f32.xlu0 %v177
    %v179 = vpop.xlane.xlu0 %178
    %v180 = vadd.f32 %v68, %v69
    %181 = vadd.xlane.f32.xlu0 %v180
    %v182 = vpop.xlane.xlu0 %181
    %v183 = vadd.f32 %v70, %v71
    %184 = vadd.xlane.f32.xlu0 %v183
    %v185 = vpop.xlane.xlu0 %184
    %v186 = vadd.f32 %v72, %v73
    %187 = vadd.xlane.f32.xlu0 %v186
    %v188 = vpop.xlane.xlu0 %187
    %v189 = vadd.f32 %v74, %v75
    %190 = vadd.xlane.f32.xlu0 %v189
    %v191 = vpop.xlane.xlu0 %190
    %v192 = vadd.f32 %v76, %v77
    %193 = vadd.xlane.f32.xlu0 %v192
    %v194 = vpop.xlane.xlu0 %193
    %v195 = vadd.f32 %v78, %v79
    %196 = vadd.xlane.f32.xlu0 %v195
    %v197 = vpop.xlane.xlu0 %196
    %v198 = vadd.f32 %v80, %v81
    %199 = vadd.xlane.f32.xlu0 %v198
    %v200 = vpop.xlane.xlu0 %199
    %v201 = vadd.f32 %v82, %v83
    %202 = vadd.xlane.f32.xlu0 %v201
    %v203 = vpop.xlane.xlu0 %202
    %v204 = vadd.f32 %v84, %v85
    %205 = vadd.xlane.f32.xlu0 %v204
    %v206 = vpop.xlane.xlu0 %205
    %v207 = vadd.f32 %v86, %v87
    %208 = vadd.xlane.f32.xlu0 %v207
    %v209 = vpop.xlane.xlu0 %208
    %v210 = vadd.f32 %v88, %v89
    %211 = vadd.xlane.f32.xlu0 %v210
    %v212 = vpop.xlane.xlu0 %211
    %v213 = vadd.f32 %v90, %v91
    %214 = vadd.xlane.f32.xlu0 %v213
    %v215 = vpop.xlane.xlu0 %214
    %v216 = vadd.f32 %v92, %v93
    %217 = vadd.xlane.f32.xlu0 %v216
    %v218 = vpop.xlane.xlu0 %217
    %v219 = vadd.f32 %v94, %v95
    %220 = vadd.xlane.f32.xlu0 %v219
    %v221 = vpop.xlane.xlu0 %220
    %v222 = vadd.f32 %v96, %v97
    %223 = vadd.xlane.f32.xlu0 %v222
    %v224 = vpop.xlane.xlu0 %223
    %v225 = vadd.f32 %v98, %v99
    %226 = vadd.xlane.f32.xlu0 %v225
    %v227 = vpop.xlane.xlu0 %226
    %v228 = vadd.f32 %v100, %v101
    %229 = vadd.xlane.f32.xlu0 %v228
    %v230 = vpop.xlane.xlu0 %229
    %v231 = vadd.f32 %v102, %v103
    %232 = vadd.xlane.f32.xlu0 %v231
    %v233 = vpop.xlane.xlu0 %232
    %v234 = vadd.f32 %v104, %v105
    %235 = vadd.xlane.f32.xlu0 %v234
    %v236 = vpop.xlane.xlu0 %235
    %v237 = vadd.f32 %v106, %v107
    %238 = vadd.xlane.f32.xlu0 %v237
    %v239 = vpop.xlane.xlu0 %238
    %v240 = vadd.f32 %v108, %v109
    %241 = vadd.xlane.f32.xlu0 %v240
    %v242 = vpop.xlane.xlu0 %241
    %v243 = vadd.f32 %v110, %v111
    %244 = vadd.xlane.f32.xlu0 %v243
    %v245 = vpop.xlane.xlu0 %244
    %v246 = vadd.f32 %v112, %v113
    %247 = vadd.xlane.f32.xlu0 %v246
    %v248 = vpop.xlane.xlu0 %247
    %v249 = vadd.f32 %v114, %v115
    %250 = vadd.xlane.f32.xlu0 %v249
    %v251 = vpop.xlane.xlu0 %250
    %v252 = vadd.f32 %v116, %v117
    %253 = vadd.xlane.f32.xlu0 %v252
    %v254 = vpop.xlane.xlu0 %253
    %v255 = vadd.f32 %v118, %v119
    %256 = vadd.xlane.f32.xlu0 %v255
    %v257 = vpop.xlane.xlu0 %256
    %v258 = vadd.f32 %v120, %v121
    %259 = vadd.xlane.f32.xlu0 %v258
    %v260 = vpop.xlane.xlu0 %259
    %v261 = vadd.f32 %v122, %v123
    %262 = vadd.xlane.f32.xlu0 %v261
    %v263 = vpop.xlane.xlu0 %262
    %v264 = vadd.f32 %v124, %v125
    %265 = vadd.xlane.f32.xlu0 %v264
    %v266 = vpop.xlane.xlu0 %265
    %v267 = vadd.f32 %v126, %v127
    %268 = vadd.xlane.f32.xlu0 %v267
    %v269 = vpop.xlane.xlu0 %268
    %v270 = vadd.f32 %v128, %v129
    %271 = vadd.xlane.f32.xlu0 %v270
    %v272 = vpop.xlane.xlu0 %271
    %v273 = vadd.f32 %v130, %v131
    %274 = vadd.xlane.f32.xlu0 %v273
    %v275 = vpop.xlane.xlu0 %274
    %v276 = vadd.f32 %v132, %v133
    %277 = vadd.xlane.f32.xlu0 %v276
    %v278 = vpop.xlane.xlu0 %277
    %v279 = vadd.f32 %v134, %v135
    %280 = vadd.xlane.f32.xlu0 %v279
    %v281 = vpop.xlane.xlu0 %280
    %v282 = vadd.f32 %v136, %v137
    %283 = vadd.xlane.f32.xlu0 %v282
    %v284 = vpop.xlane.xlu0 %283
    %v285 = vadd.f32 %v138, %v139
    %286 = vadd.xlane.f32.xlu0 %v285
    %v287 = vpop.xlane.xlu0 %286
    %v288 = vadd.f32 %v140, %v141
    %289 = vadd.xlane.f32.xlu0 %v288
    %v290 = vpop.xlane.xlu0 %289
    %vm291 = vcmask 1041408
    %v292 = vsel %vm291, %v142, 0.0
    %v293 = vsel %vm291, %v143, 0.0
    %v294 = vadd.f32 %v292, %v293
    %295 = vadd.xlane.f32.xlu0 %v294
    %v296 = vpop.xlane.xlu0 %295
    %v297 = vrcp.pop 256.0
    %v298 = vmul.f32 %v146, %v297
    %v299 = vmul.f32 %v149, %v297
    %v300 = vmul.f32 %v152, %v297
    %v301 = vmul.f32 %v155, %v297
    %v302 = vmul.f32 %v158, %v297
    %v303 = vmul.f32 %v161, %v297
    %v304 = vmul.f32 %v164, %v297
    %v305 = vmul.f32 %v167, %v297
    %v306 = vmul.f32 %v170, %v297
    %v307 = vmul.f32 %v173, %v297
    %v308 = vmul.f32 %v176, %v297
    %v309 = vmul.f32 %v179, %v297
    %v310 = vmul.f32 %v182, %v297
    %v311 = vmul.f32 %v185, %v297
    %v312 = vmul.f32 %v188, %v297
    %v313 = vmul.f32 %v191, %v297
    %v314 = vmul.f32 %v194, %v297
    %v315 = vmul.f32 %v197, %v297
    %v316 = vmul.f32 %v200, %v297
    %v317 = vmul.f32 %v203, %v297
    %v318 = vmul.f32 %v206, %v297
    %v319 = vmul.f32 %v209, %v297
    %v320 = vmul.f32 %v212, %v297
    %v321 = vmul.f32 %v215, %v297
    %v322 = vmul.f32 %v218, %v297
    %v323 = vmul.f32 %v221, %v297
    %v324 = vmul.f32 %v224, %v297
    %v325 = vmul.f32 %v227, %v297
    %v326 = vmul.f32 %v230, %v297
    %v327 = vmul.f32 %v233, %v297
    %v328 = vmul.f32 %v236, %v297
    %v329 = vmul.f32 %v239, %v297
    %v330 = vmul.f32 %v242, %v297
    %v331 = vmul.f32 %v245, %v297
    %v332 = vmul.f32 %v248, %v297
    %v333 = vmul.f32 %v251, %v297
    %v334 = vmul.f32 %v254, %v297
    %v335 = vmul.f32 %v257, %v297
    %v336 = vmul.f32 %v260, %v297
    %v337 = vmul.f32 %v263, %v297
    %v338 = vmul.f32 %v266, %v297
    %v339 = vmul.f32 %v269, %v297
    %v340 = vmul.f32 %v272, %v297
    %v341 = vmul.f32 %v275, %v297
    %v342 = vmul.f32 %v278, %v297
    %v343 = vmul.f32 %v281, %v297
    %v344 = vmul.f32 %v284, %v297
    %v345 = vmul.f32 %v287, %v297
    %v346 = vmul.f32 %v290, %v297
    %v347 = vmul.f32 %v296, %v297
    %v348 = vsub.f32 %v44, %v298
    %v349 = vsub.f32 %v45, %v298
    %v350 = vsub.f32 %v46, %v299
    %v351 = vsub.f32 %v47, %v299
    %v352 = vsub.f32 %v48, %v300
    %v353 = vsub.f32 %v49, %v300
    %v354 = vsub.f32 %v50, %v301
    %v355 = vsub.f32 %v51, %v301
    %v356 = vsub.f32 %v52, %v302
    %v357 = vsub.f32 %v53, %v302
    %v358 = vsub.f32 %v54, %v303
    %v359 = vsub.f32 %v55, %v303
    %v360 = vsub.f32 %v56, %v304
    %v361 = vsub.f32 %v57, %v304
    %v362 = vsub.f32 %v58, %v305
    %v363 = vsub.f32 %v59, %v305
    %v364 = vsub.f32 %v60, %v306
    %v365 = vsub.f32 %v61, %v306
    %v366 = vsub.f32 %v62, %v307
    %v367 = vsub.f32 %v63, %v307
    %v368 = vsub.f32 %v64, %v308
    %v369 = vsub.f32 %v65, %v308
    %v370 = vsub.f32 %v66, %v309
    %v371 = vsub.f32 %v67, %v309
    %v372 = vsub.f32 %v68, %v310
    %v373 = vsub.f32 %v69, %v310
    %v374 = vsub.f32 %v70, %v311
    %v375 = vsub.f32 %v71, %v311
    %v376 = vsub.f32 %v72, %v312
    %v377 = vsub.f32 %v73, %v312
    %v378 = vsub.f32 %v74, %v313
    %v379 = vsub.f32 %v75, %v313
    %v380 = vsub.f32 %v76, %v314
    %v381 = vsub.f32 %v77, %v314
    %v382 = vsub.f32 %v78, %v315
    %v383 = vsub.f32 %v79, %v315
    %v384 = vsub.f32 %v80, %v316
    %v385 = vsub.f32 %v81, %v316
    %v386 = vsub.f32 %v82, %v317
    %v387 = vsub.f32 %v83, %v317
    %v388 = vsub.f32 %v84, %v318
    %v389 = vsub.f32 %v85, %v318
    %v390 = vsub.f32 %v86, %v319
    %v391 = vsub.f32 %v87, %v319
    %v392 = vsub.f32 %v88, %v320
    %v393 = vsub.f32 %v89, %v320
    %v394 = vsub.f32 %v90, %v321
    %v395 = vsub.f32 %v91, %v321
    %v396 = vsub.f32 %v92, %v322
    %v397 = vsub.f32 %v93, %v322
    %v398 = vsub.f32 %v94, %v323
    %v399 = vsub.f32 %v95, %v323
    %v400 = vsub.f32 %v96, %v324
    %v401 = vsub.f32 %v97, %v324
    %v402 = vsub.f32 %v98, %v325
    %v403 = vsub.f32 %v99, %v325
    %v404 = vsub.f32 %v100, %v326
    %v405 = vsub.f32 %v101, %v326
    %v406 = vsub.f32 %v102, %v327
    %v407 = vsub.f32 %v103, %v327
    %v408 = vsub.f32 %v104, %v328
    %v409 = vsub.f32 %v105, %v328
    %v410 = vsub.f32 %v106, %v329
    %v411 = vsub.f32 %v107, %v329
    %v412 = vsub.f32 %v108, %v330
    %v413 = vsub.f32 %v109, %v330
    %v414 = vsub.f32 %v110, %v331
    %v415 = vsub.f32 %v111, %v331
    %v416 = vsub.f32 %v112, %v332
    %v417 = vsub.f32 %v113, %v332
    %v418 = vsub.f32 %v114, %v333
    %v419 = vsub.f32 %v115, %v333
    %v420 = vsub.f32 %v116, %v334
    %v421 = vsub.f32 %v117, %v334
    %v422 = vsub.f32 %v118, %v335
    %v423 = vsub.f32 %v119, %v335
    %v424 = vsub.f32 %v120, %v336
    %v425 = vsub.f32 %v121, %v336
    %v426 = vsub.f32 %v122, %v337
    %v427 = vsub.f32 %v123, %v337
    %v428 = vsub.f32 %v124, %v338
    %v429 = vsub.f32 %v125, %v338
    %v430 = vsub.f32 %v126, %v339
    %v431 = vsub.f32 %v127, %v339
    %v432 = vsub.f32 %v128, %v340
    %v433 = vsub.f32 %v129, %v340
    %v434 = vsub.f32 %v130, %v341
    %v435 = vsub.f32 %v131, %v341
    %v436 = vsub.f32 %v132, %v342
    %v437 = vsub.f32 %v133, %v342
    %v438 = vsub.f32 %v134, %v343
    %v439 = vsub.f32 %v135, %v343
    %v440 = vsub.f32 %v136, %v344
    %v441 = vsub.f32 %v137, %v344
    %v442 = vsub.f32 %v138, %v345
    %v443 = vsub.f32 %v139, %v345
    %v444 = vsub.f32 %v140, %v346
    %v445 = vsub.f32 %v141, %v346
    %v446 = vsub.f32 %v142, %v347
    %v447 = vsub.f32 %v143, %v347
    %v448 = vmul.f32 %v348, %v348
    %v449 = vmul.f32 %v349, %v349
    %v450 = vmul.f32 %v350, %v350
    %v451 = vmul.f32 %v351, %v351
    %v452 = vmul.f32 %v352, %v352
    %v453 = vmul.f32 %v353, %v353
    %v454 = vmul.f32 %v354, %v354
    %v455 = vmul.f32 %v355, %v355
    %v456 = vmul.f32 %v356, %v356
    %v457 = vmul.f32 %v357, %v357
    %v458 = vmul.f32 %v358, %v358
    %v459 = vmul.f32 %v359, %v359
    %v460 = vmul.f32 %v360, %v360
    %v461 = vmul.f32 %v361, %v361
    %v462 = vmul.f32 %v362, %v362
    %v463 = vmul.f32 %v363, %v363
    %v464 = vmul.f32 %v364, %v364
    %v465 = vmul.f32 %v365, %v365
    %v466 = vmul.f32 %v366, %v366
    %v467 = vmul.f32 %v367, %v367
    %v468 = vmul.f32 %v368, %v368
    %v469 = vmul.f32 %v369, %v369
    %v470 = vmul.f32 %v370, %v370
    %v471 = vmul.f32 %v371, %v371
    %v472 = vmul.f32 %v372, %v372
    %v473 = vmul.f32 %v373, %v373
    %v474 = vmul.f32 %v374, %v374
    %v475 = vmul.f32 %v375, %v375
    %v476 = vmul.f32 %v376, %v376
    %v477 = vmul.f32 %v377, %v377
    %v478 = vmul.f32 %v378, %v378
    %v479 = vmul.f32 %v379, %v379
    %v480 = vmul.f32 %v380, %v380
    %v481 = vmul.f32 %v381, %v381
    %v482 = vmul.f32 %v382, %v382
    %v483 = vmul.f32 %v383, %v383
    %v484 = vmul.f32 %v384, %v384
    %v485 = vmul.f32 %v385, %v385
    %v486 = vmul.f32 %v386, %v386
    %v487 = vmul.f32 %v387, %v387
    %v488 = vmul.f32 %v388, %v388
    %v489 = vmul.f32 %v389, %v389
    %v490 = vmul.f32 %v390, %v390
    %v491 = vmul.f32 %v391, %v391
    %v492 = vmul.f32 %v392, %v392
    %v493 = vmul.f32 %v393, %v393
    %v494 = vmul.f32 %v394, %v394
    %v495 = vmul.f32 %v395, %v395
    %v496 = vmul.f32 %v396, %v396
    %v497 = vmul.f32 %v397, %v397
    %v498 = vmul.f32 %v398, %v398
    %v499 = vmul.f32 %v399, %v399
    %v500 = vmul.f32 %v400, %v400
    %v501 = vmul.f32 %v401, %v401
    %v502 = vmul.f32 %v402, %v402
    %v503 = vmul.f32 %v403, %v403
    %v504 = vmul.f32 %v404, %v404
    %v505 = vmul.f32 %v405, %v405
    %v506 = vmul.f32 %v406, %v406
    %v507 = vmul.f32 %v407, %v407
    %v508 = vmul.f32 %v408, %v408
    %v509 = vmul.f32 %v409, %v409
    %v510 = vmul.f32 %v410, %v410
    %v511 = vmul.f32 %v411, %v411
    %v512 = vmul.f32 %v412, %v412
    %v513 = vmul.f32 %v413, %v413
    %v514 = vmul.f32 %v414, %v414
    %v515 = vmul.f32 %v415, %v415
    %v516 = vmul.f32 %v416, %v416
    %v517 = vmul.f32 %v417, %v417
    %v518 = vmul.f32 %v418, %v418
    %v519 = vmul.f32 %v419, %v419
    %v520 = vmul.f32 %v420, %v420
    %v521 = vmul.f32 %v421, %v421
    %v522 = vmul.f32 %v422, %v422
    %v523 = vmul.f32 %v423, %v423
    %v524 = vmul.f32 %v424, %v424
    %v525 = vmul.f32 %v425, %v425
    %v526 = vmul.f32 %v426, %v426
    %v527 = vmul.f32 %v427, %v427
    %v528 = vmul.f32 %v428, %v428
    %v529 = vmul.f32 %v429, %v429
    %v530 = vmul.f32 %v430, %v430
    %v531 = vmul.f32 %v431, %v431
    %v532 = vmul.f32 %v432, %v432
    %v533 = vmul.f32 %v433, %v433
    %v534 = vmul.f32 %v434, %v434
    %v535 = vmul.f32 %v435, %v435
    %v536 = vmul.f32 %v436, %v436
    %v537 = vmul.f32 %v437, %v437
    %v538 = vmul.f32 %v438, %v438
    %v539 = vmul.f32 %v439, %v439
    %v540 = vmul.f32 %v440, %v440
    %v541 = vmul.f32 %v441, %v441
    %v542 = vmul.f32 %v442, %v442
    %v543 = vmul.f32 %v443, %v443
    %v544 = vmul.f32 %v444, %v444
    %v545 = vmul.f32 %v445, %v445
    %v546 = vmul.f32 %v446, %v446
    %v547 = vmul.f32 %v447, %v447
    %v548 = vadd.f32 %v448, %v449
    %549 = vadd.xlane.f32.xlu0 %v548
    %v550 = vpop.xlane.xlu0 %549
    %v551 = vadd.f32 %v450, %v451
    %552 = vadd.xlane.f32.xlu0 %v551
    %v553 = vpop.xlane.xlu0 %552
    %v554 = vadd.f32 %v452, %v453
    %555 = vadd.xlane.f32.xlu0 %v554
    %v556 = vpop.xlane.xlu0 %555
    %v557 = vadd.f32 %v454, %v455
    %558 = vadd.xlane.f32.xlu0 %v557
    %v559 = vpop.xlane.xlu0 %558
    %v560 = vadd.f32 %v456, %v457
    %561 = vadd.xlane.f32.xlu0 %v560
    %v562 = vpop.xlane.xlu0 %561
    %v563 = vadd.f32 %v458, %v459
    %564 = vadd.xlane.f32.xlu0 %v563
    %v565 = vpop.xlane.xlu0 %564
    %v566 = vadd.f32 %v460, %v461
    %567 = vadd.xlane.f32.xlu0 %v566
    %v568 = vpop.xlane.xlu0 %567
    %v569 = vadd.f32 %v462, %v463
    %570 = vadd.xlane.f32.xlu0 %v569
    %v571 = vpop.xlane.xlu0 %570
    %v572 = vadd.f32 %v464, %v465
    %573 = vadd.xlane.f32.xlu0 %v572
    %v574 = vpop.xlane.xlu0 %573
    %v575 = vadd.f32 %v466, %v467
    %576 = vadd.xlane.f32.xlu0 %v575
    %v577 = vpop.xlane.xlu0 %576
    %v578 = vadd.f32 %v468, %v469
    %579 = vadd.xlane.f32.xlu0 %v578
    %v580 = vpop.xlane.xlu0 %579
    %v581 = vadd.f32 %v470, %v471
    %582 = vadd.xlane.f32.xlu0 %v581
    %v583 = vpop.xlane.xlu0 %582
    %v584 = vadd.f32 %v472, %v473
    %585 = vadd.xlane.f32.xlu0 %v584
    %v586 = vpop.xlane.xlu0 %585
    %v587 = vadd.f32 %v474, %v475
    %588 = vadd.xlane.f32.xlu0 %v587
    %v589 = vpop.xlane.xlu0 %588
    %v590 = vadd.f32 %v476, %v477
    %591 = vadd.xlane.f32.xlu0 %v590
    %v592 = vpop.xlane.xlu0 %591
    %v593 = vadd.f32 %v478, %v479
    %594 = vadd.xlane.f32.xlu0 %v593
    %v595 = vpop.xlane.xlu0 %594
    %v596 = vadd.f32 %v480, %v481
    %597 = vadd.xlane.f32.xlu0 %v596
    %v598 = vpop.xlane.xlu0 %597
    %v599 = vadd.f32 %v482, %v483
    %600 = vadd.xlane.f32.xlu0 %v599
    %v601 = vpop.xlane.xlu0 %600
    %v602 = vadd.f32 %v484, %v485
    %603 = vadd.xlane.f32.xlu0 %v602
    %v604 = vpop.xlane.xlu0 %603
    %v605 = vadd.f32 %v486, %v487
    %606 = vadd.xlane.f32.xlu0 %v605
    %v607 = vpop.xlane.xlu0 %606
    %v608 = vadd.f32 %v488, %v489
    %609 = vadd.xlane.f32.xlu0 %v608
    %v610 = vpop.xlane.xlu0 %609
    %v611 = vadd.f32 %v490, %v491
    %612 = vadd.xlane.f32.xlu0 %v611
    %v613 = vpop.xlane.xlu0 %612
    %v614 = vadd.f32 %v492, %v493
    %615 = vadd.xlane.f32.xlu0 %v614
    %v616 = vpop.xlane.xlu0 %615
    %v617 = vadd.f32 %v494, %v495
    %618 = vadd.xlane.f32.xlu0 %v617
    %v619 = vpop.xlane.xlu0 %618
    %v620 = vadd.f32 %v496, %v497
    %621 = vadd.xlane.f32.xlu0 %v620
    %v622 = vpop.xlane.xlu0 %621
    %v623 = vadd.f32 %v498, %v499
    %624 = vadd.xlane.f32.xlu0 %v623
    %v625 = vpop.xlane.xlu0 %624
    %v626 = vadd.f32 %v500, %v501
    %627 = vadd.xlane.f32.xlu0 %v626
    %v628 = vpop.xlane.xlu0 %627
    %v629 = vadd.f32 %v502, %v503
    %630 = vadd.xlane.f32.xlu0 %v629
    %v631 = vpop.xlane.xlu0 %630
    %v632 = vadd.f32 %v504, %v505
    %633 = vadd.xlane.f32.xlu0 %v632
    %v634 = vpop.xlane.xlu0 %633
    %v635 = vadd.f32 %v506, %v507
    %636 = vadd.xlane.f32.xlu0 %v635
    %v637 = vpop.xlane.xlu0 %636
    %v638 = vadd.f32 %v508, %v509
    %639 = vadd.xlane.f32.xlu0 %v638
    %v640 = vpop.xlane.xlu0 %639
    %v641 = vadd.f32 %v510, %v511
    %642 = vadd.xlane.f32.xlu0 %v641
    %v643 = vpop.xlane.xlu0 %642
    %v644 = vadd.f32 %v512, %v513
    %645 = vadd.xlane.f32.xlu0 %v644
    %v646 = vpop.xlane.xlu0 %645
    %v647 = vadd.f32 %v514, %v515
    %648 = vadd.xlane.f32.xlu0 %v647
    %v649 = vpop.xlane.xlu0 %648
    %v650 = vadd.f32 %v516, %v517
    %651 = vadd.xlane.f32.xlu0 %v650
    %v652 = vpop.xlane.xlu0 %651
    %v653 = vadd.f32 %v518, %v519
    %654 = vadd.xlane.f32.xlu0 %v653
    %v655 = vpop.xlane.xlu0 %654
    %v656 = vadd.f32 %v520, %v521
    %657 = vadd.xlane.f32.xlu0 %v656
    %v658 = vpop.xlane.xlu0 %657
    %v659 = vadd.f32 %v522, %v523
    %660 = vadd.xlane.f32.xlu0 %v659
    %v661 = vpop.xlane.xlu0 %660
    %v662 = vadd.f32 %v524, %v525
    %663 = vadd.xlane.f32.xlu0 %v662
    %v664 = vpop.xlane.xlu0 %663
    %v665 = vadd.f32 %v526, %v527
    %666 = vadd.xlane.f32.xlu0 %v665
    %v667 = vpop.xlane.xlu0 %666
    %v668 = vadd.f32 %v528, %v529
    %669 = vadd.xlane.f32.xlu0 %v668
    %v670 = vpop.xlane.xlu0 %669
    %v671 = vadd.f32 %v530, %v531
    %672 = vadd.xlane.f32.xlu0 %v671
    %v673 = vpop.xlane.xlu0 %672
    %v674 = vadd.f32 %v532, %v533
    %675 = vadd.xlane.f32.xlu0 %v674
    %v676 = vpop.xlane.xlu0 %675
    %v677 = vadd.f32 %v534, %v535
    %678 = vadd.xlane.f32.xlu0 %v677
    %v679 = vpop.xlane.xlu0 %678
    %v680 = vadd.f32 %v536, %v537
    %681 = vadd.xlane.f32.xlu0 %v680
    %v682 = vpop.xlane.xlu0 %681
    %v683 = vadd.f32 %v538, %v539
    %684 = vadd.xlane.f32.xlu0 %v683
    %v685 = vpop.xlane.xlu0 %684
    %v686 = vadd.f32 %v540, %v541
    %687 = vadd.xlane.f32.xlu0 %v686
    %v688 = vpop.xlane.xlu0 %687
    %v689 = vadd.f32 %v542, %v543
    %690 = vadd.xlane.f32.xlu0 %v689
    %v691 = vpop.xlane.xlu0 %690
    %v692 = vadd.f32 %v544, %v545
    %693 = vadd.xlane.f32.xlu0 %v692
    %v694 = vpop.xlane.xlu0 %693
    %v695 = vsel %vm291, %v546, 0.0
    %v696 = vsel %vm291, %v547, 0.0
    %v697 = vadd.f32 %v695, %v696
    %698 = vadd.xlane.f32.xlu0 %v697
    %v699 = vpop.xlane.xlu0 %698
    %v700 = vmul.f32 %v550, %v297
    %v701 = vmul.f32 %v553, %v297
    %v702 = vmul.f32 %v556, %v297
    %v703 = vmul.f32 %v559, %v297
    %v704 = vmul.f32 %v562, %v297
    %v705 = vmul.f32 %v565, %v297
    %v706 = vmul.f32 %v568, %v297
    %v707 = vmul.f32 %v571, %v297
    %v708 = vmul.f32 %v574, %v297
    %v709 = vmul.f32 %v577, %v297
    %v710 = vmul.f32 %v580, %v297
    %v711 = vmul.f32 %v583, %v297
    %v712 = vmul.f32 %v586, %v297
    %v713 = vmul.f32 %v589, %v297
    %v714 = vmul.f32 %v592, %v297
    %v715 = vmul.f32 %v595, %v297
    %v716 = vmul.f32 %v598, %v297
    %v717 = vmul.f32 %v601, %v297
    %v718 = vmul.f32 %v604, %v297
    %v719 = vmul.f32 %v607, %v297
    %v720 = vmul.f32 %v610, %v297
    %v721 = vmul.f32 %v613, %v297
    %v722 = vmul.f32 %v616, %v297
    %v723 = vmul.f32 %v619, %v297
    %v724 = vmul.f32 %v622, %v297
    %v725 = vmul.f32 %v625, %v297
    %v726 = vmul.f32 %v628, %v297
    %v727 = vmul.f32 %v631, %v297
    %v728 = vmul.f32 %v634, %v297
    %v729 = vmul.f32 %v637, %v297
    %v730 = vmul.f32 %v640, %v297
    %v731 = vmul.f32 %v643, %v297
    %v732 = vmul.f32 %v646, %v297
    %v733 = vmul.f32 %v649, %v297
    %v734 = vmul.f32 %v652, %v297
    %v735 = vmul.f32 %v655, %v297
    %v736 = vmul.f32 %v658, %v297
    %v737 = vmul.f32 %v661, %v297
    %v738 = vmul.f32 %v664, %v297
    %v739 = vmul.f32 %v667, %v297
    %v740 = vmul.f32 %v670, %v297
    %v741 = vmul.f32 %v673, %v297
    %v742 = vmul.f32 %v676, %v297
    %v743 = vmul.f32 %v679, %v297
    %v744 = vmul.f32 %v682, %v297
    %v745 = vmul.f32 %v685, %v297
    %v746 = vmul.f32 %v688, %v297
    %v747 = vmul.f32 %v691, %v297
    %v748 = vmul.f32 %v694, %v297
    %v749 = vmul.f32 %v699, %v297
    %v750 = vadd.f32 %v700, 1e-05
    %v751 = vadd.f32 %v701, 1e-05
    %v752 = vadd.f32 %v702, 1e-05
    %v753 = vadd.f32 %v703, 1e-05
    %v754 = vadd.f32 %v704, 1e-05
    %v755 = vadd.f32 %v705, 1e-05
    %v756 = vadd.f32 %v706, 1e-05
    %v757 = vadd.f32 %v707, 1e-05
    %v758 = vadd.f32 %v708, 1e-05
    %v759 = vadd.f32 %v709, 1e-05
    %v760 = vadd.f32 %v710, 1e-05
    %v761 = vadd.f32 %v711, 1e-05
    %v762 = vadd.f32 %v712, 1e-05
    %v763 = vadd.f32 %v713, 1e-05
    %v764 = vadd.f32 %v714, 1e-05
    %v765 = vadd.f32 %v715, 1e-05
    %v766 = vadd.f32 %v716, 1e-05
    %v767 = vadd.f32 %v717, 1e-05
    %v768 = vadd.f32 %v718, 1e-05
    %v769 = vadd.f32 %v719, 1e-05
    %v770 = vadd.f32 %v720, 1e-05
    %v771 = vadd.f32 %v721, 1e-05
    %v772 = vadd.f32 %v722, 1e-05
    %v773 = vadd.f32 %v723, 1e-05
    %v774 = vadd.f32 %v724, 1e-05
    %v775 = vadd.f32 %v725, 1e-05
    %v776 = vadd.f32 %v726, 1e-05
    %v777 = vadd.f32 %v727, 1e-05
    %v778 = vadd.f32 %v728, 1e-05
    %v779 = vadd.f32 %v729, 1e-05
    %v780 = vadd.f32 %v730, 1e-05
    %v781 = vadd.f32 %v731, 1e-05
    %v782 = vadd.f32 %v732, 1e-05
    %v783 = vadd.f32 %v733, 1e-05
    %v784 = vadd.f32 %v734, 1e-05
    %v785 = vadd.f32 %v735, 1e-05
    %v786 = vadd.f32 %v736, 1e-05
    %v787 = vadd.f32 %v737, 1e-05
    %v788 = vadd.f32 %v738, 1e-05
    %v789 = vadd.f32 %v739, 1e-05
    %v790 = vadd.f32 %v740, 1e-05
    %v791 = vadd.f32 %v741, 1e-05
    %v792 = vadd.f32 %v742, 1e-05
    %v793 = vadd.f32 %v743, 1e-05
    %v794 = vadd.f32 %v744, 1e-05
    %v795 = vadd.f32 %v745, 1e-05
    %v796 = vadd.f32 %v746, 1e-05
    %v797 = vadd.f32 %v747, 1e-05
    %v798 = vadd.f32 %v748, 1e-05
    %v799 = vadd.f32 %v749, 1e-05
    %v800 = vrsqrt.pop %v750
    %v801 = vrsqrt.pop %v751
    %v802 = vrsqrt.pop %v752
    %v803 = vrsqrt.pop %v753
    %v804 = vrsqrt.pop %v754
    %v805 = vrsqrt.pop %v755
    %v806 = vrsqrt.pop %v756
    %v807 = vrsqrt.pop %v757
    %v808 = vrsqrt.pop %v758
    %v809 = vrsqrt.pop %v759
    %v810 = vrsqrt.pop %v760
    %v811 = vrsqrt.pop %v761
    %v812 = vrsqrt.pop %v762
    %v813 = vrsqrt.pop %v763
    %v814 = vrsqrt.pop %v764
    %v815 = vrsqrt.pop %v765
    %v816 = vrsqrt.pop %v766
    %v817 = vrsqrt.pop %v767
    %v818 = vrsqrt.pop %v768
    %v819 = vrsqrt.pop %v769
    %v820 = vrsqrt.pop %v770
    %v821 = vrsqrt.pop %v771
    %v822 = vrsqrt.pop %v772
    %v823 = vrsqrt.pop %v773
    %v824 = vrsqrt.pop %v774
    %v825 = vrsqrt.pop %v775
    %v826 = vrsqrt.pop %v776
    %v827 = vrsqrt.pop %v777
    %v828 = vrsqrt.pop %v778
    %v829 = vrsqrt.pop %v779
    %v830 = vrsqrt.pop %v780
    %v831 = vrsqrt.pop %v781
    %v832 = vrsqrt.pop %v782
    %v833 = vrsqrt.pop %v783
    %v834 = vrsqrt.pop %v784
    %v835 = vrsqrt.pop %v785
    %v836 = vrsqrt.pop %v786
    %v837 = vrsqrt.pop %v787
    %v838 = vrsqrt.pop %v788
    %v839 = vrsqrt.pop %v789
    %v840 = vrsqrt.pop %v790
    %v841 = vrsqrt.pop %v791
    %v842 = vrsqrt.pop %v792
    %v843 = vrsqrt.pop %v793
    %v844 = vrsqrt.pop %v794
    %v845 = vrsqrt.pop %v795
    %v846 = vrsqrt.pop %v796
    %v847 = vrsqrt.pop %v797
    %v848 = vrsqrt.pop %v798
    %v849 = vrsqrt.pop %v799
    %v850 = vmul.f32 %v348, %v800
    %v851 = vmul.f32 %v349, %v800
    %v852 = vmul.f32 %v350, %v801
    %v853 = vmul.f32 %v351, %v801
    %v854 = vmul.f32 %v352, %v802
    %v855 = vmul.f32 %v353, %v802
    %v856 = vmul.f32 %v354, %v803
    %v857 = vmul.f32 %v355, %v803
    %v858 = vmul.f32 %v356, %v804
    %v859 = vmul.f32 %v357, %v804
    %v860 = vmul.f32 %v358, %v805
    %v861 = vmul.f32 %v359, %v805
    %v862 = vmul.f32 %v360, %v806
    %v863 = vmul.f32 %v361, %v806
    %v864 = vmul.f32 %v362, %v807
    %v865 = vmul.f32 %v363, %v807
    %v866 = vmul.f32 %v364, %v808
    %v867 = vmul.f32 %v365, %v808
    %v868 = vmul.f32 %v366, %v809
    %v869 = vmul.f32 %v367, %v809
    %v870 = vmul.f32 %v368, %v810
    %v871 = vmul.f32 %v369, %v810
    %v872 = vmul.f32 %v370, %v811
    %v873 = vmul.f32 %v371, %v811
    %v874 = vmul.f32 %v372, %v812
    %v875 = vmul.f32 %v373, %v812
    %v876 = vmul.f32 %v374, %v813
    %v877 = vmul.f32 %v375, %v813
    %v878 = vmul.f32 %v376, %v814
    %v879 = vmul.f32 %v377, %v814
    %v880 = vmul.f32 %v378, %v815
    %v881 = vmul.f32 %v379, %v815
    %v882 = vmul.f32 %v380, %v816
    %v883 = vmul.f32 %v381, %v816
    %v884 = vmul.f32 %v382, %v817
    %v885 = vmul.f32 %v383, %v817
    %v886 = vmul.f32 %v384, %v818
    %v887 = vmul.f32 %v385, %v818
    %v888 = vmul.f32 %v386, %v819
    %v889 = vmul.f32 %v387, %v819
    %v890 = vmul.f32 %v388, %v820
    %v891 = vmul.f32 %v389, %v820
    %v892 = vmul.f32 %v390, %v821
    %v893 = vmul.f32 %v391, %v821
    %v894 = vmul.f32 %v392, %v822
    %v895 = vmul.f32 %v393, %v822
    %v896 = vmul.f32 %v394, %v823
    %v897 = vmul.f32 %v395, %v823
    %v898 = vmul.f32 %v396, %v824
    %v899 = vmul.f32 %v397, %v824
    %v900 = vmul.f32 %v398, %v825
    %v901 = vmul.f32 %v399, %v825
    %v902 = vmul.f32 %v400, %v826
    %v903 = vmul.f32 %v401, %v826
    %v904 = vmul.f32 %v402, %v827
    %v905 = vmul.f32 %v403, %v827
    %v906 = vmul.f32 %v404, %v828
    %v907 = vmul.f32 %v405, %v828
    %v908 = vmul.f32 %v406, %v829
    %v909 = vmul.f32 %v407, %v829
    %v910 = vmul.f32 %v408, %v830
    %v911 = vmul.f32 %v409, %v830
    %v912 = vmul.f32 %v410, %v831
    %v913 = vmul.f32 %v411, %v831
    %v914 = vmul.f32 %v412, %v832
    %v915 = vmul.f32 %v413, %v832
    %v916 = vmul.f32 %v414, %v833
    %v917 = vmul.f32 %v415, %v833
    %v918 = vmul.f32 %v416, %v834
    %v919 = vmul.f32 %v417, %v834
    %v920 = vmul.f32 %v418, %v835
    %v921 = vmul.f32 %v419, %v835
    %v922 = vmul.f32 %v420, %v836
    %v923 = vmul.f32 %v421, %v836
    %v924 = vmul.f32 %v422, %v837
    %v925 = vmul.f32 %v423, %v837
    %v926 = vmul.f32 %v424, %v838
    %v927 = vmul.f32 %v425, %v838
    %v928 = vmul.f32 %v426, %v839
    %v929 = vmul.f32 %v427, %v839
    %v930 = vmul.f32 %v428, %v840
    %v931 = vmul.f32 %v429, %v840
    %v932 = vmul.f32 %v430, %v841
    %v933 = vmul.f32 %v431, %v841
    %v934 = vmul.f32 %v432, %v842
    %v935 = vmul.f32 %v433, %v842
    %v936 = vmul.f32 %v434, %v843
    %v937 = vmul.f32 %v435, %v843
    %v938 = vmul.f32 %v436, %v844
    %v939 = vmul.f32 %v437, %v844
    %v940 = vmul.f32 %v438, %v845
    %v941 = vmul.f32 %v439, %v845
    %v942 = vmul.f32 %v440, %v846
    %v943 = vmul.f32 %v441, %v846
    %v944 = vmul.f32 %v442, %v847
    %v945 = vmul.f32 %v443, %v847
    %v946 = vmul.f32 %v444, %v848
    %v947 = vmul.f32 %v445, %v848
    %v948 = vmul.f32 %v446, %v849
    %v949 = vmul.f32 %v447, %v849
    %v950 = vld [vmem:[#allocation2] sm:$0x3]
    %v952 = vlaneseq
    %v953 = vshrl.u32 %v952, 7
    %v954 = vsub.s32 0, %v953
    %v955 = vrot.slane %v950, %v954
    %v956 = vlaneseq
    %v957 = vshrl.u32 %v956, 7
    %v958 = vsub.s32 1, %v957
    %v959 = vrot.slane %v950, %v958
    %v962 = vmul.f32 %v850, %v955
    %v963 = vmul.f32 %v851, %v959
    %v964 = vmul.f32 %v852, %v955
    %v965 = vmul.f32 %v853, %v959
    %v966 = vmul.f32 %v854, %v955
    %v967 = vmul.f32 %v855, %v959
    %v968 = vmul.f32 %v856, %v955
    %v969 = vmul.f32 %v857, %v959
    %v970 = vmul.f32 %v858, %v955
    %v971 = vmul.f32 %v859, %v959
    %v972 = vmul.f32 %v860, %v955
    %v973 = vmul.f32 %v861, %v959
    %v974 = vmul.f32 %v862, %v955
    %v975 = vmul.f32 %v863, %v959
    %v976 = vmul.f32 %v864, %v955
    %v977 = vmul.f32 %v865, %v959
    %v978 = vmul.f32 %v866, %v955
    %v979 = vmul.f32 %v867, %v959
    %v980 = vmul.f32 %v868, %v955
    %v981 = vmul.f32 %v869, %v959
    %v982 = vmul.f32 %v870, %v955
    %v983 = vmul.f32 %v871, %v959
    %v984 = vmul.f32 %v872, %v955
    %v985 = vmul.f32 %v873, %v959
    %v986 = vmul.f32 %v874, %v955
    %v987 = vmul.f32 %v875, %v959
    %v988 = vmul.f32 %v876, %v955
    %v989 = vmul.f32 %v877, %v959
    %v990 = vmul.f32 %v878, %v955
    %v991 = vmul.f32 %v879, %v959
    %v992 = vmul.f32 %v880, %v955
    %v993 = vmul.f32 %v881, %v959
    %v994 = vmul.f32 %v882, %v955
    %v995 = vmul.f32 %v883, %v959
    %v996 = vmul.f32 %v884, %v955
    %v997 = vmul.f32 %v885, %v959
    %v998 = vmul.f32 %v886, %v955
    %v999 = vmul.f32 %v887, %v959
    %v1000 = vmul.f32 %v888, %v955
    %v1001 = vmul.f32 %v889, %v959
    %v1002 = vmul.f32 %v890, %v955
    %v1003 = vmul.f32 %v891, %v959
    %v1004 = vmul.f32 %v892, %v955
    %v1005 = vmul.f32 %v893, %v959
    %v1006 = vmul.f32 %v894, %v955
    %v1007 = vmul.f32 %v895, %v959
    %v1008 = vmul.f32 %v896, %v955
    %v1009 = vmul.f32 %v897, %v959
    %v1010 = vmul.f32 %v898, %v955
    %v1011 = vmul.f32 %v899, %v959
    %v1012 = vmul.f32 %v900, %v955
    %v1013 = vmul.f32 %v901, %v959
    %v1014 = vmul.f32 %v902, %v955
    %v1015 = vmul.f32 %v903, %v959
    %v1016 = vmul.f32 %v904, %v955
    %v1017 = vmul.f32 %v905, %v959
    %v1018 = vmul.f32 %v906, %v955
    %v1019 = vmul.f32 %v907, %v959
    %v1020 = vmul.f32 %v908, %v955
    %v1021 = vmul.f32 %v909, %v959
    %v1022 = vmul.f32 %v910, %v955
    %v1023 = vmul.f32 %v911, %v959
    %v1024 = vmul.f32 %v912, %v955
    %v1025 = vmul.f32 %v913, %v959
    %v1026 = vmul.f32 %v914, %v955
    %v1027 = vmul.f32 %v915, %v959
    %v1028 = vmul.f32 %v916, %v955
    %v1029 = vmul.f32 %v917, %v959
    %v1030 = vmul.f32 %v918, %v955
    %v1031 = vmul.f32 %v919, %v959
    %v1032 = vmul.f32 %v920, %v955
    %v1033 = vmul.f32 %v921, %v959
    %v1034 = vmul.f32 %v922, %v955
    %v1035 = vmul.f32 %v923, %v959
    %v1036 = vmul.f32 %v924, %v955
    %v1037 = vmul.f32 %v925, %v959
    %v1038 = vmul.f32 %v926, %v955
    %v1039 = vmul.f32 %v927, %v959
    %v1040 = vmul.f32 %v928, %v955
    %v1041 = vmul.f32 %v929, %v959
    %v1042 = vmul.f32 %v930, %v955
    %v1043 = vmul.f32 %v931, %v959
    %v1044 = vmul.f32 %v932, %v955
    %v1045 = vmul.f32 %v933, %v959
    %v1046 = vmul.f32 %v934, %v955
    %v1047 = vmul.f32 %v935, %v959
    %v1048 = vmul.f32 %v936, %v955
    %v1049 = vmul.f32 %v937, %v959
    %v1050 = vmul.f32 %v938, %v955
    %v1051 = vmul.f32 %v939, %v959
    %v1052 = vmul.f32 %v940, %v955
    %v1053 = vmul.f32 %v941, %v959
    %v1054 = vmul.f32 %v942, %v955
    %v1055 = vmul.f32 %v943, %v959
    %v1056 = vmul.f32 %v944, %v955
    %v1057 = vmul.f32 %v945, %v959
    %v1058 = vmul.f32 %v946, %v955
    %v1059 = vmul.f32 %v947, %v959
    %v1060 = vmul.f32 %v948, %v955
    %v1061 = vmul.f32 %v949, %v959
    %v1062 = vld [vmem:[#allocation4] sm:$0x3]
    %v1064 = vlaneseq
    %v1065 = vshrl.u32 %v1064, 7
    %v1066 = vsub.s32 0, %v1065
    %v1067 = vrot.slane %v1062, %v1066
    %v1068 = vlaneseq
    %v1069 = vshrl.u32 %v1068, 7
    %v1070 = vsub.s32 1, %v1069
    %v1071 = vrot.slane %v1062, %v1070
    %v1074 = vadd.f32 %v962, %v1067
    %v1075 = vadd.f32 %v963, %v1071
    %v1076 = vadd.f32 %v964, %v1067
    %v1077 = vadd.f32 %v965, %v1071
    %v1078 = vadd.f32 %v966, %v1067
    %v1079 = vadd.f32 %v967, %v1071
    %v1080 = vadd.f32 %v968, %v1067
    %v1081 = vadd.f32 %v969, %v1071
    %v1082 = vadd.f32 %v970, %v1067
    %v1083 = vadd.f32 %v971, %v1071
    %v1084 = vadd.f32 %v972, %v1067
    %v1085 = vadd.f32 %v973, %v1071
    %v1086 = vadd.f32 %v974, %v1067
    %v1087 = vadd.f32 %v975, %v1071
    %v1088 = vadd.f32 %v976, %v1067
    %v1089 = vadd.f32 %v977, %v1071
    %v1090 = vadd.f32 %v978, %v1067
    %v1091 = vadd.f32 %v979, %v1071
    %v1092 = vadd.f32 %v980, %v1067
    %v1093 = vadd.f32 %v981, %v1071
    %v1094 = vadd.f32 %v982, %v1067
    %v1095 = vadd.f32 %v983, %v1071
    %v1096 = vadd.f32 %v984, %v1067
    %v1097 = vadd.f32 %v985, %v1071
    %v1098 = vadd.f32 %v986, %v1067
    %v1099 = vadd.f32 %v987, %v1071
    %v1100 = vadd.f32 %v988, %v1067
    %v1101 = vadd.f32 %v989, %v1071
    %v1102 = vadd.f32 %v990, %v1067
    %v1103 = vadd.f32 %v991, %v1071
    %v1104 = vadd.f32 %v992, %v1067
    %v1105 = vadd.f32 %v993, %v1071
    %v1106 = vadd.f32 %v994, %v1067
    %v1107 = vadd.f32 %v995, %v1071
    %v1108 = vadd.f32 %v996, %v1067
    %v1109 = vadd.f32 %v997, %v1071
    %v1110 = vadd.f32 %v998, %v1067
    %v1111 = vadd.f32 %v999, %v1071
    %v1112 = vadd.f32 %v1000, %v1067
    %v1113 = vadd.f32 %v1001, %v1071
    %v1114 = vadd.f32 %v1002, %v1067
    %v1115 = vadd.f32 %v1003, %v1071
    %v1116 = vadd.f32 %v1004, %v1067
    %v1117 = vadd.f32 %v1005, %v1071
    %v1118 = vadd.f32 %v1006, %v1067
    %v1119 = vadd.f32 %v1007, %v1071
    %v1120 = vadd.f32 %v1008, %v1067
    %v1121 = vadd.f32 %v1009, %v1071
    %v1122 = vadd.f32 %v1010, %v1067
    %v1123 = vadd.f32 %v1011, %v1071
    %v1124 = vadd.f32 %v1012, %v1067
    %v1125 = vadd.f32 %v1013, %v1071
    %v1126 = vadd.f32 %v1014, %v1067
    %v1127 = vadd.f32 %v1015, %v1071
    %v1128 = vadd.f32 %v1016, %v1067
    %v1129 = vadd.f32 %v1017, %v1071
    %v1130 = vadd.f32 %v1018, %v1067
    %v1131 = vadd.f32 %v1019, %v1071
    %v1132 = vadd.f32 %v1020, %v1067
    %v1133 = vadd.f32 %v1021, %v1071
    %v1134 = vadd.f32 %v1022, %v1067
    %v1135 = vadd.f32 %v1023, %v1071
    %v1136 = vadd.f32 %v1024, %v1067
    %v1137 = vadd.f32 %v1025, %v1071
    %v1138 = vadd.f32 %v1026, %v1067
    %v1139 = vadd.f32 %v1027, %v1071
    %v1140 = vadd.f32 %v1028, %v1067
    %v1141 = vadd.f32 %v1029, %v1071
    %v1142 = vadd.f32 %v1030, %v1067
    %v1143 = vadd.f32 %v1031, %v1071
    %v1144 = vadd.f32 %v1032, %v1067
    %v1145 = vadd.f32 %v1033, %v1071
    %v1146 = vadd.f32 %v1034, %v1067
    %v1147 = vadd.f32 %v1035, %v1071
    %v1148 = vadd.f32 %v1036, %v1067
    %v1149 = vadd.f32 %v1037, %v1071
    %v1150 = vadd.f32 %v1038, %v1067
    %v1151 = vadd.f32 %v1039, %v1071
    %v1152 = vadd.f32 %v1040, %v1067
    %v1153 = vadd.f32 %v1041, %v1071
    %v1154 = vadd.f32 %v1042, %v1067
    %v1155 = vadd.f32 %v1043, %v1071
    %v1156 = vadd.f32 %v1044, %v1067
    %v1157 = vadd.f32 %v1045, %v1071
    %v1158 = vadd.f32 %v1046, %v1067
    %v1159 = vadd.f32 %v1047, %v1071
    %v1160 = vadd.f32 %v1048, %v1067
    %v1161 = vadd.f32 %v1049, %v1071
    %v1162 = vadd.f32 %v1050, %v1067
    %v1163 = vadd.f32 %v1051, %v1071
    %v1164 = vadd.f32 %v1052, %v1067
    %v1165 = vadd.f32 %v1053, %v1071
    %v1166 = vadd.f32 %v1054, %v1067
    %v1167 = vadd.f32 %v1055, %v1071
    %v1168 = vadd.f32 %v1056, %v1067
    %v1169 = vadd.f32 %v1057, %v1071
    %v1170 = vadd.f32 %v1058, %v1067
    %v1171 = vadd.f32 %v1059, %v1071
    %v1172 = vadd.f32 %v1060, %v1067
    %v1173 = vadd.f32 %v1061, %v1071
    %v1174 = vld [vmem:[%s3] sm:$0xff]
    %v1175 = vld [vmem:[%s3 + $0x8] sm:$0xff]
    %v1176 = vld [vmem:[%s3 + $0x10] sm:$0xff]
    %v1177 = vld [vmem:[%s3 + $0x18] sm:$0xff]
    %v1178 = vld [vmem:[%s3 + $0x20] sm:$0xff]
    %v1179 = vld [vmem:[%s3 + $0x28] sm:$0xff]
    %v1180 = vld [vmem:[%s3 + $0x30] sm:$0xff]
    %v1181 = vld [vmem:[%s3 + $0x38] sm:$0xff]
    %v1182 = vld [vmem:[%s3 + $0x40] sm:$0xff]
    %v1183 = vld [vmem:[%s3 + $0x48] sm:$0xff]
    %v1184 = vld [vmem:[%s3 + $0x50] sm:$0xff]
    %v1185 = vld [vmem:[%s3 + $0x58] sm:$0xff]
    %v1186 = vld [vmem:[%s3 + $0x60] sm:$0xff]
    %v1187 = vld [vmem:[%s3 + $0x68] sm:$0xff]
    %v1188 = vld [vmem:[%s3 + $0x70] sm:$0xff]
    %v1189 = vld [vmem:[%s3 + $0x78] sm:$0xff]
    %v1190 = vld [vmem:[%s3 + $0x80] sm:$0xff]
    %v1191 = vld [vmem:[%s3 + $0x88] sm:$0xff]
    %v1192 = vld [vmem:[%s3 + $0x90] sm:$0xff]
    %v1193 = vld [vmem:[%s3 + $0x98] sm:$0xff]
    %v1194 = vld [vmem:[%s3 + $0xa0] sm:$0xff]
    %v1195 = vld [vmem:[%s3 + $0xa8] sm:$0xff]
    %v1196 = vld [vmem:[%s3 + $0xb0] sm:$0xff]
    %v1197 = vld [vmem:[%s3 + $0xb8] sm:$0xff]
    %v1198 = vld [vmem:[%s3 + $0xc0] sm:$0xff]
    %v1199 = vld [vmem:[%s3 + $0xc8] sm:$0xff]
    %v1200 = vld [vmem:[%s3 + $0xd0] sm:$0xff]
    %v1201 = vld [vmem:[%s3 + $0xd8] sm:$0xff]
    %v1202 = vld [vmem:[%s3 + $0xe0] sm:$0xff]
    %v1203 = vld [vmem:[%s3 + $0xe8] sm:$0xff]
    %v1204 = vld [vmem:[%s3 + $0xf0] sm:$0xff]
    %v1205 = vld [vmem:[%s3 + $0xf8] sm:$0xff]
    %v1206 = vld [vmem:[%s3 + $0x100] sm:$0xff]
    %v1207 = vld [vmem:[%s3 + $0x108] sm:$0xff]
    %v1208 = vld [vmem:[%s3 + $0x110] sm:$0xff]
    %v1209 = vld [vmem:[%s3 + $0x118] sm:$0xff]
    %v1210 = vld [vmem:[%s3 + $0x120] sm:$0xff]
    %v1211 = vld [vmem:[%s3 + $0x128] sm:$0xff]
    %v1212 = vld [vmem:[%s3 + $0x130] sm:$0xff]
    %v1213 = vld [vmem:[%s3 + $0x138] sm:$0xff]
    %v1214 = vld [vmem:[%s3 + $0x140] sm:$0xff]
    %v1215 = vld [vmem:[%s3 + $0x148] sm:$0xff]
    %v1216 = vld [vmem:[%s3 + $0x150] sm:$0xff]
    %v1217 = vld [vmem:[%s3 + $0x158] sm:$0xff]
    %v1218 = vld [vmem:[%s3 + $0x160] sm:$0xff]
    %v1219 = vld [vmem:[%s3 + $0x168] sm:$0xff]
    %v1220 = vld [vmem:[%s3 + $0x170] sm:$0xff]
    %v1221 = vld [vmem:[%s3 + $0x178] sm:$0xff]
    %v1222 = vld [vmem:[%s3 + $0x180] sm:$0xff]
    %v1223 = vld [vmem:[%s3 + $0x188] sm:$0xff]
    %v1224 = vld [vmem:[%s3 + $0x190] sm:$0xff]
    %v1225 = vld [vmem:[%s3 + $0x198] sm:$0xff]
    %v1226 = vld [vmem:[%s3 + $0x1a0] sm:$0xff]
    %v1227 = vld [vmem:[%s3 + $0x1a8] sm:$0xff]
    %v1228 = vld [vmem:[%s3 + $0x1b0] sm:$0xff]
    %v1229 = vld [vmem:[%s3 + $0x1b8] sm:$0xff]
    %v1230 = vld [vmem:[%s3 + $0x1c0] sm:$0xff]
    %v1231 = vld [vmem:[%s3 + $0x1c8] sm:$0xff]
    %v1232 = vld [vmem:[%s3 + $0x1d0] sm:$0xff]
    %v1233 = vld [vmem:[%s3 + $0x1d8] sm:$0xff]
    %v1234 = vld [vmem:[%s3 + $0x1e0] sm:$0xff]
    %v1235 = vld [vmem:[%s3 + $0x1e8] sm:$0xff]
    %v1236 = vld [vmem:[%s3 + $0x1f0] sm:$0xff]
    %v1237 = vld [vmem:[%s3 + $0x1f8] sm:$0xff]
    %v1238 = vld [vmem:[%s3 + $0x200] sm:$0xff]
    %v1239 = vld [vmem:[%s3 + $0x208] sm:$0xff]
    %v1240 = vld [vmem:[%s3 + $0x210] sm:$0xff]
    %v1241 = vld [vmem:[%s3 + $0x218] sm:$0xff]
    %v1242 = vld [vmem:[%s3 + $0x220] sm:$0xff]
    %v1243 = vld [vmem:[%s3 + $0x228] sm:$0xff]
    %v1244 = vld [vmem:[%s3 + $0x230] sm:$0xff]
    %v1245 = vld [vmem:[%s3 + $0x238] sm:$0xff]
    %v1246 = vld [vmem:[%s3 + $0x240] sm:$0xff]
    %v1247 = vld [vmem:[%s3 + $0x248] sm:$0xff]
    %v1248 = vld [vmem:[%s3 + $0x250] sm:$0xff]
    %v1249 = vld [vmem:[%s3 + $0x258] sm:$0xff]
    %v1250 = vld [vmem:[%s3 + $0x260] sm:$0xff]
    %v1251 = vld [vmem:[%s3 + $0x268] sm:$0xff]
    %v1252 = vld [vmem:[%s3 + $0x270] sm:$0xff]
    %v1253 = vld [vmem:[%s3 + $0x278] sm:$0xff]
    %v1254 = vld [vmem:[%s3 + $0x280] sm:$0xff]
    %v1255 = vld [vmem:[%s3 + $0x288] sm:$0xff]
    %v1256 = vld [vmem:[%s3 + $0x290] sm:$0xff]
    %v1257 = vld [vmem:[%s3 + $0x298] sm:$0xff]
    %v1258 = vld [vmem:[%s3 + $0x2a0] sm:$0xff]
    %v1259 = vld [vmem:[%s3 + $0x2a8] sm:$0xff]
    %v1260 = vld [vmem:[%s3 + $0x2b0] sm:$0xff]
    %v1261 = vld [vmem:[%s3 + $0x2b8] sm:$0xff]
    %v1262 = vld [vmem:[%s3 + $0x2c0] sm:$0xff]
    %v1263 = vld [vmem:[%s3 + $0x2c8] sm:$0xff]
    %v1264 = vld [vmem:[%s3 + $0x2d0] sm:$0xff]
    %v1265 = vld [vmem:[%s3 + $0x2d8] sm:$0xff]
    %v1266 = vld [vmem:[%s3 + $0x2e0] sm:$0xff]
    %v1267 = vld [vmem:[%s3 + $0x2e8] sm:$0xff]
    %v1268 = vld [vmem:[%s3 + $0x2f0] sm:$0xff]
    %v1269 = vld [vmem:[%s3 + $0x2f8] sm:$0xff]
    %v1270 = vld [vmem:[%s3 + $0x300] sm:$0xff]
    %v1271 = vld [vmem:[%s3 + $0x308] sm:$0xff]
    %v1272 = vld [vmem:[%s3 + $0x310] sm:$0xff]
    %v1273 = vld [vmem:[%s3 + $0x318] sm:$0xff]
    %v1274 = vld [vmem:[%s3 + $0x320] sm:$0xff]
    %v1275 = vld [vmem:[%s3 + $0x328] sm:$0xff]
    %v1276 = vld [vmem:[%s3 + $0x330] sm:$0xff]
    %v1277 = vld [vmem:[%s3 + $0x338] sm:$0xff]
    %v1278 = vld [vmem:[%s3 + $0x340] sm:$0xff]
    %v1279 = vld [vmem:[%s3 + $0x348] sm:$0xff]
    %v1280 = vld [vmem:[%s3 + $0x350] sm:$0xff]
    %v1281 = vld [vmem:[%s3 + $0x358] sm:$0xff]
    %v1282 = vld [vmem:[%s3 + $0x360] sm:$0xff]
    %v1283 = vld [vmem:[%s3 + $0x368] sm:$0xff]
    %v1284 = vld [vmem:[%s3 + $0x370] sm:$0xff]
    %v1285 = vld [vmem:[%s3 + $0x378] sm:$0xff]
    %v1286 = vld [vmem:[%s3 + $0x380] sm:$0xff]
    %v1287 = vld [vmem:[%s3 + $0x388] sm:$0xff]
    %v1288 = vld [vmem:[%s3 + $0x390] sm:$0xff]
    %v1289 = vld [vmem:[%s3 + $0x398] sm:$0xff]
    %v1290 = vld [vmem:[%s3 + $0x3a0] sm:$0xff]
    %v1291 = vld [vmem:[%s3 + $0x3a8] sm:$0xff]
    %v1292 = vld [vmem:[%s3 + $0x3b0] sm:$0xff]
    %v1293 = vld [vmem:[%s3 + $0x3b8] sm:$0xff]
    %v1294 = vld [vmem:[%s3 + $0x3c0] sm:$0xff]
    %v1295 = vld [vmem:[%s3 + $0x3c8] sm:$0xff]
    %v1296 = vld [vmem:[%s3 + $0x3d0] sm:$0xff]
    %v1297 = vld [vmem:[%s3 + $0x3d8] sm:$0xff]
    %v1298 = vld [vmem:[%s3 + $0x3e0] sm:$0xff]
    %v1299 = vld [vmem:[%s3 + $0x3e8] sm:$0xff]
    %v1300 = vld [vmem:[%s3 + $0x3f0] sm:$0xff]
    %v1301 = vld [vmem:[%s3 + $0x3f8] sm:$0xff]
    %v1302 = vld [vmem:[%s3 + $0x400] sm:$0xff]
    %v1303 = vld [vmem:[%s3 + $0x408] sm:$0xff]
    %v1304 = vld [vmem:[%s3 + $0x410] sm:$0xff]
    %v1305 = vld [vmem:[%s3 + $0x418] sm:$0xff]
    %v1306 = vld [vmem:[%s3 + $0x420] sm:$0xff]
    %v1307 = vld [vmem:[%s3 + $0x428] sm:$0xff]
    %v1308 = vld [vmem:[%s3 + $0x430] sm:$0xff]
    %v1309 = vld [vmem:[%s3 + $0x438] sm:$0xff]
    %v1310 = vld [vmem:[%s3 + $0x440] sm:$0xff]
    %v1311 = vld [vmem:[%s3 + $0x448] sm:$0xff]
    %v1312 = vld [vmem:[%s3 + $0x450] sm:$0xff]
    %v1313 = vld [vmem:[%s3 + $0x458] sm:$0xff]
    %v1314 = vld [vmem:[%s3 + $0x460] sm:$0xff]
    %v1315 = vld [vmem:[%s3 + $0x468] sm:$0xff]
    %v1316 = vld [vmem:[%s3 + $0x470] sm:$0xff]
    %v1317 = vld [vmem:[%s3 + $0x478] sm:$0xff]
    %v1318 = vld [vmem:[%s3 + $0x480] sm:$0xff]
    %v1319 = vld [vmem:[%s3 + $0x488] sm:$0xff]
    %v1320 = vld [vmem:[%s3 + $0x490] sm:$0xff]
    %v1321 = vld [vmem:[%s3 + $0x498] sm:$0xff]
    %v1322 = vld [vmem:[%s3 + $0x4a0] sm:$0xff]
    %v1323 = vld [vmem:[%s3 + $0x4a8] sm:$0xff]
    %v1324 = vld [vmem:[%s3 + $0x4b0] sm:$0xff]
    %v1325 = vld [vmem:[%s3 + $0x4b8] sm:$0xff]
    %v1326 = vld [vmem:[%s3 + $0x4c0] sm:$0xff]
    %v1327 = vld [vmem:[%s3 + $0x4c8] sm:$0xff]
    %v1328 = vld [vmem:[%s3 + $0x4d0] sm:$0xff]
    %v1329 = vld [vmem:[%s3 + $0x4d8] sm:$0xff]
    %v1330 = vld [vmem:[%s3 + $0x4e0] sm:$0xff]
    %v1331 = vld [vmem:[%s3 + $0x4e8] sm:$0xff]
    %v1332 = vld [vmem:[%s3 + $0x4f0] sm:$0xff]
    %v1333 = vld [vmem:[%s3 + $0x4f8] sm:$0xff]
    %v1334 = vld [vmem:[%s3 + $0x500] sm:$0xff]
    %v1335 = vld [vmem:[%s3 + $0x508] sm:$0xff]
    %v1336 = vld [vmem:[%s3 + $0x510] sm:$0xff]
    %v1337 = vld [vmem:[%s3 + $0x518] sm:$0xff]
    %v1338 = vld [vmem:[%s3 + $0x520] sm:$0xff]
    %v1339 = vld [vmem:[%s3 + $0x528] sm:$0xff]
    %v1340 = vld [vmem:[%s3 + $0x530] sm:$0xff]
    %v1341 = vld [vmem:[%s3 + $0x538] sm:$0xff]
    %v1342 = vld [vmem:[%s3 + $0x540] sm:$0xff]
    %v1343 = vld [vmem:[%s3 + $0x548] sm:$0xff]
    %v1344 = vld [vmem:[%s3 + $0x550] sm:$0xff]
    %v1345 = vld [vmem:[%s3 + $0x558] sm:$0xff]
    %v1346 = vld [vmem:[%s3 + $0x560] sm:$0xff]
    %v1347 = vld [vmem:[%s3 + $0x568] sm:$0xff]
    %v1348 = vld [vmem:[%s3 + $0x570] sm:$0xff]
    %v1349 = vld [vmem:[%s3 + $0x578] sm:$0xff]
    %v1350 = vld [vmem:[%s3 + $0x580] sm:$0xff]
    %v1351 = vld [vmem:[%s3 + $0x588] sm:$0xff]
    %v1352 = vld [vmem:[%s3 + $0x590] sm:$0xff]
    %v1353 = vld [vmem:[%s3 + $0x598] sm:$0xff]
    %v1354 = vld [vmem:[%s3 + $0x5a0] sm:$0xff]
    %v1355 = vld [vmem:[%s3 + $0x5a8] sm:$0xff]
    %v1356 = vld [vmem:[%s3 + $0x5b0] sm:$0xff]
    %v1357 = vld [vmem:[%s3 + $0x5b8] sm:$0xff]
    %v1358 = vld [vmem:[%s3 + $0x5c0] sm:$0xff]
    %v1359 = vld [vmem:[%s3 + $0x5c8] sm:$0xff]
    %v1360 = vld [vmem:[%s3 + $0x5d0] sm:$0xff]
    %v1361 = vld [vmem:[%s3 + $0x5d8] sm:$0xff]
    %v1362 = vld [vmem:[%s3 + $0x5e0] sm:$0xff]
    %v1363 = vld [vmem:[%s3 + $0x5e8] sm:$0xff]
    %v1364 = vld [vmem:[%s3 + $0x5f0] sm:$0xff]
    %v1365 = vld [vmem:[%s3 + $0x5f8] sm:$0xff]
    %v1366 = vld [vmem:[%s3 + $0x600] sm:$0xff]
    %v1367 = vld [vmem:[%s3 + $0x608] sm:$0xff]
    %v1368 = vld [vmem:[%s3 + $0x610] sm:$0xff]
    %v1369 = vld [vmem:[%s3 + $0x618] sm:$0xff]
    %v1370 = vld [vmem:[%s3 + $0x620] sm:$0xff]
    %v1371 = vld [vmem:[%s3 + $0x628] sm:$0xff]
    %v1372 = vld [vmem:[%s3 + $0x630] sm:$0xff]
    %v1373 = vld [vmem:[%s3 + $0x638] sm:$0xff]
    %v1374 = vld [vmem:[%s3 + $0x640] sm:$0xff]
    %v1375 = vld [vmem:[%s3 + $0x648] sm:$0xff]
    %v1376 = vld [vmem:[%s3 + $0x650] sm:$0xff]
    %v1377 = vld [vmem:[%s3 + $0x658] sm:$0xff]
    %v1378 = vld [vmem:[%s3 + $0x660] sm:$0xff]
    %v1379 = vld [vmem:[%s3 + $0x668] sm:$0xff]
    %v1380 = vld [vmem:[%s3 + $0x670] sm:$0xff]
    %v1381 = vld [vmem:[%s3 + $0x678] sm:$0xff]
    %v1382 = vld [vmem:[%s3 + $0x680] sm:$0xff]
    %v1383 = vld [vmem:[%s3 + $0x688] sm:$0xff]
    %v1384 = vld [vmem:[%s3 + $0x690] sm:$0xff]
    %v1385 = vld [vmem:[%s3 + $0x698] sm:$0xff]
    %v1386 = vld [vmem:[%s3 + $0x6a0] sm:$0xff]
    %v1387 = vld [vmem:[%s3 + $0x6a8] sm:$0xff]
    %v1388 = vld [vmem:[%s3 + $0x6b0] sm:$0xff]
    %v1389 = vld [vmem:[%s3 + $0x6b8] sm:$0xff]
    %v1390 = vld [vmem:[%s3 + $0x6c0] sm:$0xff]
    %v1391 = vld [vmem:[%s3 + $0x6c8] sm:$0xff]
    %v1392 = vld [vmem:[%s3 + $0x6d0] sm:$0xff]
    %v1393 = vld [vmem:[%s3 + $0x6d8] sm:$0xff]
    %v1394 = vld [vmem:[%s3 + $0x6e0] sm:$0xff]
    %v1395 = vld [vmem:[%s3 + $0x6e8] sm:$0xff]
    %v1396 = vld [vmem:[%s3 + $0x6f0] sm:$0xff]
    %v1397 = vld [vmem:[%s3 + $0x6f8] sm:$0xff]
    %v1398 = vld [vmem:[%s3 + $0x700] sm:$0xff]
    %v1399 = vld [vmem:[%s3 + $0x708] sm:$0xff]
    %v1400 = vld [vmem:[%s3 + $0x710] sm:$0xff]
    %v1401 = vld [vmem:[%s3 + $0x718] sm:$0xff]
    %v1402 = vld [vmem:[%s3 + $0x720] sm:$0xff]
    %v1403 = vld [vmem:[%s3 + $0x728] sm:$0xff]
    %v1404 = vld [vmem:[%s3 + $0x730] sm:$0xff]
    %v1405 = vld [vmem:[%s3 + $0x738] sm:$0xff]
    %v1406 = vld [vmem:[%s3 + $0x740] sm:$0xff]
    %v1407 = vld [vmem:[%s3 + $0x748] sm:$0xff]
    %v1408 = vld [vmem:[%s3 + $0x750] sm:$0xff]
    %v1409 = vld [vmem:[%s3 + $0x758] sm:$0xff]
    %v1410 = vld [vmem:[%s3 + $0x760] sm:$0xff]
    %v1411 = vld [vmem:[%s3 + $0x768] sm:$0xff]
    %v1412 = vld [vmem:[%s3 + $0x770] sm:$0xff]
    %v1413 = vld [vmem:[%s3 + $0x778] sm:$0xff]
    %v1414 = vld [vmem:[%s3 + $0x780] sm:$0xff]
    %v1415 = vld [vmem:[%s3 + $0x788] sm:$0xff]
    %v1416 = vld [vmem:[%s3 + $0x790] sm:$0xff]
    %v1417 = vld [vmem:[%s3 + $0x798] sm:$0xff]
    %v1418 = vld [vmem:[%s3 + $0x7a0] sm:$0xff]
    %v1419 = vld [vmem:[%s3 + $0x7a8] sm:$0xff]
    %v1420 = vld [vmem:[%s3 + $0x7b0] sm:$0xff]
    %v1421 = vld [vmem:[%s3 + $0x7b8] sm:$0xff]
    %v1422 = vld [vmem:[%s3 + $0x7c0] sm:$0xff]
    %v1423 = vld [vmem:[%s3 + $0x7c8] sm:$0xff]
    %v1424 = vld [vmem:[%s3 + $0x7d0] sm:$0xff]
    %v1425 = vld [vmem:[%s3 + $0x7d8] sm:$0xff]
    %v1426 = vld [vmem:[%s3 + $0x7e0] sm:$0xff]
    %v1427 = vld [vmem:[%s3 + $0x7e8] sm:$0xff]
    %v1428 = vld [vmem:[%s3 + $0x7f0] sm:$0xff]
    %v1429 = vld [vmem:[%s3 + $0x7f8] sm:$0xff]
    %v1430 = vld [vmem:[%s4] sm:$0xff]
    %v1432 = vlaneseq
    %v1433 = vshrl.u32 %v1432, 7
    %v1434 = vsub.s32 0, %v1433
    %v1435 = vrot.slane %v1430, %v1434
    %v1436 = vlaneseq
    %v1437 = vshrl.u32 %v1436, 7
    %v1438 = vsub.s32 1, %v1437
    %v1439 = vrot.slane %v1430, %v1438
    %v1440 = vlaneseq
    %v1441 = vshrl.u32 %v1440, 7
    %v1442 = vsub.s32 2, %v1441
    %v1443 = vrot.slane %v1430, %v1442
    %v1444 = vlaneseq
    %v1445 = vshrl.u32 %v1444, 7
    %v1446 = vsub.s32 3, %v1445
    %v1447 = vrot.slane %v1430, %v1446
    %v1448 = vlaneseq
    %v1449 = vshrl.u32 %v1448, 7
    %v1450 = vsub.s32 4, %v1449
    %v1451 = vrot.slane %v1430, %v1450
    %v1452 = vlaneseq
    %v1453 = vshrl.u32 %v1452, 7
    %v1454 = vsub.s32 5, %v1453
    %v1455 = vrot.slane %v1430, %v1454
    %v1456 = vlaneseq
    %v1457 = vshrl.u32 %v1456, 7
    %v1458 = vsub.s32 6, %v1457
    %v1459 = vrot.slane %v1430, %v1458
    %v1460 = vlaneseq
    %v1461 = vshrl.u32 %v1460, 7
    %v1462 = vsub.s32 7, %v1461
    %v1463 = vrot.slane %v1430, %v1462
    %1472 = vmatprep.subr.mxu0 %v1295
    %1473 = vmatpush1.msra.mxu0 %v1294
    %1474 = vmatprep.subr.mxu0 %v1287
    %1475 = vmatpush1.msra.mxu0 %v1286
    %1476 = vmatprep.subr.mxu0 %v1279
    %1477 = vmatpush1.msra.mxu0 %v1278
    %1478 = vmatprep.subr.mxu0 %v1271
    %1479 = vmatpush1.msra.mxu0 %v1270
    %1480 = vmatprep.subr.mxu0 %v1263
    %1481 = vmatpush1.msra.mxu0 %v1262
    %1482 = vmatprep.subr.mxu0 %v1255
    %1483 = vmatpush1.msra.mxu0 %v1254
    %1484 = vmatprep.subr.mxu0 %v1247
    %1485 = vmatpush1.msra.mxu0 %v1246
    %1486 = vmatprep.subr.mxu0 %v1239
    %1487 = vmatpush1.msra.mxu0 %v1238
    %1488 = vmatprep.subr.mxu0 %v1231
    %1489 = vmatpush1.msra.mxu0 %v1230
    %1490 = vmatprep.subr.mxu0 %v1223
    %1491 = vmatpush1.msra.mxu0 %v1222
    %1492 = vmatprep.subr.mxu0 %v1215
    %1493 = vmatpush1.msra.mxu0 %v1214
    %1494 = vmatprep.subr.mxu0 %v1207
    %1495 = vmatpush1.msra.mxu0 %v1206
    %1496 = vmatprep.subr.mxu0 %v1199
    %1497 = vmatpush1.msra.mxu0 %v1198
    %1498 = vmatprep.subr.mxu0 %v1191
    %1499 = vmatpush1.msra.mxu0 %v1190
    %1500 = vmatprep.subr.mxu0 %v1183
    %1501 = vmatpush1.msra.mxu0 %v1182
    %1502 = vmatprep.subr.mxu0 %v1175
    %1503 = vmatpush1.msra.mxu0 %v1174
    %1504 = vmatprep.subr.mxu0 %v1423
    %1505 = vmatpush2.msra.mxu0 %v1422
    %1506 = vmatprep.subr.mxu0 %v1415
    %1507 = vmatpush2.msra.mxu0 %v1414
    %1508 = vmatprep.subr.mxu0 %v1407
    %1509 = vmatpush2.msra.mxu0 %v1406
    %1510 = vmatprep.subr.mxu0 %v1399
    %1511 = vmatpush2.msra.mxu0 %v1398
    %1512 = vmatprep.subr.mxu0 %v1391
    %1513 = vmatpush2.msra.mxu0 %v1390
    %1514 = vmatprep.subr.mxu0 %v1383
    %1515 = vmatpush2.msra.mxu0 %v1382
    %1516 = vmatprep.subr.mxu0 %v1375
    %1517 = vmatpush2.msra.mxu0 %v1374
    %1518 = vmatprep.subr.mxu0 %v1367
    %1519 = vmatpush2.msra.mxu0 %v1366
    %1520 = vmatprep.subr.mxu0 %v1359
    %1521 = vmatpush2.msra.mxu0 %v1358
    %1522 = vmatprep.subr.mxu0 %v1351
    %1523 = vmatpush2.msra.mxu0 %v1350
    %1524 = vmatprep.subr.mxu0 %v1343
    %1525 = vmatpush2.msra.mxu0 %v1342
    %1526 = vmatprep.subr.mxu0 %v1335
    %1527 = vmatpush2.msra.mxu0 %v1334
    %1528 = vmatprep.subr.mxu0 %v1327
    %1529 = vmatpush2.msra.mxu0 %v1326
    %1530 = vmatprep.subr.mxu0 %v1319
    %1531 = vmatpush2.msra.mxu0 %v1318
    %1532 = vmatprep.subr.mxu0 %v1311
    %1533 = vmatpush2.msra.mxu0 %v1310
    %1534 = vmatprep.subr.mxu0 %v1303
    %1535 = vmatpush2.msra.mxu0 %v1302
    %1536 = vmatprep.mubr.f32.mxu0 %v1075
    %1537 = vmatmul.mubr.f32.gmra.mxu0 %v1074
    %v1538 = vpop.f32.mrf.mxu0
    %v1539 = vadd.f32 %v1435, %v1538
    %v1540 = vpop.f32.mrf.mxu0
    %v1541 = vadd.f32 %v1439, %v1540
    %1542 = vmatprep.mubr.f32.mxu0 %v1077
    %1543 = vmatmul.mubr.f32.gmra.mxu0 %v1076
    %v1544 = vpop.f32.mrf.mxu0
    %v1545 = vadd.f32 %v1435, %v1544
    %v1546 = vpop.f32.mrf.mxu0
    %v1547 = vadd.f32 %v1439, %v1546
    %1548 = vmatprep.mubr.f32.mxu0 %v1079
    %1549 = vmatmul.mubr.f32.gmra.mxu0 %v1078
    %v1550 = vpop.f32.mrf.mxu0
    %v1551 = vadd.f32 %v1435, %v1550
    %v1552 = vpop.f32.mrf.mxu0
    %v1553 = vadd.f32 %v1439, %v1552
    %1554 = vmatprep.mubr.f32.mxu0 %v1081
    %1555 = vmatmul.mubr.f32.gmra.mxu0 %v1080
    %v1556 = vpop.f32.mrf.mxu0
    %v1557 = vadd.f32 %v1435, %v1556
    %v1558 = vpop.f32.mrf.mxu0
    %v1559 = vadd.f32 %v1439, %v1558
    %1560 = vmatprep.mubr.f32.mxu0 %v1083
    %1561 = vmatmul.mubr.f32.gmra.mxu0 %v1082
    %v1562 = vpop.f32.mrf.mxu0
    %v1563 = vadd.f32 %v1435, %v1562
    %v1564 = vpop.f32.mrf.mxu0
    %v1565 = vadd.f32 %v1439, %v1564
    %1566 = vmatprep.mubr.f32.mxu0 %v1085
    %1567 = vmatmul.mubr.f32.gmra.mxu0 %v1084
    %v1568 = vpop.f32.mrf.mxu0
    %v1569 = vadd.f32 %v1435, %v1568
    %v1570 = vpop.f32.mrf.mxu0
    %v1571 = vadd.f32 %v1439, %v1570
    %1572 = vmatprep.mubr.f32.mxu0 %v1087
    %1573 = vmatmul.mubr.f32.gmra.mxu0 %v1086
    %v1574 = vpop.f32.mrf.mxu0
    %v1575 = vadd.f32 %v1435, %v1574
    %v1576 = vpop.f32.mrf.mxu0
    %v1577 = vadd.f32 %v1439, %v1576
    %1578 = vmatprep.mubr.f32.mxu0 %v1089
    %1579 = vmatmul.mubr.f32.gmra.mxu0 %v1088
    %v1580 = vpop.f32.mrf.mxu0
    %v1581 = vadd.f32 %v1435, %v1580
    %v1582 = vpop.f32.mrf.mxu0
    %v1583 = vadd.f32 %v1439, %v1582
    %1584 = vmatprep.mubr.f32.mxu0 %v1091
    %1585 = vmatmul.mubr.f32.gmra.mxu0 %v1090
    %v1586 = vpop.f32.mrf.mxu0
    %v1587 = vadd.f32 %v1435, %v1586
    %v1588 = vpop.f32.mrf.mxu0
    %v1589 = vadd.f32 %v1439, %v1588
    %1590 = vmatprep.mubr.f32.mxu0 %v1093
    %1591 = vmatmul.mubr.f32.gmra.mxu0 %v1092
    %v1592 = vpop.f32.mrf.mxu0
    %v1593 = vadd.f32 %v1435, %v1592
    %v1594 = vpop.f32.mrf.mxu0
    %v1595 = vadd.f32 %v1439, %v1594
    %1596 = vmatprep.mubr.f32.mxu0 %v1095
    %1597 = vmatmul.mubr.f32.gmra.mxu0 %v1094
    %v1598 = vpop.f32.mrf.mxu0
    %v1599 = vadd.f32 %v1435, %v1598
    %v1600 = vpop.f32.mrf.mxu0
    %v1601 = vadd.f32 %v1439, %v1600
    %1602 = vmatprep.mubr.f32.mxu0 %v1097
    %1603 = vmatmul.mubr.f32.gmra.mxu0 %v1096
    %v1604 = vpop.f32.mrf.mxu0
    %v1605 = vadd.f32 %v1435, %v1604
    %v1606 = vpop.f32.mrf.mxu0
    %v1607 = vadd.f32 %v1439, %v1606
    %1608 = vmatprep.mubr.f32.mxu0 %v1099
    %1609 = vmatmul.mubr.f32.gmra.mxu0 %v1098
    %v1610 = vpop.f32.mrf.mxu0
    %v1611 = vadd.f32 %v1435, %v1610
    %v1612 = vpop.f32.mrf.mxu0
    %v1613 = vadd.f32 %v1439, %v1612
    %1614 = vmatprep.mubr.f32.mxu0 %v1101
    %1615 = vmatmul.mubr.f32.gmra.mxu0 %v1100
    %v1616 = vpop.f32.mrf.mxu0
    %v1617 = vadd.f32 %v1435, %v1616
    %v1618 = vpop.f32.mrf.mxu0
    %v1619 = vadd.f32 %v1439, %v1618
    %1620 = vmatprep.mubr.f32.mxu0 %v1103
    %1621 = vmatmul.mubr.f32.gmra.mxu0 %v1102
    %v1622 = vpop.f32.mrf.mxu0
    %v1623 = vadd.f32 %v1435, %v1622
    %v1624 = vpop.f32.mrf.mxu0
    %v1625 = vadd.f32 %v1439, %v1624
    %1626 = vmatprep.mubr.f32.mxu0 %v1105
    %1627 = vmatmul.mubr.f32.gmra.mxu0 %v1104
    %v1628 = vpop.f32.mrf.mxu0
    %v1629 = vadd.f32 %v1435, %v1628
    %v1630 = vpop.f32.mrf.mxu0
    %v1631 = vadd.f32 %v1439, %v1630
    %1632 = vmatprep.mubr.f32.mxu0 %v1107
    %1633 = vmatmul.mubr.f32.gmra.mxu0 %v1106
    %v1634 = vpop.f32.mrf.mxu0
    %v1635 = vadd.f32 %v1435, %v1634
    %v1636 = vpop.f32.mrf.mxu0
    %v1637 = vadd.f32 %v1439, %v1636
    %1638 = vmatprep.mubr.f32.mxu0 %v1109
    %1639 = vmatmul.mubr.f32.gmra.mxu0 %v1108
    %v1640 = vpop.f32.mrf.mxu0
    %v1641 = vadd.f32 %v1435, %v1640
    %v1642 = vpop.f32.mrf.mxu0
    %v1643 = vadd.f32 %v1439, %v1642
    %1644 = vmatprep.mubr.f32.mxu0 %v1111
    %1645 = vmatmul.mubr.f32.gmra.mxu0 %v1110
    %v1646 = vpop.f32.mrf.mxu0
    %v1647 = vadd.f32 %v1435, %v1646
    %v1648 = vpop.f32.mrf.mxu0
    %v1649 = vadd.f32 %v1439, %v1648
    %1650 = vmatprep.mubr.f32.mxu0 %v1113
    %1651 = vmatmul.mubr.f32.gmra.mxu0 %v1112
    %v1652 = vpop.f32.mrf.mxu0
    %v1653 = vadd.f32 %v1435, %v1652
    %v1654 = vpop.f32.mrf.mxu0
    %v1655 = vadd.f32 %v1439, %v1654
    %1656 = vmatprep.mubr.f32.mxu0 %v1115
    %1657 = vmatmul.mubr.f32.gmra.mxu0 %v1114
    %v1658 = vpop.f32.mrf.mxu0
    %v1659 = vadd.f32 %v1435, %v1658
    %v1660 = vpop.f32.mrf.mxu0
    %v1661 = vadd.f32 %v1439, %v1660
    %1662 = vmatprep.mubr.f32.mxu0 %v1117
    %1663 = vmatmul.mubr.f32.gmra.mxu0 %v1116
    %v1664 = vpop.f32.mrf.mxu0
    %v1665 = vadd.f32 %v1435, %v1664
    %v1666 = vpop.f32.mrf.mxu0
    %v1667 = vadd.f32 %v1439, %v1666
    %1668 = vmatprep.mubr.f32.mxu0 %v1119
    %1669 = vmatmul.mubr.f32.gmra.mxu0 %v1118
    %v1670 = vpop.f32.mrf.mxu0
    %v1671 = vadd.f32 %v1435, %v1670
    %v1672 = vpop.f32.mrf.mxu0
    %v1673 = vadd.f32 %v1439, %v1672
    %1674 = vmatprep.mubr.f32.mxu0 %v1121
    %1675 = vmatmul.mubr.f32.gmra.mxu0 %v1120
    %v1676 = vpop.f32.mrf.mxu0
    %v1677 = vadd.f32 %v1435, %v1676
    %v1678 = vpop.f32.mrf.mxu0
    %v1679 = vadd.f32 %v1439, %v1678
    %1680 = vmatprep.mubr.f32.mxu0 %v1123
    %1681 = vmatmul.mubr.f32.gmra.mxu0 %v1122
    %v1682 = vpop.f32.mrf.mxu0
    %v1683 = vadd.f32 %v1435, %v1682
    %v1684 = vpop.f32.mrf.mxu0
    %v1685 = vadd.f32 %v1439, %v1684
    %1686 = vmatprep.mubr.f32.mxu0 %v1125
    %1687 = vmatmul.mubr.f32.gmra.mxu0 %v1124
    %v1688 = vpop.f32.mrf.mxu0
    %v1689 = vadd.f32 %v1435, %v1688
    %v1690 = vpop.f32.mrf.mxu0
    %v1691 = vadd.f32 %v1439, %v1690
    %1692 = vmatprep.mubr.f32.mxu0 %v1127
    %1693 = vmatmul.mubr.f32.gmra.mxu0 %v1126
    %v1694 = vpop.f32.mrf.mxu0
    %v1695 = vadd.f32 %v1435, %v1694
    %v1696 = vpop.f32.mrf.mxu0
    %v1697 = vadd.f32 %v1439, %v1696
    %1698 = vmatprep.mubr.f32.mxu0 %v1129
    %1699 = vmatmul.mubr.f32.gmra.mxu0 %v1128
    %v1700 = vpop.f32.mrf.mxu0
    %v1701 = vadd.f32 %v1435, %v1700
    %v1702 = vpop.f32.mrf.mxu0
    %v1703 = vadd.f32 %v1439, %v1702
    %1704 = vmatprep.mubr.f32.mxu0 %v1131
    %1705 = vmatmul.mubr.f32.gmra.mxu0 %v1130
    %v1706 = vpop.f32.mrf.mxu0
    %v1707 = vadd.f32 %v1435, %v1706
    %v1708 = vpop.f32.mrf.mxu0
    %v1709 = vadd.f32 %v1439, %v1708
    %1710 = vmatprep.mubr.f32.mxu0 %v1133
    %1711 = vmatmul.mubr.f32.gmra.mxu0 %v1132
    %v1712 = vpop.f32.mrf.mxu0
    %v1713 = vadd.f32 %v1435, %v1712
    %v1714 = vpop.f32.mrf.mxu0
    %v1715 = vadd.f32 %v1439, %v1714
    %1716 = vmatprep.mubr.f32.mxu0 %v1135
    %1717 = vmatmul.mubr.f32.gmra.mxu0 %v1134
    %v1718 = vpop.f32.mrf.mxu0
    %v1719 = vadd.f32 %v1435, %v1718
    %v1720 = vpop.f32.mrf.mxu0
    %v1721 = vadd.f32 %v1439, %v1720
    %1722 = vmatprep.mubr.f32.mxu0 %v1137
    %1723 = vmatmul.mubr.f32.gmra.mxu0 %v1136
    %v1724 = vpop.f32.mrf.mxu0
    %v1725 = vadd.f32 %v1435, %v1724
    %v1726 = vpop.f32.mrf.mxu0
    %v1727 = vadd.f32 %v1439, %v1726
    %1728 = vmatprep.mubr.f32.mxu0 %v1139
    %1729 = vmatmul.mubr.f32.gmra.mxu0 %v1138
    %v1730 = vpop.f32.mrf.mxu0
    %v1731 = vadd.f32 %v1435, %v1730
    %v1732 = vpop.f32.mrf.mxu0
    %v1733 = vadd.f32 %v1439, %v1732
    %1734 = vmatprep.mubr.f32.mxu0 %v1141
    %1735 = vmatmul.mubr.f32.gmra.mxu0 %v1140
    %v1736 = vpop.f32.mrf.mxu0
    %v1737 = vadd.f32 %v1435, %v1736
    %v1738 = vpop.f32.mrf.mxu0
    %v1739 = vadd.f32 %v1439, %v1738
    %1740 = vmatprep.mubr.f32.mxu0 %v1143
    %1741 = vmatmul.mubr.f32.gmra.mxu0 %v1142
    %v1742 = vpop.f32.mrf.mxu0
    %v1743 = vadd.f32 %v1435, %v1742
    %v1744 = vpop.f32.mrf.mxu0
    %v1745 = vadd.f32 %v1439, %v1744
    %1746 = vmatprep.mubr.f32.mxu0 %v1145
    %1747 = vmatmul.mubr.f32.gmra.mxu0 %v1144
    %v1748 = vpop.f32.mrf.mxu0
    %v1749 = vadd.f32 %v1435, %v1748
    %v1750 = vpop.f32.mrf.mxu0
    %v1751 = vadd.f32 %v1439, %v1750
    %1752 = vmatprep.mubr.f32.mxu0 %v1147
    %1753 = vmatmul.mubr.f32.gmra.mxu0 %v1146
    %v1754 = vpop.f32.mrf.mxu0
    %v1755 = vadd.f32 %v1435, %v1754
    %v1756 = vpop.f32.mrf.mxu0
    %v1757 = vadd.f32 %v1439, %v1756
    %1758 = vmatprep.mubr.f32.mxu0 %v1149
    %1759 = vmatmul.mubr.f32.gmra.mxu0 %v1148
    %v1760 = vpop.f32.mrf.mxu0
    %v1761 = vadd.f32 %v1435, %v1760
    %v1762 = vpop.f32.mrf.mxu0
    %v1763 = vadd.f32 %v1439, %v1762
    %1764 = vmatprep.mubr.f32.mxu0 %v1151
    %1765 = vmatmul.mubr.f32.gmra.mxu0 %v1150
    %v1766 = vpop.f32.mrf.mxu0
    %v1767 = vadd.f32 %v1435, %v1766
    %v1768 = vpop.f32.mrf.mxu0
    %v1769 = vadd.f32 %v1439, %v1768
    %1770 = vmatprep.mubr.f32.mxu0 %v1153
    %1771 = vmatmul.mubr.f32.gmra.mxu0 %v1152
    %v1772 = vpop.f32.mrf.mxu0
    %v1773 = vadd.f32 %v1435, %v1772
    %v1774 = vpop.f32.mrf.mxu0
    %v1775 = vadd.f32 %v1439, %v1774
    %1776 = vmatprep.mubr.f32.mxu0 %v1155
    %1777 = vmatmul.mubr.f32.gmra.mxu0 %v1154
    %v1778 = vpop.f32.mrf.mxu0
    %v1779 = vadd.f32 %v1435, %v1778
    %v1780 = vpop.f32.mrf.mxu0
    %v1781 = vadd.f32 %v1439, %v1780
    %1782 = vmatprep.mubr.f32.mxu0 %v1157
    %1783 = vmatmul.mubr.f32.gmra.mxu0 %v1156
    %v1784 = vpop.f32.mrf.mxu0
    %v1785 = vadd.f32 %v1435, %v1784
    %v1786 = vpop.f32.mrf.mxu0
    %v1787 = vadd.f32 %v1439, %v1786
    %1788 = vmatprep.mubr.f32.mxu0 %v1159
    %1789 = vmatmul.mubr.f32.gmra.mxu0 %v1158
    %v1790 = vpop.f32.mrf.mxu0
    %v1791 = vadd.f32 %v1435, %v1790
    %v1792 = vpop.f32.mrf.mxu0
    %v1793 = vadd.f32 %v1439, %v1792
    %1794 = vmatprep.mubr.f32.mxu0 %v1161
    %1795 = vmatmul.mubr.f32.gmra.mxu0 %v1160
    %v1796 = vpop.f32.mrf.mxu0
    %v1797 = vadd.f32 %v1435, %v1796
    %v1798 = vpop.f32.mrf.mxu0
    %v1799 = vadd.f32 %v1439, %v1798
    %1800 = vmatprep.mubr.f32.mxu0 %v1163
    %1801 = vmatmul.mubr.f32.gmra.mxu0 %v1162
    %v1802 = vpop.f32.mrf.mxu0
    %v1803 = vadd.f32 %v1435, %v1802
    %v1804 = vpop.f32.mrf.mxu0
    %v1805 = vadd.f32 %v1439, %v1804
    %1806 = vmatprep.mubr.f32.mxu0 %v1165
    %1807 = vmatmul.mubr.f32.gmra.mxu0 %v1164
    %v1808 = vpop.f32.mrf.mxu0
    %v1809 = vadd.f32 %v1435, %v1808
    %v1810 = vpop.f32.mrf.mxu0
    %v1811 = vadd.f32 %v1439, %v1810
    %1812 = vmatprep.mubr.f32.mxu0 %v1167
    %1813 = vmatmul.mubr.f32.gmra.mxu0 %v1166
    %v1814 = vpop.f32.mrf.mxu0
    %v1815 = vadd.f32 %v1435, %v1814
    %v1816 = vpop.f32.mrf.mxu0
    %v1817 = vadd.f32 %v1439, %v1816
    %1818 = vmatprep.mubr.f32.mxu0 %v1169
    %1819 = vmatmul.mubr.f32.gmra.mxu0 %v1168
    %v1820 = vpop.f32.mrf.mxu0
    %v1821 = vadd.f32 %v1435, %v1820
    %v1822 = vpop.f32.mrf.mxu0
    %v1823 = vadd.f32 %v1439, %v1822
    %1824 = vmatprep.mubr.f32.mxu0 %v1171
    %1825 = vmatmul.mubr.f32.gmra.mxu0 %v1170
    %v1826 = vpop.f32.mrf.mxu0
    %v1827 = vadd.f32 %v1435, %v1826
    %v1828 = vpop.f32.mrf.mxu0
    %v1829 = vadd.f32 %v1439, %v1828
    %1830 = vmatprep.mubr.f32.mxu0 %v1173
    %1831 = vmatmul.mubr.f32.gmra.mxu0 %v1172
    %v1832 = vpop.f32.mrf.mxu0
    %v1833 = vadd.f32 %v1435, %v1832
    %v1834 = vpop.f32.mrf.mxu0
    %v1835 = vadd.f32 %v1439, %v1834
    %1836 = vdwg.mxu0
    %1837 = vmatprep.subr.mxu0 %v1297
    %1838 = vmatpush1.msra.mxu0 %v1296
    %1839 = vmatprep.subr.mxu0 %v1289
    %1840 = vmatpush1.msra.mxu0 %v1288
    %1841 = vmatprep.subr.mxu0 %v1281
    %1842 = vmatpush1.msra.mxu0 %v1280
    %1843 = vmatprep.subr.mxu0 %v1273
    %1844 = vmatpush1.msra.mxu0 %v1272
    %1845 = vmatprep.subr.mxu0 %v1265
    %1846 = vmatpush1.msra.mxu0 %v1264
    %1847 = vmatprep.subr.mxu0 %v1257
    %1848 = vmatpush1.msra.mxu0 %v1256
    %1849 = vmatprep.subr.mxu0 %v1249
    %1850 = vmatpush1.msra.mxu0 %v1248
    %1851 = vmatprep.subr.mxu0 %v1241
    %1852 = vmatpush1.msra.mxu0 %v1240
    %1853 = vmatprep.subr.mxu0 %v1233
    %1854 = vmatpush1.msra.mxu0 %v1232
    %1855 = vmatprep.subr.mxu0 %v1225
    %1856 = vmatpush1.msra.mxu0 %v1224
    %1857 = vmatprep.subr.mxu0 %v1217
    %1858 = vmatpush1.msra.mxu0 %v1216
    %1859 = vmatprep.subr.mxu0 %v1209
    %1860 = vmatpush1.msra.mxu0 %v1208
    %1861 = vmatprep.subr.mxu0 %v1201
    %1862 = vmatpush1.msra.mxu0 %v1200
    %1863 = vmatprep.subr.mxu0 %v1193
    %1864 = vmatpush1.msra.mxu0 %v1192
    %1865 = vmatprep.subr.mxu0 %v1185
    %1866 = vmatpush1.msra.mxu0 %v1184
    %1867 = vmatprep.subr.mxu0 %v1177
    %1868 = vmatpush1.msra.mxu0 %v1176
    %1869 = vmatprep.subr.mxu0 %v1425
    %1870 = vmatpush2.msra.mxu0 %v1424
    %1871 = vmatprep.subr.mxu0 %v1417
    %1872 = vmatpush2.msra.mxu0 %v1416
    %1873 = vmatprep.subr.mxu0 %v1409
    %1874 = vmatpush2.msra.mxu0 %v1408
    %1875 = vmatprep.subr.mxu0 %v1401
    %1876 = vmatpush2.msra.mxu0 %v1400
    %1877 = vmatprep.subr.mxu0 %v1393
    %1878 = vmatpush2.msra.mxu0 %v1392
    %1879 = vmatprep.subr.mxu0 %v1385
    %1880 = vmatpush2.msra.mxu0 %v1384
    %1881 = vmatprep.subr.mxu0 %v1377
    %1882 = vmatpush2.msra.mxu0 %v1376
    %1883 = vmatprep.subr.mxu0 %v1369
    %1884 = vmatpush2.msra.mxu0 %v1368
    %1885 = vmatprep.subr.mxu0 %v1361
    %1886 = vmatpush2.msra.mxu0 %v1360
    %1887 = vmatprep.subr.mxu0 %v1353
    %1888 = vmatpush2.msra.mxu0 %v1352
    %1889 = vmatprep.subr.mxu0 %v1345
    %1890 = vmatpush2.msra.mxu0 %v1344
    %1891 = vmatprep.subr.mxu0 %v1337
    %1892 = vmatpush2.msra.mxu0 %v1336
    %1893 = vmatprep.subr.mxu0 %v1329
    %1894 = vmatpush2.msra.mxu0 %v1328
    %1895 = vmatprep.subr.mxu0 %v1321
    %1896 = vmatpush2.msra.mxu0 %v1320
    %1897 = vmatprep.subr.mxu0 %v1313
    %1898 = vmatpush2.msra.mxu0 %v1312
    %1899 = vmatprep.subr.mxu0 %v1305
    %1900 = vmatpush2.msra.mxu0 %v1304
    %1901 = vmatprep.mubr.f32.mxu0 %v1075
    %1902 = vmatmul.mubr.f32.gmra.mxu0 %v1074
    %v1903 = vpop.f32.mrf.mxu0
    %v1904 = vadd.f32 %v1443, %v1903
    %v1905 = vpop.f32.mrf.mxu0
    %v1906 = vadd.f32 %v1447, %v1905
    %1907 = vmatprep.mubr.f32.mxu0 %v1077
    %1908 = vmatmul.mubr.f32.gmra.mxu0 %v1076
    %v1909 = vpop.f32.mrf.mxu0
    %v1910 = vadd.f32 %v1443, %v1909
    %v1911 = vpop.f32.mrf.mxu0
    %v1912 = vadd.f32 %v1447, %v1911
    %1913 = vmatprep.mubr.f32.mxu0 %v1079
    %1914 = vmatmul.mubr.f32.gmra.mxu0 %v1078
    %v1915 = vpop.f32.mrf.mxu0
    %v1916 = vadd.f32 %v1443, %v1915
    %v1917 = vpop.f32.mrf.mxu0
    %v1918 = vadd.f32 %v1447, %v1917
    %1919 = vmatprep.mubr.f32.mxu0 %v1081
    %1920 = vmatmul.mubr.f32.gmra.mxu0 %v1080
    %v1921 = vpop.f32.mrf.mxu0
    %v1922 = vadd.f32 %v1443, %v1921
    %v1923 = vpop.f32.mrf.mxu0
    %v1924 = vadd.f32 %v1447, %v1923
    %1925 = vmatprep.mubr.f32.mxu0 %v1083
    %1926 = vmatmul.mubr.f32.gmra.mxu0 %v1082
    %v1927 = vpop.f32.mrf.mxu0
    %v1928 = vadd.f32 %v1443, %v1927
    %v1929 = vpop.f32.mrf.mxu0
    %v1930 = vadd.f32 %v1447, %v1929
    %1931 = vmatprep.mubr.f32.mxu0 %v1085
    %1932 = vmatmul.mubr.f32.gmra.mxu0 %v1084
    %v1933 = vpop.f32.mrf.mxu0
    %v1934 = vadd.f32 %v1443, %v1933
    %v1935 = vpop.f32.mrf.mxu0
    %v1936 = vadd.f32 %v1447, %v1935
    %1937 = vmatprep.mubr.f32.mxu0 %v1087
    %1938 = vmatmul.mubr.f32.gmra.mxu0 %v1086
    %v1939 = vpop.f32.mrf.mxu0
    %v1940 = vadd.f32 %v1443, %v1939
    %v1941 = vpop.f32.mrf.mxu0
    %v1942 = vadd.f32 %v1447, %v1941
    %1943 = vmatprep.mubr.f32.mxu0 %v1089
    %1944 = vmatmul.mubr.f32.gmra.mxu0 %v1088
    %v1945 = vpop.f32.mrf.mxu0
    %v1946 = vadd.f32 %v1443, %v1945
    %v1947 = vpop.f32.mrf.mxu0
    %v1948 = vadd.f32 %v1447, %v1947
    %1949 = vmatprep.mubr.f32.mxu0 %v1091
    %1950 = vmatmul.mubr.f32.gmra.mxu0 %v1090
    %v1951 = vpop.f32.mrf.mxu0
    %v1952 = vadd.f32 %v1443, %v1951
    %v1953 = vpop.f32.mrf.mxu0
    %v1954 = vadd.f32 %v1447, %v1953
    %1955 = vmatprep.mubr.f32.mxu0 %v1093
    %1956 = vmatmul.mubr.f32.gmra.mxu0 %v1092
    %v1957 = vpop.f32.mrf.mxu0
    %v1958 = vadd.f32 %v1443, %v1957
    %v1959 = vpop.f32.mrf.mxu0
    %v1960 = vadd.f32 %v1447, %v1959
    %1961 = vmatprep.mubr.f32.mxu0 %v1095
    %1962 = vmatmul.mubr.f32.gmra.mxu0 %v1094
    %v1963 = vpop.f32.mrf.mxu0
    %v1964 = vadd.f32 %v1443, %v1963
    %v1965 = vpop.f32.mrf.mxu0
    %v1966 = vadd.f32 %v1447, %v1965
    %1967 = vmatprep.mubr.f32.mxu0 %v1097
    %1968 = vmatmul.mubr.f32.gmra.mxu0 %v1096
    %v1969 = vpop.f32.mrf.mxu0
    %v1970 = vadd.f32 %v1443, %v1969
    %v1971 = vpop.f32.mrf.mxu0
    %v1972 = vadd.f32 %v1447, %v1971
    %1973 = vmatprep.mubr.f32.mxu0 %v1099
    %1974 = vmatmul.mubr.f32.gmra.mxu0 %v1098
    %v1975 = vpop.f32.mrf.mxu0
    %v1976 = vadd.f32 %v1443, %v1975
    %v1977 = vpop.f32.mrf.mxu0
    %v1978 = vadd.f32 %v1447, %v1977
    %1979 = vmatprep.mubr.f32.mxu0 %v1101
    %1980 = vmatmul.mubr.f32.gmra.mxu0 %v1100
    %v1981 = vpop.f32.mrf.mxu0
    %v1982 = vadd.f32 %v1443, %v1981
    %v1983 = vpop.f32.mrf.mxu0
    %v1984 = vadd.f32 %v1447, %v1983
    %1985 = vmatprep.mubr.f32.mxu0 %v1103
    %1986 = vmatmul.mubr.f32.gmra.mxu0 %v1102
    %v1987 = vpop.f32.mrf.mxu0
    %v1988 = vadd.f32 %v1443, %v1987
    %v1989 = vpop.f32.mrf.mxu0
    %v1990 = vadd.f32 %v1447, %v1989
    %1991 = vmatprep.mubr.f32.mxu0 %v1105
    %1992 = vmatmul.mubr.f32.gmra.mxu0 %v1104
    %v1993 = vpop.f32.mrf.mxu0
    %v1994 = vadd.f32 %v1443, %v1993
    %v1995 = vpop.f32.mrf.mxu0
    %v1996 = vadd.f32 %v1447, %v1995
    %1997 = vmatprep.mubr.f32.mxu0 %v1107
    %1998 = vmatmul.mubr.f32.gmra.mxu0 %v1106
    %v1999 = vpop.f32.mrf.mxu0
    %v2000 = vadd.f32 %v1443, %v1999
    %v2001 = vpop.f32.mrf.mxu0
    %v2002 = vadd.f32 %v1447, %v2001
    %2003 = vmatprep.mubr.f32.mxu0 %v1109
    %2004 = vmatmul.mubr.f32.gmra.mxu0 %v1108
    %v2005 = vpop.f32.mrf.mxu0
    %v2006 = vadd.f32 %v1443, %v2005
    %v2007 = vpop.f32.mrf.mxu0
    %v2008 = vadd.f32 %v1447, %v2007
    %2009 = vmatprep.mubr.f32.mxu0 %v1111
    %2010 = vmatmul.mubr.f32.gmra.mxu0 %v1110
    %v2011 = vpop.f32.mrf.mxu0
    %v2012 = vadd.f32 %v1443, %v2011
    %v2013 = vpop.f32.mrf.mxu0
    %v2014 = vadd.f32 %v1447, %v2013
    %2015 = vmatprep.mubr.f32.mxu0 %v1113
    %2016 = vmatmul.mubr.f32.gmra.mxu0 %v1112
    %v2017 = vpop.f32.mrf.mxu0
    %v2018 = vadd.f32 %v1443, %v2017
    %v2019 = vpop.f32.mrf.mxu0
    %v2020 = vadd.f32 %v1447, %v2019
    %2021 = vmatprep.mubr.f32.mxu0 %v1115
    %2022 = vmatmul.mubr.f32.gmra.mxu0 %v1114
    %v2023 = vpop.f32.mrf.mxu0
    %v2024 = vadd.f32 %v1443, %v2023
    %v2025 = vpop.f32.mrf.mxu0
    %v2026 = vadd.f32 %v1447, %v2025
    %2027 = vmatprep.mubr.f32.mxu0 %v1117
    %2028 = vmatmul.mubr.f32.gmra.mxu0 %v1116
    %v2029 = vpop.f32.mrf.mxu0
    %v2030 = vadd.f32 %v1443, %v2029
    %v2031 = vpop.f32.mrf.mxu0
    %v2032 = vadd.f32 %v1447, %v2031
    %2033 = vmatprep.mubr.f32.mxu0 %v1119
    %2034 = vmatmul.mubr.f32.gmra.mxu0 %v1118
    %v2035 = vpop.f32.mrf.mxu0
    %v2036 = vadd.f32 %v1443, %v2035
    %v2037 = vpop.f32.mrf.mxu0
    %v2038 = vadd.f32 %v1447, %v2037
    %2039 = vmatprep.mubr.f32.mxu0 %v1121
    %2040 = vmatmul.mubr.f32.gmra.mxu0 %v1120
    %v2041 = vpop.f32.mrf.mxu0
    %v2042 = vadd.f32 %v1443, %v2041
    %v2043 = vpop.f32.mrf.mxu0
    %v2044 = vadd.f32 %v1447, %v2043
    %2045 = vmatprep.mubr.f32.mxu0 %v1123
    %2046 = vmatmul.mubr.f32.gmra.mxu0 %v1122
    %v2047 = vpop.f32.mrf.mxu0
    %v2048 = vadd.f32 %v1443, %v2047
    %v2049 = vpop.f32.mrf.mxu0
    %v2050 = vadd.f32 %v1447, %v2049
    %2051 = vmatprep.mubr.f32.mxu0 %v1125
    %2052 = vmatmul.mubr.f32.gmra.mxu0 %v1124
    %v2053 = vpop.f32.mrf.mxu0
    %v2054 = vadd.f32 %v1443, %v2053
    %v2055 = vpop.f32.mrf.mxu0
    %v2056 = vadd.f32 %v1447, %v2055
    %2057 = vmatprep.mubr.f32.mxu0 %v1127
    %2058 = vmatmul.mubr.f32.gmra.mxu0 %v1126
    %v2059 = vpop.f32.mrf.mxu0
    %v2060 = vadd.f32 %v1443, %v2059
    %v2061 = vpop.f32.mrf.mxu0
    %v2062 = vadd.f32 %v1447, %v2061
    %2063 = vmatprep.mubr.f32.mxu0 %v1129
    %2064 = vmatmul.mubr.f32.gmra.mxu0 %v1128
    %v2065 = vpop.f32.mrf.mxu0
    %v2066 = vadd.f32 %v1443, %v2065
    %v2067 = vpop.f32.mrf.mxu0
    %v2068 = vadd.f32 %v1447, %v2067
    %2069 = vmatprep.mubr.f32.mxu0 %v1131
    %2070 = vmatmul.mubr.f32.gmra.mxu0 %v1130
    %v2071 = vpop.f32.mrf.mxu0
    %v2072 = vadd.f32 %v1443, %v2071
    %v2073 = vpop.f32.mrf.mxu0
    %v2074 = vadd.f32 %v1447, %v2073
    %2075 = vmatprep.mubr.f32.mxu0 %v1133
    %2076 = vmatmul.mubr.f32.gmra.mxu0 %v1132
    %v2077 = vpop.f32.mrf.mxu0
    %v2078 = vadd.f32 %v1443, %v2077
    %v2079 = vpop.f32.mrf.mxu0
    %v2080 = vadd.f32 %v1447, %v2079
    %2081 = vmatprep.mubr.f32.mxu0 %v1135
    %2082 = vmatmul.mubr.f32.gmra.mxu0 %v1134
    %v2083 = vpop.f32.mrf.mxu0
    %v2084 = vadd.f32 %v1443, %v2083
    %v2085 = vpop.f32.mrf.mxu0
    %v2086 = vadd.f32 %v1447, %v2085
    %2087 = vmatprep.mubr.f32.mxu0 %v1137
    %2088 = vmatmul.mubr.f32.gmra.mxu0 %v1136
    %v2089 = vpop.f32.mrf.mxu0
    %v2090 = vadd.f32 %v1443, %v2089
    %v2091 = vpop.f32.mrf.mxu0
    %v2092 = vadd.f32 %v1447, %v2091
    %2093 = vmatprep.mubr.f32.mxu0 %v1139
    %2094 = vmatmul.mubr.f32.gmra.mxu0 %v1138
    %v2095 = vpop.f32.mrf.mxu0
    %v2096 = vadd.f32 %v1443, %v2095
    %v2097 = vpop.f32.mrf.mxu0
    %v2098 = vadd.f32 %v1447, %v2097
    %2099 = vmatprep.mubr.f32.mxu0 %v1141
    %2100 = vmatmul.mubr.f32.gmra.mxu0 %v1140
    %v2101 = vpop.f32.mrf.mxu0
    %v2102 = vadd.f32 %v1443, %v2101
    %v2103 = vpop.f32.mrf.mxu0
    %v2104 = vadd.f32 %v1447, %v2103
    %2105 = vmatprep.mubr.f32.mxu0 %v1143
    %2106 = vmatmul.mubr.f32.gmra.mxu0 %v1142
    %v2107 = vpop.f32.mrf.mxu0
    %v2108 = vadd.f32 %v1443, %v2107
    %v2109 = vpop.f32.mrf.mxu0
    %v2110 = vadd.f32 %v1447, %v2109
    %2111 = vmatprep.mubr.f32.mxu0 %v1145
    %2112 = vmatmul.mubr.f32.gmra.mxu0 %v1144
    %v2113 = vpop.f32.mrf.mxu0
    %v2114 = vadd.f32 %v1443, %v2113
    %v2115 = vpop.f32.mrf.mxu0
    %v2116 = vadd.f32 %v1447, %v2115
    %2117 = vmatprep.mubr.f32.mxu0 %v1147
    %2118 = vmatmul.mubr.f32.gmra.mxu0 %v1146
    %v2119 = vpop.f32.mrf.mxu0
    %v2120 = vadd.f32 %v1443, %v2119
    %v2121 = vpop.f32.mrf.mxu0
    %v2122 = vadd.f32 %v1447, %v2121
    %2123 = vmatprep.mubr.f32.mxu0 %v1149
    %2124 = vmatmul.mubr.f32.gmra.mxu0 %v1148
    %v2125 = vpop.f32.mrf.mxu0
    %v2126 = vadd.f32 %v1443, %v2125
    %v2127 = vpop.f32.mrf.mxu0
    %v2128 = vadd.f32 %v1447, %v2127
    %2129 = vmatprep.mubr.f32.mxu0 %v1151
    %2130 = vmatmul.mubr.f32.gmra.mxu0 %v1150
    %v2131 = vpop.f32.mrf.mxu0
    %v2132 = vadd.f32 %v1443, %v2131
    %v2133 = vpop.f32.mrf.mxu0
    %v2134 = vadd.f32 %v1447, %v2133
    %2135 = vmatprep.mubr.f32.mxu0 %v1153
    %2136 = vmatmul.mubr.f32.gmra.mxu0 %v1152
    %v2137 = vpop.f32.mrf.mxu0
    %v2138 = vadd.f32 %v1443, %v2137
    %v2139 = vpop.f32.mrf.mxu0
    %v2140 = vadd.f32 %v1447, %v2139
    %2141 = vmatprep.mubr.f32.mxu0 %v1155
    %2142 = vmatmul.mubr.f32.gmra.mxu0 %v1154
    %v2143 = vpop.f32.mrf.mxu0
    %v2144 = vadd.f32 %v1443, %v2143
    %v2145 = vpop.f32.mrf.mxu0
    %v2146 = vadd.f32 %v1447, %v2145
    %2147 = vmatprep.mubr.f32.mxu0 %v1157
    %2148 = vmatmul.mubr.f32.gmra.mxu0 %v1156
    %v2149 = vpop.f32.mrf.mxu0
    %v2150 = vadd.f32 %v1443, %v2149
    %v2151 = vpop.f32.mrf.mxu0
    %v2152 = vadd.f32 %v1447, %v2151
    %2153 = vmatprep.mubr.f32.mxu0 %v1159
    %2154 = vmatmul.mubr.f32.gmra.mxu0 %v1158
    %v2155 = vpop.f32.mrf.mxu0
    %v2156 = vadd.f32 %v1443, %v2155
    %v2157 = vpop.f32.mrf.mxu0
    %v2158 = vadd.f32 %v1447, %v2157
    %2159 = vmatprep.mubr.f32.mxu0 %v1161
    %2160 = vmatmul.mubr.f32.gmra.mxu0 %v1160
    %v2161 = vpop.f32.mrf.mxu0
    %v2162 = vadd.f32 %v1443, %v2161
    %v2163 = vpop.f32.mrf.mxu0
    %v2164 = vadd.f32 %v1447, %v2163
    %2165 = vmatprep.mubr.f32.mxu0 %v1163
    %2166 = vmatmul.mubr.f32.gmra.mxu0 %v1162
    %v2167 = vpop.f32.mrf.mxu0
    %v2168 = vadd.f32 %v1443, %v2167
    %v2169 = vpop.f32.mrf.mxu0
    %v2170 = vadd.f32 %v1447, %v2169
    %2171 = vmatprep.mubr.f32.mxu0 %v1165
    %2172 = vmatmul.mubr.f32.gmra.mxu0 %v1164
    %v2173 = vpop.f32.mrf.mxu0
    %v2174 = vadd.f32 %v1443, %v2173
    %v2175 = vpop.f32.mrf.mxu0
    %v2176 = vadd.f32 %v1447, %v2175
    %2177 = vmatprep.mubr.f32.mxu0 %v1167
    %2178 = vmatmul.mubr.f32.gmra.mxu0 %v1166
    %v2179 = vpop.f32.mrf.mxu0
    %v2180 = vadd.f32 %v1443, %v2179
    %v2181 = vpop.f32.mrf.mxu0
    %v2182 = vadd.f32 %v1447, %v2181
    %2183 = vmatprep.mubr.f32.mxu0 %v1169
    %2184 = vmatmul.mubr.f32.gmra.mxu0 %v1168
    %v2185 = vpop.f32.mrf.mxu0
    %v2186 = vadd.f32 %v1443, %v2185
    %v2187 = vpop.f32.mrf.mxu0
    %v2188 = vadd.f32 %v1447, %v2187
    %2189 = vmatprep.mubr.f32.mxu0 %v1171
    %2190 = vmatmul.mubr.f32.gmra.mxu0 %v1170
    %v2191 = vpop.f32.mrf.mxu0
    %v2192 = vadd.f32 %v1443, %v2191
    %v2193 = vpop.f32.mrf.mxu0
    %v2194 = vadd.f32 %v1447, %v2193
    %2195 = vmatprep.mubr.f32.mxu0 %v1173
    %2196 = vmatmul.mubr.f32.gmra.mxu0 %v1172
    %v2197 = vpop.f32.mrf.mxu0
    %v2198 = vadd.f32 %v1443, %v2197
    %v2199 = vpop.f32.mrf.mxu0
    %v2200 = vadd.f32 %v1447, %v2199
    %2201 = vdwg.mxu0
    %2202 = vmatprep.subr.mxu0 %v1299
    %2203 = vmatpush1.msra.mxu0 %v1298
    %2204 = vmatprep.subr.mxu0 %v1291
    %2205 = vmatpush1.msra.mxu0 %v1290
    %2206 = vmatprep.subr.mxu0 %v1283
    %2207 = vmatpush1.msra.mxu0 %v1282
    %2208 = vmatprep.subr.mxu0 %v1275
    %2209 = vmatpush1.msra.mxu0 %v1274
    %2210 = vmatprep.subr.mxu0 %v1267
    %2211 = vmatpush1.msra.mxu0 %v1266
    %2212 = vmatprep.subr.mxu0 %v1259
    %2213 = vmatpush1.msra.mxu0 %v1258
    %2214 = vmatprep.subr.mxu0 %v1251
    %2215 = vmatpush1.msra.mxu0 %v1250
    %2216 = vmatprep.subr.mxu0 %v1243
    %2217 = vmatpush1.msra.mxu0 %v1242
    %2218 = vmatprep.subr.mxu0 %v1235
    %2219 = vmatpush1.msra.mxu0 %v1234
    %2220 = vmatprep.subr.mxu0 %v1227
    %2221 = vmatpush1.msra.mxu0 %v1226
    %2222 = vmatprep.subr.mxu0 %v1219
    %2223 = vmatpush1.msra.mxu0 %v1218
    %2224 = vmatprep.subr.mxu0 %v1211
    %2225 = vmatpush1.msra.mxu0 %v1210
    %2226 = vmatprep.subr.mxu0 %v1203
    %2227 = vmatpush1.msra.mxu0 %v1202
    %2228 = vmatprep.subr.mxu0 %v1195
    %2229 = vmatpush1.msra.mxu0 %v1194
    %2230 = vmatprep.subr.mxu0 %v1187
    %2231 = vmatpush1.msra.mxu0 %v1186
    %2232 = vmatprep.subr.mxu0 %v1179
    %2233 = vmatpush1.msra.mxu0 %v1178
    %2234 = vmatprep.subr.mxu0 %v1427
    %2235 = vmatpush2.msra.mxu0 %v1426
    %2236 = vmatprep.subr.mxu0 %v1419
    %2237 = vmatpush2.msra.mxu0 %v1418
    %2238 = vmatprep.subr.mxu0 %v1411
    %2239 = vmatpush2.msra.mxu0 %v1410
    %2240 = vmatprep.subr.mxu0 %v1403
    %2241 = vmatpush2.msra.mxu0 %v1402
    %2242 = vmatprep.subr.mxu0 %v1395
    %2243 = vmatpush2.msra.mxu0 %v1394
    %2244 = vmatprep.subr.mxu0 %v1387
    %2245 = vmatpush2.msra.mxu0 %v1386
    %2246 = vmatprep.subr.mxu0 %v1379
    %2247 = vmatpush2.msra.mxu0 %v1378
    %2248 = vmatprep.subr.mxu0 %v1371
    %2249 = vmatpush2.msra.mxu0 %v1370
    %2250 = vmatprep.subr.mxu0 %v1363
    %2251 = vmatpush2.msra.mxu0 %v1362
    %2252 = vmatprep.subr.mxu0 %v1355
    %2253 = vmatpush2.msra.mxu0 %v1354
    %2254 = vmatprep.subr.mxu0 %v1347
    %2255 = vmatpush2.msra.mxu0 %v1346
    %2256 = vmatprep.subr.mxu0 %v1339
    %2257 = vmatpush2.msra.mxu0 %v1338
    %2258 = vmatprep.subr.mxu0 %v1331
    %2259 = vmatpush2.msra.mxu0 %v1330
    %2260 = vmatprep.subr.mxu0 %v1323
    %2261 = vmatpush2.msra.mxu0 %v1322
    %2262 = vmatprep.subr.mxu0 %v1315
    %2263 = vmatpush2.msra.mxu0 %v1314
    %2264 = vmatprep.subr.mxu0 %v1307
    %2265 = vmatpush2.msra.mxu0 %v1306
    %2266 = vmatprep.mubr.f32.mxu0 %v1075
    %2267 = vmatmul.mubr.f32.gmra.mxu0 %v1074
    %v2268 = vpop.f32.mrf.mxu0
    %v2269 = vadd.f32 %v1451, %v2268
    %v2270 = vpop.f32.mrf.mxu0
    %v2271 = vadd.f32 %v1455, %v2270
    %2272 = vmatprep.mubr.f32.mxu0 %v1077
    %2273 = vmatmul.mubr.f32.gmra.mxu0 %v1076
    %v2274 = vpop.f32.mrf.mxu0
    %v2275 = vadd.f32 %v1451, %v2274
    %v2276 = vpop.f32.mrf.mxu0
    %v2277 = vadd.f32 %v1455, %v2276
    %2278 = vmatprep.mubr.f32.mxu0 %v1079
    %2279 = vmatmul.mubr.f32.gmra.mxu0 %v1078
    %v2280 = vpop.f32.mrf.mxu0
    %v2281 = vadd.f32 %v1451, %v2280
    %v2282 = vpop.f32.mrf.mxu0
    %v2283 = vadd.f32 %v1455, %v2282
    %2284 = vmatprep.mubr.f32.mxu0 %v1081
    %2285 = vmatmul.mubr.f32.gmra.mxu0 %v1080
    %v2286 = vpop.f32.mrf.mxu0
    %v2287 = vadd.f32 %v1451, %v2286
    %v2288 = vpop.f32.mrf.mxu0
    %v2289 = vadd.f32 %v1455, %v2288
    %2290 = vmatprep.mubr.f32.mxu0 %v1083
    %2291 = vmatmul.mubr.f32.gmra.mxu0 %v1082
    %v2292 = vpop.f32.mrf.mxu0
    %v2293 = vadd.f32 %v1451, %v2292
    %v2294 = vpop.f32.mrf.mxu0
    %v2295 = vadd.f32 %v1455, %v2294
    %2296 = vmatprep.mubr.f32.mxu0 %v1085
    %2297 = vmatmul.mubr.f32.gmra.mxu0 %v1084
    %v2298 = vpop.f32.mrf.mxu0
    %v2299 = vadd.f32 %v1451, %v2298
    %v2300 = vpop.f32.mrf.mxu0
    %v2301 = vadd.f32 %v1455, %v2300
    %2302 = vmatprep.mubr.f32.mxu0 %v1087
    %2303 = vmatmul.mubr.f32.gmra.mxu0 %v1086
    %v2304 = vpop.f32.mrf.mxu0
    %v2305 = vadd.f32 %v1451, %v2304
    %v2306 = vpop.f32.mrf.mxu0
    %v2307 = vadd.f32 %v1455, %v2306
    %2308 = vmatprep.mubr.f32.mxu0 %v1089
    %2309 = vmatmul.mubr.f32.gmra.mxu0 %v1088
    %v2310 = vpop.f32.mrf.mxu0
    %v2311 = vadd.f32 %v1451, %v2310
    %v2312 = vpop.f32.mrf.mxu0
    %v2313 = vadd.f32 %v1455, %v2312
    %2314 = vmatprep.mubr.f32.mxu0 %v1091
    %2315 = vmatmul.mubr.f32.gmra.mxu0 %v1090
    %v2316 = vpop.f32.mrf.mxu0
    %v2317 = vadd.f32 %v1451, %v2316
    %v2318 = vpop.f32.mrf.mxu0
    %v2319 = vadd.f32 %v1455, %v2318
    %2320 = vmatprep.mubr.f32.mxu0 %v1093
    %2321 = vmatmul.mubr.f32.gmra.mxu0 %v1092
    %v2322 = vpop.f32.mrf.mxu0
    %v2323 = vadd.f32 %v1451, %v2322
    %v2324 = vpop.f32.mrf.mxu0
    %v2325 = vadd.f32 %v1455, %v2324
    %2326 = vmatprep.mubr.f32.mxu0 %v1095
    %2327 = vmatmul.mubr.f32.gmra.mxu0 %v1094
    %v2328 = vpop.f32.mrf.mxu0
    %v2329 = vadd.f32 %v1451, %v2328
    %v2330 = vpop.f32.mrf.mxu0
    %v2331 = vadd.f32 %v1455, %v2330
    %2332 = vmatprep.mubr.f32.mxu0 %v1097
    %2333 = vmatmul.mubr.f32.gmra.mxu0 %v1096
    %v2334 = vpop.f32.mrf.mxu0
    %v2335 = vadd.f32 %v1451, %v2334
    %v2336 = vpop.f32.mrf.mxu0
    %v2337 = vadd.f32 %v1455, %v2336
    %2338 = vmatprep.mubr.f32.mxu0 %v1099
    %2339 = vmatmul.mubr.f32.gmra.mxu0 %v1098
    %v2340 = vpop.f32.mrf.mxu0
    %v2341 = vadd.f32 %v1451, %v2340
    %v2342 = vpop.f32.mrf.mxu0
    %v2343 = vadd.f32 %v1455, %v2342
    %2344 = vmatprep.mubr.f32.mxu0 %v1101
    %2345 = vmatmul.mubr.f32.gmra.mxu0 %v1100
    %v2346 = vpop.f32.mrf.mxu0
    %v2347 = vadd.f32 %v1451, %v2346
    %v2348 = vpop.f32.mrf.mxu0
    %v2349 = vadd.f32 %v1455, %v2348
    %2350 = vmatprep.mubr.f32.mxu0 %v1103
    %2351 = vmatmul.mubr.f32.gmra.mxu0 %v1102
    %v2352 = vpop.f32.mrf.mxu0
    %v2353 = vadd.f32 %v1451, %v2352
    %v2354 = vpop.f32.mrf.mxu0
    %v2355 = vadd.f32 %v1455, %v2354
    %2356 = vmatprep.mubr.f32.mxu0 %v1105
    %2357 = vmatmul.mubr.f32.gmra.mxu0 %v1104
    %v2358 = vpop.f32.mrf.mxu0
    %v2359 = vadd.f32 %v1451, %v2358
    %v2360 = vpop.f32.mrf.mxu0
    %v2361 = vadd.f32 %v1455, %v2360
    %2362 = vmatprep.mubr.f32.mxu0 %v1107
    %2363 = vmatmul.mubr.f32.gmra.mxu0 %v1106
    %v2364 = vpop.f32.mrf.mxu0
    %v2365 = vadd.f32 %v1451, %v2364
    %v2366 = vpop.f32.mrf.mxu0
    %v2367 = vadd.f32 %v1455, %v2366
    %2368 = vmatprep.mubr.f32.mxu0 %v1109
    %2369 = vmatmul.mubr.f32.gmra.mxu0 %v1108
    %v2370 = vpop.f32.mrf.mxu0
    %v2371 = vadd.f32 %v1451, %v2370
    %v2372 = vpop.f32.mrf.mxu0
    %v2373 = vadd.f32 %v1455, %v2372
    %2374 = vmatprep.mubr.f32.mxu0 %v1111
    %2375 = vmatmul.mubr.f32.gmra.mxu0 %v1110
    %v2376 = vpop.f32.mrf.mxu0
    %v2377 = vadd.f32 %v1451, %v2376
    %v2378 = vpop.f32.mrf.mxu0
    %v2379 = vadd.f32 %v1455, %v2378
    %2380 = vmatprep.mubr.f32.mxu0 %v1113
    %2381 = vmatmul.mubr.f32.gmra.mxu0 %v1112
    %v2382 = vpop.f32.mrf.mxu0
    %v2383 = vadd.f32 %v1451, %v2382
    %v2384 = vpop.f32.mrf.mxu0
    %v2385 = vadd.f32 %v1455, %v2384
    %2386 = vmatprep.mubr.f32.mxu0 %v1115
    %2387 = vmatmul.mubr.f32.gmra.mxu0 %v1114
    %v2388 = vpop.f32.mrf.mxu0
    %v2389 = vadd.f32 %v1451, %v2388
    %v2390 = vpop.f32.mrf.mxu0
    %v2391 = vadd.f32 %v1455, %v2390
    %2392 = vmatprep.mubr.f32.mxu0 %v1117
    %2393 = vmatmul.mubr.f32.gmra.mxu0 %v1116
    %v2394 = vpop.f32.mrf.mxu0
    %v2395 = vadd.f32 %v1451, %v2394
    %v2396 = vpop.f32.mrf.mxu0
    %v2397 = vadd.f32 %v1455, %v2396
    %2398 = vmatprep.mubr.f32.mxu0 %v1119
    %2399 = vmatmul.mubr.f32.gmra.mxu0 %v1118
    %v2400 = vpop.f32.mrf.mxu0
    %v2401 = vadd.f32 %v1451, %v2400
    %v2402 = vpop.f32.mrf.mxu0
    %v2403 = vadd.f32 %v1455, %v2402
    %2404 = vmatprep.mubr.f32.mxu0 %v1121
    %2405 = vmatmul.mubr.f32.gmra.mxu0 %v1120
    %v2406 = vpop.f32.mrf.mxu0
    %v2407 = vadd.f32 %v1451, %v2406
    %v2408 = vpop.f32.mrf.mxu0
    %v2409 = vadd.f32 %v1455, %v2408
    %2410 = vmatprep.mubr.f32.mxu0 %v1123
    %2411 = vmatmul.mubr.f32.gmra.mxu0 %v1122
    %v2412 = vpop.f32.mrf.mxu0
    %v2413 = vadd.f32 %v1451, %v2412
    %v2414 = vpop.f32.mrf.mxu0
    %v2415 = vadd.f32 %v1455, %v2414
    %2416 = vmatprep.mubr.f32.mxu0 %v1125
    %2417 = vmatmul.mubr.f32.gmra.mxu0 %v1124
    %v2418 = vpop.f32.mrf.mxu0
    %v2419 = vadd.f32 %v1451, %v2418
    %v2420 = vpop.f32.mrf.mxu0
    %v2421 = vadd.f32 %v1455, %v2420
    %2422 = vmatprep.mubr.f32.mxu0 %v1127
    %2423 = vmatmul.mubr.f32.gmra.mxu0 %v1126
    %v2424 = vpop.f32.mrf.mxu0
    %v2425 = vadd.f32 %v1451, %v2424
    %v2426 = vpop.f32.mrf.mxu0
    %v2427 = vadd.f32 %v1455, %v2426
    %2428 = vmatprep.mubr.f32.mxu0 %v1129
    %2429 = vmatmul.mubr.f32.gmra.mxu0 %v1128
    %v2430 = vpop.f32.mrf.mxu0
    %v2431 = vadd.f32 %v1451, %v2430
    %v2432 = vpop.f32.mrf.mxu0
    %v2433 = vadd.f32 %v1455, %v2432
    %2434 = vmatprep.mubr.f32.mxu0 %v1131
    %2435 = vmatmul.mubr.f32.gmra.mxu0 %v1130
    %v2436 = vpop.f32.mrf.mxu0
    %v2437 = vadd.f32 %v1451, %v2436
    %v2438 = vpop.f32.mrf.mxu0
    %v2439 = vadd.f32 %v1455, %v2438
    %2440 = vmatprep.mubr.f32.mxu0 %v1133
    %2441 = vmatmul.mubr.f32.gmra.mxu0 %v1132
    %v2442 = vpop.f32.mrf.mxu0
    %v2443 = vadd.f32 %v1451, %v2442
    %v2444 = vpop.f32.mrf.mxu0
    %v2445 = vadd.f32 %v1455, %v2444
    %2446 = vmatprep.mubr.f32.mxu0 %v1135
    %2447 = vmatmul.mubr.f32.gmra.mxu0 %v1134
    %v2448 = vpop.f32.mrf.mxu0
    %v2449 = vadd.f32 %v1451, %v2448
    %v2450 = vpop.f32.mrf.mxu0
    %v2451 = vadd.f32 %v1455, %v2450
    %2452 = vmatprep.mubr.f32.mxu0 %v1137
    %2453 = vmatmul.mubr.f32.gmra.mxu0 %v1136
    %v2454 = vpop.f32.mrf.mxu0
    %v2455 = vadd.f32 %v1451, %v2454
    %v2456 = vpop.f32.mrf.mxu0
    %v2457 = vadd.f32 %v1455, %v2456
    %2458 = vmatprep.mubr.f32.mxu0 %v1139
    %2459 = vmatmul.mubr.f32.gmra.mxu0 %v1138
    %v2460 = vpop.f32.mrf.mxu0
    %v2461 = vadd.f32 %v1451, %v2460
    %v2462 = vpop.f32.mrf.mxu0
    %v2463 = vadd.f32 %v1455, %v2462
    %2464 = vmatprep.mubr.f32.mxu0 %v1141
    %2465 = vmatmul.mubr.f32.gmra.mxu0 %v1140
    %v2466 = vpop.f32.mrf.mxu0
    %v2467 = vadd.f32 %v1451, %v2466
    %v2468 = vpop.f32.mrf.mxu0
    %v2469 = vadd.f32 %v1455, %v2468
    %2470 = vmatprep.mubr.f32.mxu0 %v1143
    %2471 = vmatmul.mubr.f32.gmra.mxu0 %v1142
    %v2472 = vpop.f32.mrf.mxu0
    %v2473 = vadd.f32 %v1451, %v2472
    %v2474 = vpop.f32.mrf.mxu0
    %v2475 = vadd.f32 %v1455, %v2474
    %2476 = vmatprep.mubr.f32.mxu0 %v1145
    %2477 = vmatmul.mubr.f32.gmra.mxu0 %v1144
    %v2478 = vpop.f32.mrf.mxu0
    %v2479 = vadd.f32 %v1451, %v2478
    %v2480 = vpop.f32.mrf.mxu0
    %v2481 = vadd.f32 %v1455, %v2480
    %2482 = vmatprep.mubr.f32.mxu0 %v1147
    %2483 = vmatmul.mubr.f32.gmra.mxu0 %v1146
    %v2484 = vpop.f32.mrf.mxu0
    %v2485 = vadd.f32 %v1451, %v2484
    %v2486 = vpop.f32.mrf.mxu0
    %v2487 = vadd.f32 %v1455, %v2486
    %2488 = vmatprep.mubr.f32.mxu0 %v1149
    %2489 = vmatmul.mubr.f32.gmra.mxu0 %v1148
    %v2490 = vpop.f32.mrf.mxu0
    %v2491 = vadd.f32 %v1451, %v2490
    %v2492 = vpop.f32.mrf.mxu0
    %v2493 = vadd.f32 %v1455, %v2492
    %2494 = vmatprep.mubr.f32.mxu0 %v1151
    %2495 = vmatmul.mubr.f32.gmra.mxu0 %v1150
    %v2496 = vpop.f32.mrf.mxu0
    %v2497 = vadd.f32 %v1451, %v2496
    %v2498 = vpop.f32.mrf.mxu0
    %v2499 = vadd.f32 %v1455, %v2498
    %2500 = vmatprep.mubr.f32.mxu0 %v1153
    %2501 = vmatmul.mubr.f32.gmra.mxu0 %v1152
    %v2502 = vpop.f32.mrf.mxu0
    %v2503 = vadd.f32 %v1451, %v2502
    %v2504 = vpop.f32.mrf.mxu0
    %v2505 = vadd.f32 %v1455, %v2504
    %2506 = vmatprep.mubr.f32.mxu0 %v1155
    %2507 = vmatmul.mubr.f32.gmra.mxu0 %v1154
    %v2508 = vpop.f32.mrf.mxu0
    %v2509 = vadd.f32 %v1451, %v2508
    %v2510 = vpop.f32.mrf.mxu0
    %v2511 = vadd.f32 %v1455, %v2510
    %2512 = vmatprep.mubr.f32.mxu0 %v1157
    %2513 = vmatmul.mubr.f32.gmra.mxu0 %v1156
    %v2514 = vpop.f32.mrf.mxu0
    %v2515 = vadd.f32 %v1451, %v2514
    %v2516 = vpop.f32.mrf.mxu0
    %v2517 = vadd.f32 %v1455, %v2516
    %2518 = vmatprep.mubr.f32.mxu0 %v1159
    %2519 = vmatmul.mubr.f32.gmra.mxu0 %v1158
    %v2520 = vpop.f32.mrf.mxu0
    %v2521 = vadd.f32 %v1451, %v2520
    %v2522 = vpop.f32.mrf.mxu0
    %v2523 = vadd.f32 %v1455, %v2522
    %2524 = vmatprep.mubr.f32.mxu0 %v1161
    %2525 = vmatmul.mubr.f32.gmra.mxu0 %v1160
    %v2526 = vpop.f32.mrf.mxu0
    %v2527 = vadd.f32 %v1451, %v2526
    %v2528 = vpop.f32.mrf.mxu0
    %v2529 = vadd.f32 %v1455, %v2528
    %2530 = vmatprep.mubr.f32.mxu0 %v1163
    %2531 = vmatmul.mubr.f32.gmra.mxu0 %v1162
    %v2532 = vpop.f32.mrf.mxu0
    %v2533 = vadd.f32 %v1451, %v2532
    %v2534 = vpop.f32.mrf.mxu0
    %v2535 = vadd.f32 %v1455, %v2534
    %2536 = vmatprep.mubr.f32.mxu0 %v1165
    %2537 = vmatmul.mubr.f32.gmra.mxu0 %v1164
    %v2538 = vpop.f32.mrf.mxu0
    %v2539 = vadd.f32 %v1451, %v2538
    %v2540 = vpop.f32.mrf.mxu0
    %v2541 = vadd.f32 %v1455, %v2540
    %2542 = vmatprep.mubr.f32.mxu0 %v1167
    %2543 = vmatmul.mubr.f32.gmra.mxu0 %v1166
    %v2544 = vpop.f32.mrf.mxu0
    %v2545 = vadd.f32 %v1451, %v2544
    %v2546 = vpop.f32.mrf.mxu0
    %v2547 = vadd.f32 %v1455, %v2546
    %2548 = vmatprep.mubr.f32.mxu0 %v1169
    %2549 = vmatmul.mubr.f32.gmra.mxu0 %v1168
    %v2550 = vpop.f32.mrf.mxu0
    %v2551 = vadd.f32 %v1451, %v2550
    %v2552 = vpop.f32.mrf.mxu0
    %v2553 = vadd.f32 %v1455, %v2552
    %2554 = vmatprep.mubr.f32.mxu0 %v1171
    %2555 = vmatmul.mubr.f32.gmra.mxu0 %v1170
    %v2556 = vpop.f32.mrf.mxu0
    %v2557 = vadd.f32 %v1451, %v2556
    %v2558 = vpop.f32.mrf.mxu0
    %v2559 = vadd.f32 %v1455, %v2558
    %2560 = vmatprep.mubr.f32.mxu0 %v1173
    %2561 = vmatmul.mubr.f32.gmra.mxu0 %v1172
    %v2562 = vpop.f32.mrf.mxu0
    %v2563 = vadd.f32 %v1451, %v2562
    %v2564 = vpop.f32.mrf.mxu0
    %v2565 = vadd.f32 %v1455, %v2564
    %2566 = vdwg.mxu0
    %2567 = vmatprep.subr.mxu0 %v1301
    %2568 = vmatpush1.msra.mxu0 %v1300
    %2569 = vmatprep.subr.mxu0 %v1293
    %2570 = vmatpush1.msra.mxu0 %v1292
    %2571 = vmatprep.subr.mxu0 %v1285
    %2572 = vmatpush1.msra.mxu0 %v1284
    %2573 = vmatprep.subr.mxu0 %v1277
    %2574 = vmatpush1.msra.mxu0 %v1276
    %2575 = vmatprep.subr.mxu0 %v1269
    %2576 = vmatpush1.msra.mxu0 %v1268
    %2577 = vmatprep.subr.mxu0 %v1261
    %2578 = vmatpush1.msra.mxu0 %v1260
    %2579 = vmatprep.subr.mxu0 %v1253
    %2580 = vmatpush1.msra.mxu0 %v1252
    %2581 = vmatprep.subr.mxu0 %v1245
    %2582 = vmatpush1.msra.mxu0 %v1244
    %2583 = vmatprep.subr.mxu0 %v1237
    %2584 = vmatpush1.msra.mxu0 %v1236
    %2585 = vmatprep.subr.mxu0 %v1229
    %2586 = vmatpush1.msra.mxu0 %v1228
    %2587 = vmatprep.subr.mxu0 %v1221
    %2588 = vmatpush1.msra.mxu0 %v1220
    %2589 = vmatprep.subr.mxu0 %v1213
    %2590 = vmatpush1.msra.mxu0 %v1212
    %2591 = vmatprep.subr.mxu0 %v1205
    %2592 = vmatpush1.msra.mxu0 %v1204
    %2593 = vmatprep.subr.mxu0 %v1197
    %2594 = vmatpush1.msra.mxu0 %v1196
    %2595 = vmatprep.subr.mxu0 %v1189
    %2596 = vmatpush1.msra.mxu0 %v1188
    %2597 = vmatprep.subr.mxu0 %v1181
    %2598 = vmatpush1.msra.mxu0 %v1180
    %2599 = vmatprep.subr.mxu0 %v1429
    %2600 = vmatpush2.msra.mxu0 %v1428
    %2601 = vmatprep.subr.mxu0 %v1421
    %2602 = vmatpush2.msra.mxu0 %v1420
    %2603 = vmatprep.subr.mxu0 %v1413
    %2604 = vmatpush2.msra.mxu0 %v1412
    %2605 = vmatprep.subr.mxu0 %v1405
    %2606 = vmatpush2.msra.mxu0 %v1404
    %2607 = vmatprep.subr.mxu0 %v1397
    %2608 = vmatpush2.msra.mxu0 %v1396
    %2609 = vmatprep.subr.mxu0 %v1389
    %2610 = vmatpush2.msra.mxu0 %v1388
    %2611 = vmatprep.subr.mxu0 %v1381
    %2612 = vmatpush2.msra.mxu0 %v1380
    %2613 = vmatprep.subr.mxu0 %v1373
    %2614 = vmatpush2.msra.mxu0 %v1372
    %2615 = vmatprep.subr.mxu0 %v1365
    %2616 = vmatpush2.msra.mxu0 %v1364
    %2617 = vmatprep.subr.mxu0 %v1357
    %2618 = vmatpush2.msra.mxu0 %v1356
    %2619 = vmatprep.subr.mxu0 %v1349
    %2620 = vmatpush2.msra.mxu0 %v1348
    %2621 = vmatprep.subr.mxu0 %v1341
    %2622 = vmatpush2.msra.mxu0 %v1340
    %2623 = vmatprep.subr.mxu0 %v1333
    %2624 = vmatpush2.msra.mxu0 %v1332
    %2625 = vmatprep.subr.mxu0 %v1325
    %2626 = vmatpush2.msra.mxu0 %v1324
    %2627 = vmatprep.subr.mxu0 %v1317
    %2628 = vmatpush2.msra.mxu0 %v1316
    %2629 = vmatprep.subr.mxu0 %v1309
    %2630 = vmatpush2.msra.mxu0 %v1308
    %2631 = vmatprep.mubr.f32.mxu0 %v1075
    %2632 = vmatmul.mubr.f32.gmra.mxu0 %v1074
    %v2633 = vpop.f32.mrf.mxu0
    %v2634 = vadd.f32 %v1459, %v2633
    %v2635 = vpop.f32.mrf.mxu0
    %v2636 = vadd.f32 %v1463, %v2635
    %2637 = vmatprep.mubr.f32.mxu0 %v1077
    %2638 = vmatmul.mubr.f32.gmra.mxu0 %v1076
    %v2639 = vpop.f32.mrf.mxu0
    %v2640 = vadd.f32 %v1459, %v2639
    %v2641 = vpop.f32.mrf.mxu0
    %v2642 = vadd.f32 %v1463, %v2641
    %2643 = vmatprep.mubr.f32.mxu0 %v1079
    %2644 = vmatmul.mubr.f32.gmra.mxu0 %v1078
    %v2645 = vpop.f32.mrf.mxu0
    %v2646 = vadd.f32 %v1459, %v2645
    %v2647 = vpop.f32.mrf.mxu0
    %v2648 = vadd.f32 %v1463, %v2647
    %2649 = vmatprep.mubr.f32.mxu0 %v1081
    %2650 = vmatmul.mubr.f32.gmra.mxu0 %v1080
    %v2651 = vpop.f32.mrf.mxu0
    %v2652 = vadd.f32 %v1459, %v2651
    %v2653 = vpop.f32.mrf.mxu0
    %v2654 = vadd.f32 %v1463, %v2653
    %2655 = vmatprep.mubr.f32.mxu0 %v1083
    %2656 = vmatmul.mubr.f32.gmra.mxu0 %v1082
    %v2657 = vpop.f32.mrf.mxu0
    %v2658 = vadd.f32 %v1459, %v2657
    %v2659 = vpop.f32.mrf.mxu0
    %v2660 = vadd.f32 %v1463, %v2659
    %2661 = vmatprep.mubr.f32.mxu0 %v1085
    %2662 = vmatmul.mubr.f32.gmra.mxu0 %v1084
    %v2663 = vpop.f32.mrf.mxu0
    %v2664 = vadd.f32 %v1459, %v2663
    %v2665 = vpop.f32.mrf.mxu0
    %v2666 = vadd.f32 %v1463, %v2665
    %2667 = vmatprep.mubr.f32.mxu0 %v1087
    %2668 = vmatmul.mubr.f32.gmra.mxu0 %v1086
    %v2669 = vpop.f32.mrf.mxu0
    %v2670 = vadd.f32 %v1459, %v2669
    %v2671 = vpop.f32.mrf.mxu0
    %v2672 = vadd.f32 %v1463, %v2671
    %2673 = vmatprep.mubr.f32.mxu0 %v1089
    %2674 = vmatmul.mubr.f32.gmra.mxu0 %v1088
    %v2675 = vpop.f32.mrf.mxu0
    %v2676 = vadd.f32 %v1459, %v2675
    %v2677 = vpop.f32.mrf.mxu0
    %v2678 = vadd.f32 %v1463, %v2677
    %2679 = vmatprep.mubr.f32.mxu0 %v1091
    %2680 = vmatmul.mubr.f32.gmra.mxu0 %v1090
    %v2681 = vpop.f32.mrf.mxu0
    %v2682 = vadd.f32 %v1459, %v2681
    %v2683 = vpop.f32.mrf.mxu0
    %v2684 = vadd.f32 %v1463, %v2683
    %2685 = vmatprep.mubr.f32.mxu0 %v1093
    %2686 = vmatmul.mubr.f32.gmra.mxu0 %v1092
    %v2687 = vpop.f32.mrf.mxu0
    %v2688 = vadd.f32 %v1459, %v2687
    %v2689 = vpop.f32.mrf.mxu0
    %v2690 = vadd.f32 %v1463, %v2689
    %2691 = vmatprep.mubr.f32.mxu0 %v1095
    %2692 = vmatmul.mubr.f32.gmra.mxu0 %v1094
    %v2693 = vpop.f32.mrf.mxu0
    %v2694 = vadd.f32 %v1459, %v2693
    %v2695 = vpop.f32.mrf.mxu0
    %v2696 = vadd.f32 %v1463, %v2695
    %2697 = vmatprep.mubr.f32.mxu0 %v1097
    %2698 = vmatmul.mubr.f32.gmra.mxu0 %v1096
    %v2699 = vpop.f32.mrf.mxu0
    %v2700 = vadd.f32 %v1459, %v2699
    %v2701 = vpop.f32.mrf.mxu0
    %v2702 = vadd.f32 %v1463, %v2701
    %2703 = vmatprep.mubr.f32.mxu0 %v1099
    %2704 = vmatmul.mubr.f32.gmra.mxu0 %v1098
    %v2705 = vpop.f32.mrf.mxu0
    %v2706 = vadd.f32 %v1459, %v2705
    %v2707 = vpop.f32.mrf.mxu0
    %v2708 = vadd.f32 %v1463, %v2707
    %2709 = vmatprep.mubr.f32.mxu0 %v1101
    %2710 = vmatmul.mubr.f32.gmra.mxu0 %v1100
    %v2711 = vpop.f32.mrf.mxu0
    %v2712 = vadd.f32 %v1459, %v2711
    %v2713 = vpop.f32.mrf.mxu0
    %v2714 = vadd.f32 %v1463, %v2713
    %2715 = vmatprep.mubr.f32.mxu0 %v1103
    %2716 = vmatmul.mubr.f32.gmra.mxu0 %v1102
    %v2717 = vpop.f32.mrf.mxu0
    %v2718 = vadd.f32 %v1459, %v2717
    %v2719 = vpop.f32.mrf.mxu0
    %v2720 = vadd.f32 %v1463, %v2719
    %2721 = vmatprep.mubr.f32.mxu0 %v1105
    %2722 = vmatmul.mubr.f32.gmra.mxu0 %v1104
    %v2723 = vpop.f32.mrf.mxu0
    %v2724 = vadd.f32 %v1459, %v2723
    %v2725 = vpop.f32.mrf.mxu0
    %v2726 = vadd.f32 %v1463, %v2725
    %2727 = vmatprep.mubr.f32.mxu0 %v1107
    %2728 = vmatmul.mubr.f32.gmra.mxu0 %v1106
    %v2729 = vpop.f32.mrf.mxu0
    %v2730 = vadd.f32 %v1459, %v2729
    %v2731 = vpop.f32.mrf.mxu0
    %v2732 = vadd.f32 %v1463, %v2731
    %2733 = vmatprep.mubr.f32.mxu0 %v1109
    %2734 = vmatmul.mubr.f32.gmra.mxu0 %v1108
    %v2735 = vpop.f32.mrf.mxu0
    %v2736 = vadd.f32 %v1459, %v2735
    %v2737 = vpop.f32.mrf.mxu0
    %v2738 = vadd.f32 %v1463, %v2737
    %2739 = vmatprep.mubr.f32.mxu0 %v1111
    %2740 = vmatmul.mubr.f32.gmra.mxu0 %v1110
    %v2741 = vpop.f32.mrf.mxu0
    %v2742 = vadd.f32 %v1459, %v2741
    %v2743 = vpop.f32.mrf.mxu0
    %v2744 = vadd.f32 %v1463, %v2743
    %2745 = vmatprep.mubr.f32.mxu0 %v1113
    %2746 = vmatmul.mubr.f32.gmra.mxu0 %v1112
    %v2747 = vpop.f32.mrf.mxu0
    %v2748 = vadd.f32 %v1459, %v2747
    %v2749 = vpop.f32.mrf.mxu0
    %v2750 = vadd.f32 %v1463, %v2749
    %2751 = vmatprep.mubr.f32.mxu0 %v1115
    %2752 = vmatmul.mubr.f32.gmra.mxu0 %v1114
    %v2753 = vpop.f32.mrf.mxu0
    %v2754 = vadd.f32 %v1459, %v2753
    %v2755 = vpop.f32.mrf.mxu0
    %v2756 = vadd.f32 %v1463, %v2755
    %2757 = vmatprep.mubr.f32.mxu0 %v1117
    %2758 = vmatmul.mubr.f32.gmra.mxu0 %v1116
    %v2759 = vpop.f32.mrf.mxu0
    %v2760 = vadd.f32 %v1459, %v2759
    %v2761 = vpop.f32.mrf.mxu0
    %v2762 = vadd.f32 %v1463, %v2761
    %2763 = vmatprep.mubr.f32.mxu0 %v1119
    %2764 = vmatmul.mubr.f32.gmra.mxu0 %v1118
    %v2765 = vpop.f32.mrf.mxu0
    %v2766 = vadd.f32 %v1459, %v2765
    %v2767 = vpop.f32.mrf.mxu0
    %v2768 = vadd.f32 %v1463, %v2767
    %2769 = vmatprep.mubr.f32.mxu0 %v1121
    %2770 = vmatmul.mubr.f32.gmra.mxu0 %v1120
    %v2771 = vpop.f32.mrf.mxu0
    %v2772 = vadd.f32 %v1459, %v2771
    %v2773 = vpop.f32.mrf.mxu0
    %v2774 = vadd.f32 %v1463, %v2773
    %2775 = vmatprep.mubr.f32.mxu0 %v1123
    %2776 = vmatmul.mubr.f32.gmra.mxu0 %v1122
    %v2777 = vpop.f32.mrf.mxu0
    %v2778 = vadd.f32 %v1459, %v2777
    %v2779 = vpop.f32.mrf.mxu0
    %v2780 = vadd.f32 %v1463, %v2779
    %2781 = vmatprep.mubr.f32.mxu0 %v1125
    %2782 = vmatmul.mubr.f32.gmra.mxu0 %v1124
    %v2783 = vpop.f32.mrf.mxu0
    %v2784 = vadd.f32 %v1459, %v2783
    %v2785 = vpop.f32.mrf.mxu0
    %v2786 = vadd.f32 %v1463, %v2785
    %2787 = vmatprep.mubr.f32.mxu0 %v1127
    %2788 = vmatmul.mubr.f32.gmra.mxu0 %v1126
    %v2789 = vpop.f32.mrf.mxu0
    %v2790 = vadd.f32 %v1459, %v2789
    %v2791 = vpop.f32.mrf.mxu0
    %v2792 = vadd.f32 %v1463, %v2791
    %2793 = vmatprep.mubr.f32.mxu0 %v1129
    %2794 = vmatmul.mubr.f32.gmra.mxu0 %v1128
    %v2795 = vpop.f32.mrf.mxu0
    %v2796 = vadd.f32 %v1459, %v2795
    %v2797 = vpop.f32.mrf.mxu0
    %v2798 = vadd.f32 %v1463, %v2797
    %2799 = vmatprep.mubr.f32.mxu0 %v1131
    %2800 = vmatmul.mubr.f32.gmra.mxu0 %v1130
    %v2801 = vpop.f32.mrf.mxu0
    %v2802 = vadd.f32 %v1459, %v2801
    %v2803 = vpop.f32.mrf.mxu0
    %v2804 = vadd.f32 %v1463, %v2803
    %2805 = vmatprep.mubr.f32.mxu0 %v1133
    %2806 = vmatmul.mubr.f32.gmra.mxu0 %v1132
    %v2807 = vpop.f32.mrf.mxu0
    %v2808 = vadd.f32 %v1459, %v2807
    %v2809 = vpop.f32.mrf.mxu0
    %v2810 = vadd.f32 %v1463, %v2809
    %2811 = vmatprep.mubr.f32.mxu0 %v1135
    %2812 = vmatmul.mubr.f32.gmra.mxu0 %v1134
    %v2813 = vpop.f32.mrf.mxu0
    %v2814 = vadd.f32 %v1459, %v2813
    %v2815 = vpop.f32.mrf.mxu0
    %v2816 = vadd.f32 %v1463, %v2815
    %2817 = vmatprep.mubr.f32.mxu0 %v1137
    %2818 = vmatmul.mubr.f32.gmra.mxu0 %v1136
    %v2819 = vpop.f32.mrf.mxu0
    %v2820 = vadd.f32 %v1459, %v2819
    %v2821 = vpop.f32.mrf.mxu0
    %v2822 = vadd.f32 %v1463, %v2821
    %2823 = vmatprep.mubr.f32.mxu0 %v1139
    %2824 = vmatmul.mubr.f32.gmra.mxu0 %v1138
    %v2825 = vpop.f32.mrf.mxu0
    %v2826 = vadd.f32 %v1459, %v2825
    %v2827 = vpop.f32.mrf.mxu0
    %v2828 = vadd.f32 %v1463, %v2827
    %2829 = vmatprep.mubr.f32.mxu0 %v1141
    %2830 = vmatmul.mubr.f32.gmra.mxu0 %v1140
    %v2831 = vpop.f32.mrf.mxu0
    %v2832 = vadd.f32 %v1459, %v2831
    %v2833 = vpop.f32.mrf.mxu0
    %v2834 = vadd.f32 %v1463, %v2833
    %2835 = vmatprep.mubr.f32.mxu0 %v1143
    %2836 = vmatmul.mubr.f32.gmra.mxu0 %v1142
    %v2837 = vpop.f32.mrf.mxu0
    %v2838 = vadd.f32 %v1459, %v2837
    %v2839 = vpop.f32.mrf.mxu0
    %v2840 = vadd.f32 %v1463, %v2839
    %2841 = vmatprep.mubr.f32.mxu0 %v1145
    %2842 = vmatmul.mubr.f32.gmra.mxu0 %v1144
    %v2843 = vpop.f32.mrf.mxu0
    %v2844 = vadd.f32 %v1459, %v2843
    %v2845 = vpop.f32.mrf.mxu0
    %v2846 = vadd.f32 %v1463, %v2845
    %2847 = vmatprep.mubr.f32.mxu0 %v1147
    %2848 = vmatmul.mubr.f32.gmra.mxu0 %v1146
    %v2849 = vpop.f32.mrf.mxu0
    %v2850 = vadd.f32 %v1459, %v2849
    %v2851 = vpop.f32.mrf.mxu0
    %v2852 = vadd.f32 %v1463, %v2851
    %2853 = vmatprep.mubr.f32.mxu0 %v1149
    %2854 = vmatmul.mubr.f32.gmra.mxu0 %v1148
    %v2855 = vpop.f32.mrf.mxu0
    %v2856 = vadd.f32 %v1459, %v2855
    %v2857 = vpop.f32.mrf.mxu0
    %v2858 = vadd.f32 %v1463, %v2857
    %2859 = vmatprep.mubr.f32.mxu0 %v1151
    %2860 = vmatmul.mubr.f32.gmra.mxu0 %v1150
    %v2861 = vpop.f32.mrf.mxu0
    %v2862 = vadd.f32 %v1459, %v2861
    %v2863 = vpop.f32.mrf.mxu0
    %v2864 = vadd.f32 %v1463, %v2863
    %2865 = vmatprep.mubr.f32.mxu0 %v1153
    %2866 = vmatmul.mubr.f32.gmra.mxu0 %v1152
    %v2867 = vpop.f32.mrf.mxu0
    %v2868 = vadd.f32 %v1459, %v2867
    %v2869 = vpop.f32.mrf.mxu0
    %v2870 = vadd.f32 %v1463, %v2869
    %2871 = vmatprep.mubr.f32.mxu0 %v1155
    %2872 = vmatmul.mubr.f32.gmra.mxu0 %v1154
    %v2873 = vpop.f32.mrf.mxu0
    %v2874 = vadd.f32 %v1459, %v2873
    %v2875 = vpop.f32.mrf.mxu0
    %v2876 = vadd.f32 %v1463, %v2875
    %2877 = vmatprep.mubr.f32.mxu0 %v1157
    %2878 = vmatmul.mubr.f32.gmra.mxu0 %v1156
    %v2879 = vpop.f32.mrf.mxu0
    %v2880 = vadd.f32 %v1459, %v2879
    %v2881 = vpop.f32.mrf.mxu0
    %v2882 = vadd.f32 %v1463, %v2881
    %2883 = vmatprep.mubr.f32.mxu0 %v1159
    %2884 = vmatmul.mubr.f32.gmra.mxu0 %v1158
    %v2885 = vpop.f32.mrf.mxu0
    %v2886 = vadd.f32 %v1459, %v2885
    %v2887 = vpop.f32.mrf.mxu0
    %v2888 = vadd.f32 %v1463, %v2887
    %2889 = vmatprep.mubr.f32.mxu0 %v1161
    %2890 = vmatmul.mubr.f32.gmra.mxu0 %v1160
    %v2891 = vpop.f32.mrf.mxu0
    %v2892 = vadd.f32 %v1459, %v2891
    %v2893 = vpop.f32.mrf.mxu0
    %v2894 = vadd.f32 %v1463, %v2893
    %2895 = vmatprep.mubr.f32.mxu0 %v1163
    %2896 = vmatmul.mubr.f32.gmra.mxu0 %v1162
    %v2897 = vpop.f32.mrf.mxu0
    %v2898 = vadd.f32 %v1459, %v2897
    %v2899 = vpop.f32.mrf.mxu0
    %v2900 = vadd.f32 %v1463, %v2899
    %2901 = vmatprep.mubr.f32.mxu0 %v1165
    %2902 = vmatmul.mubr.f32.gmra.mxu0 %v1164
    %v2903 = vpop.f32.mrf.mxu0
    %v2904 = vadd.f32 %v1459, %v2903
    %v2905 = vpop.f32.mrf.mxu0
    %v2906 = vadd.f32 %v1463, %v2905
    %2907 = vmatprep.mubr.f32.mxu0 %v1167
    %2908 = vmatmul.mubr.f32.gmra.mxu0 %v1166
    %v2909 = vpop.f32.mrf.mxu0
    %v2910 = vadd.f32 %v1459, %v2909
    %v2911 = vpop.f32.mrf.mxu0
    %v2912 = vadd.f32 %v1463, %v2911
    %2913 = vmatprep.mubr.f32.mxu0 %v1169
    %2914 = vmatmul.mubr.f32.gmra.mxu0 %v1168
    %v2915 = vpop.f32.mrf.mxu0
    %v2916 = vadd.f32 %v1459, %v2915
    %v2917 = vpop.f32.mrf.mxu0
    %v2918 = vadd.f32 %v1463, %v2917
    %2919 = vmatprep.mubr.f32.mxu0 %v1171
    %2920 = vmatmul.mubr.f32.gmra.mxu0 %v1170
    %v2921 = vpop.f32.mrf.mxu0
    %v2922 = vadd.f32 %v1459, %v2921
    %v2923 = vpop.f32.mrf.mxu0
    %v2924 = vadd.f32 %v1463, %v2923
    %2925 = vmatprep.mubr.f32.mxu0 %v1173
    %2926 = vmatmul.mubr.f32.gmra.mxu0 %v1172
    %v2927 = vpop.f32.mrf.mxu0
    %v2928 = vadd.f32 %v1459, %v2927
    %v2929 = vpop.f32.mrf.mxu0
    %v2930 = vadd.f32 %v1463, %v2929
    %2931 = vdwg.mxu0
    %2932 = vst [vmem:[%s5] sm:$0xff] %v1539
    %2933 = vst [vmem:[%s5 + $0x8] sm:$0xff] %v1541
    %2934 = vst [vmem:[%s5 + $0x10] sm:$0xff] %v1904
    %2935 = vst [vmem:[%s5 + $0x18] sm:$0xff] %v1906
    %2936 = vst [vmem:[%s5 + $0x20] sm:$0xff] %v2269
    %2937 = vst [vmem:[%s5 + $0x28] sm:$0xff] %v2271
    %2938 = vst [vmem:[%s5 + $0x30] sm:$0xff] %v2634
    %2939 = vst [vmem:[%s5 + $0x38] sm:$0xff] %v2636
    %2940 = vst [vmem:[%s5 + $0x40] sm:$0xff] %v1545
    %2941 = vst [vmem:[%s5 + $0x48] sm:$0xff] %v1547
    %2942 = vst [vmem:[%s5 + $0x50] sm:$0xff] %v1910
    %2943 = vst [vmem:[%s5 + $0x58] sm:$0xff] %v1912
    %2944 = vst [vmem:[%s5 + $0x60] sm:$0xff] %v2275
    %2945 = vst [vmem:[%s5 + $0x68] sm:$0xff] %v2277
    %2946 = vst [vmem:[%s5 + $0x70] sm:$0xff] %v2640
    %2947 = vst [vmem:[%s5 + $0x78] sm:$0xff] %v2642
    %2948 = vst [vmem:[%s5 + $0x80] sm:$0xff] %v1551
    %2949 = vst [vmem:[%s5 + $0x88] sm:$0xff] %v1553
    %2950 = vst [vmem:[%s5 + $0x90] sm:$0xff] %v1916
    %2951 = vst [vmem:[%s5 + $0x98] sm:$0xff] %v1918
    %2952 = vst [vmem:[%s5 + $0xa0] sm:$0xff] %v2281
    %2953 = vst [vmem:[%s5 + $0xa8] sm:$0xff] %v2283
    %2954 = vst [vmem:[%s5 + $0xb0] sm:$0xff] %v2646
    %2955 = vst [vmem:[%s5 + $0xb8] sm:$0xff] %v2648
    %2956 = vst [vmem:[%s5 + $0xc0] sm:$0xff] %v1557
    %2957 = vst [vmem:[%s5 + $0xc8] sm:$0xff] %v1559
    %2958 = vst [vmem:[%s5 + $0xd0] sm:$0xff] %v1922
    %2959 = vst [vmem:[%s5 + $0xd8] sm:$0xff] %v1924
    %2960 = vst [vmem:[%s5 + $0xe0] sm:$0xff] %v2287
    %2961 = vst [vmem:[%s5 + $0xe8] sm:$0xff] %v2289
    %2962 = vst [vmem:[%s5 + $0xf0] sm:$0xff] %v2652
    %2963 = vst [vmem:[%s5 + $0xf8] sm:$0xff] %v2654
    %2964 = vst [vmem:[%s5 + $0x100] sm:$0xff] %v1563
    %2965 = vst [vmem:[%s5 + $0x108] sm:$0xff] %v1565
    %2966 = vst [vmem:[%s5 + $0x110] sm:$0xff] %v1928
    %2967 = vst [vmem:[%s5 + $0x118] sm:$0xff] %v1930
    %2968 = vst [vmem:[%s5 + $0x120] sm:$0xff] %v2293
    %2969 = vst [vmem:[%s5 + $0x128] sm:$0xff] %v2295
    %2970 = vst [vmem:[%s5 + $0x130] sm:$0xff] %v2658
    %2971 = vst [vmem:[%s5 + $0x138] sm:$0xff] %v2660
    %2972 = vst [vmem:[%s5 + $0x140] sm:$0xff] %v1569
    %2973 = vst [vmem:[%s5 + $0x148] sm:$0xff] %v1571
    %2974 = vst [vmem:[%s5 + $0x150] sm:$0xff] %v1934
    %2975 = vst [vmem:[%s5 + $0x158] sm:$0xff] %v1936
    %2976 = vst [vmem:[%s5 + $0x160] sm:$0xff] %v2299
    %2977 = vst [vmem:[%s5 + $0x168] sm:$0xff] %v2301
    %2978 = vst [vmem:[%s5 + $0x170] sm:$0xff] %v2664
    %2979 = vst [vmem:[%s5 + $0x178] sm:$0xff] %v2666
    %2980 = vst [vmem:[%s5 + $0x180] sm:$0xff] %v1575
    %2981 = vst [vmem:[%s5 + $0x188] sm:$0xff] %v1577
    %2982 = vst [vmem:[%s5 + $0x190] sm:$0xff] %v1940
    %2983 = vst [vmem:[%s5 + $0x198] sm:$0xff] %v1942
    %2984 = vst [vmem:[%s5 + $0x1a0] sm:$0xff] %v2305
    %2985 = vst [vmem:[%s5 + $0x1a8] sm:$0xff] %v2307
    %2986 = vst [vmem:[%s5 + $0x1b0] sm:$0xff] %v2670
    %2987 = vst [vmem:[%s5 + $0x1b8] sm:$0xff] %v2672
    %2988 = vst [vmem:[%s5 + $0x1c0] sm:$0xff] %v1581
    %2989 = vst [vmem:[%s5 + $0x1c8] sm:$0xff] %v1583
    %2990 = vst [vmem:[%s5 + $0x1d0] sm:$0xff] %v1946
    %2991 = vst [vmem:[%s5 + $0x1d8] sm:$0xff] %v1948
    %2992 = vst [vmem:[%s5 + $0x1e0] sm:$0xff] %v2311
    %2993 = vst [vmem:[%s5 + $0x1e8] sm:$0xff] %v2313
    %2994 = vst [vmem:[%s5 + $0x1f0] sm:$0xff] %v2676
    %2995 = vst [vmem:[%s5 + $0x1f8] sm:$0xff] %v2678
    %2996 = vst [vmem:[%s5 + $0x200] sm:$0xff] %v1587
    %2997 = vst [vmem:[%s5 + $0x208] sm:$0xff] %v1589
    %2998 = vst [vmem:[%s5 + $0x210] sm:$0xff] %v1952
    %2999 = vst [vmem:[%s5 + $0x218] sm:$0xff] %v1954
    %3000 = vst [vmem:[%s5 + $0x220] sm:$0xff] %v2317
    %3001 = vst [vmem:[%s5 + $0x228] sm:$0xff] %v2319
    %3002 = vst [vmem:[%s5 + $0x230] sm:$0xff] %v2682
    %3003 = vst [vmem:[%s5 + $0x238] sm:$0xff] %v2684
    %3004 = vst [vmem:[%s5 + $0x240] sm:$0xff] %v1593
    %3005 = vst [vmem:[%s5 + $0x248] sm:$0xff] %v1595
    %3006 = vst [vmem:[%s5 + $0x250] sm:$0xff] %v1958
    %3007 = vst [vmem:[%s5 + $0x258] sm:$0xff] %v1960
    %3008 = vst [vmem:[%s5 + $0x260] sm:$0xff] %v2323
    %3009 = vst [vmem:[%s5 + $0x268] sm:$0xff] %v2325
    %3010 = vst [vmem:[%s5 + $0x270] sm:$0xff] %v2688
    %3011 = vst [vmem:[%s5 + $0x278] sm:$0xff] %v2690
    %3012 = vst [vmem:[%s5 + $0x280] sm:$0xff] %v1599
    %3013 = vst [vmem:[%s5 + $0x288] sm:$0xff] %v1601
    %3014 = vst [vmem:[%s5 + $0x290] sm:$0xff] %v1964
    %3015 = vst [vmem:[%s5 + $0x298] sm:$0xff] %v1966
    %3016 = vst [vmem:[%s5 + $0x2a0] sm:$0xff] %v2329
    %3017 = vst [vmem:[%s5 + $0x2a8] sm:$0xff] %v2331
    %3018 = vst [vmem:[%s5 + $0x2b0] sm:$0xff] %v2694
    %3019 = vst [vmem:[%s5 + $0x2b8] sm:$0xff] %v2696
    %3020 = vst [vmem:[%s5 + $0x2c0] sm:$0xff] %v1605
    %3021 = vst [vmem:[%s5 + $0x2c8] sm:$0xff] %v1607
    %3022 = vst [vmem:[%s5 + $0x2d0] sm:$0xff] %v1970
    %3023 = vst [vmem:[%s5 + $0x2d8] sm:$0xff] %v1972
    %3024 = vst [vmem:[%s5 + $0x2e0] sm:$0xff] %v2335
    %3025 = vst [vmem:[%s5 + $0x2e8] sm:$0xff] %v2337
    %3026 = vst [vmem:[%s5 + $0x2f0] sm:$0xff] %v2700
    %3027 = vst [vmem:[%s5 + $0x2f8] sm:$0xff] %v2702
    %3028 = vst [vmem:[%s5 + $0x300] sm:$0xff] %v1611
    %3029 = vst [vmem:[%s5 + $0x308] sm:$0xff] %v1613
    %3030 = vst [vmem:[%s5 + $0x310] sm:$0xff] %v1976
    %3031 = vst [vmem:[%s5 + $0x318] sm:$0xff] %v1978
    %3032 = vst [vmem:[%s5 + $0x320] sm:$0xff] %v2341
    %3033 = vst [vmem:[%s5 + $0x328] sm:$0xff] %v2343
    %3034 = vst [vmem:[%s5 + $0x330] sm:$0xff] %v2706
    %3035 = vst [vmem:[%s5 + $0x338] sm:$0xff] %v2708
    %3036 = vst [vmem:[%s5 + $0x340] sm:$0xff] %v1617
    %3037 = vst [vmem:[%s5 + $0x348] sm:$0xff] %v1619
    %3038 = vst [vmem:[%s5 + $0x350] sm:$0xff] %v1982
    %3039 = vst [vmem:[%s5 + $0x358] sm:$0xff] %v1984
    %3040 = vst [vmem:[%s5 + $0x360] sm:$0xff] %v2347
    %3041 = vst [vmem:[%s5 + $0x368] sm:$0xff] %v2349
    %3042 = vst [vmem:[%s5 + $0x370] sm:$0xff] %v2712
    %3043 = vst [vmem:[%s5 + $0x378] sm:$0xff] %v2714
    %3044 = vst [vmem:[%s5 + $0x380] sm:$0xff] %v1623
    %3045 = vst [vmem:[%s5 + $0x388] sm:$0xff] %v1625
    %3046 = vst [vmem:[%s5 + $0x390] sm:$0xff] %v1988
    %3047 = vst [vmem:[%s5 + $0x398] sm:$0xff] %v1990
    %3048 = vst [vmem:[%s5 + $0x3a0] sm:$0xff] %v2353
    %3049 = vst [vmem:[%s5 + $0x3a8] sm:$0xff] %v2355
    %3050 = vst [vmem:[%s5 + $0x3b0] sm:$0xff] %v2718
    %3051 = vst [vmem:[%s5 + $0x3b8] sm:$0xff] %v2720
    %3052 = vst [vmem:[%s5 + $0x3c0] sm:$0xff] %v1629
    %3053 = vst [vmem:[%s5 + $0x3c8] sm:$0xff] %v1631
    %3054 = vst [vmem:[%s5 + $0x3d0] sm:$0xff] %v1994
    %3055 = vst [vmem:[%s5 + $0x3d8] sm:$0xff] %v1996
    %3056 = vst [vmem:[%s5 + $0x3e0] sm:$0xff] %v2359
    %3057 = vst [vmem:[%s5 + $0x3e8] sm:$0xff] %v2361
    %3058 = vst [vmem:[%s5 + $0x3f0] sm:$0xff] %v2724
    %3059 = vst [vmem:[%s5 + $0x3f8] sm:$0xff] %v2726
    %3060 = vst [vmem:[%s5 + $0x400] sm:$0xff] %v1635
    %3061 = vst [vmem:[%s5 + $0x408] sm:$0xff] %v1637
    %3062 = vst [vmem:[%s5 + $0x410] sm:$0xff] %v2000
    %3063 = vst [vmem:[%s5 + $0x418] sm:$0xff] %v2002
    %3064 = vst [vmem:[%s5 + $0x420] sm:$0xff] %v2365
    %3065 = vst [vmem:[%s5 + $0x428] sm:$0xff] %v2367
    %3066 = vst [vmem:[%s5 + $0x430] sm:$0xff] %v2730
    %3067 = vst [vmem:[%s5 + $0x438] sm:$0xff] %v2732
    %3068 = vst [vmem:[%s5 + $0x440] sm:$0xff] %v1641
    %3069 = vst [vmem:[%s5 + $0x448] sm:$0xff] %v1643
    %3070 = vst [vmem:[%s5 + $0x450] sm:$0xff] %v2006
    %3071 = vst [vmem:[%s5 + $0x458] sm:$0xff] %v2008
    %3072 = vst [vmem:[%s5 + $0x460] sm:$0xff] %v2371
    %3073 = vst [vmem:[%s5 + $0x468] sm:$0xff] %v2373
    %3074 = vst [vmem:[%s5 + $0x470] sm:$0xff] %v2736
    %3075 = vst [vmem:[%s5 + $0x478] sm:$0xff] %v2738
    %3076 = vst [vmem:[%s5 + $0x480] sm:$0xff] %v1647
    %3077 = vst [vmem:[%s5 + $0x488] sm:$0xff] %v1649
    %3078 = vst [vmem:[%s5 + $0x490] sm:$0xff] %v2012
    %3079 = vst [vmem:[%s5 + $0x498] sm:$0xff] %v2014
    %3080 = vst [vmem:[%s5 + $0x4a0] sm:$0xff] %v2377
    %3081 = vst [vmem:[%s5 + $0x4a8] sm:$0xff] %v2379
    %3082 = vst [vmem:[%s5 + $0x4b0] sm:$0xff] %v2742
    %3083 = vst [vmem:[%s5 + $0x4b8] sm:$0xff] %v2744
    %3084 = vst [vmem:[%s5 + $0x4c0] sm:$0xff] %v1653
    %3085 = vst [vmem:[%s5 + $0x4c8] sm:$0xff] %v1655
    %3086 = vst [vmem:[%s5 + $0x4d0] sm:$0xff] %v2018
    %3087 = vst [vmem:[%s5 + $0x4d8] sm:$0xff] %v2020
    %3088 = vst [vmem:[%s5 + $0x4e0] sm:$0xff] %v2383
    %3089 = vst [vmem:[%s5 + $0x4e8] sm:$0xff] %v2385
    %3090 = vst [vmem:[%s5 + $0x4f0] sm:$0xff] %v2748
    %3091 = vst [vmem:[%s5 + $0x4f8] sm:$0xff] %v2750
    %3092 = vst [vmem:[%s5 + $0x500] sm:$0xff] %v1659
    %3093 = vst [vmem:[%s5 + $0x508] sm:$0xff] %v1661
    %3094 = vst [vmem:[%s5 + $0x510] sm:$0xff] %v2024
    %3095 = vst [vmem:[%s5 + $0x518] sm:$0xff] %v2026
    %3096 = vst [vmem:[%s5 + $0x520] sm:$0xff] %v2389
    %3097 = vst [vmem:[%s5 + $0x528] sm:$0xff] %v2391
    %3098 = vst [vmem:[%s5 + $0x530] sm:$0xff] %v2754
    %3099 = vst [vmem:[%s5 + $0x538] sm:$0xff] %v2756
    %3100 = vst [vmem:[%s5 + $0x540] sm:$0xff] %v1665
    %3101 = vst [vmem:[%s5 + $0x548] sm:$0xff] %v1667
    %3102 = vst [vmem:[%s5 + $0x550] sm:$0xff] %v2030
    %3103 = vst [vmem:[%s5 + $0x558] sm:$0xff] %v2032
    %3104 = vst [vmem:[%s5 + $0x560] sm:$0xff] %v2395
    %3105 = vst [vmem:[%s5 + $0x568] sm:$0xff] %v2397
    %3106 = vst [vmem:[%s5 + $0x570] sm:$0xff] %v2760
    %3107 = vst [vmem:[%s5 + $0x578] sm:$0xff] %v2762
    %3108 = vst [vmem:[%s5 + $0x580] sm:$0xff] %v1671
    %3109 = vst [vmem:[%s5 + $0x588] sm:$0xff] %v1673
    %3110 = vst [vmem:[%s5 + $0x590] sm:$0xff] %v2036
    %3111 = vst [vmem:[%s5 + $0x598] sm:$0xff] %v2038
    %3112 = vst [vmem:[%s5 + $0x5a0] sm:$0xff] %v2401
    %3113 = vst [vmem:[%s5 + $0x5a8] sm:$0xff] %v2403
    %3114 = vst [vmem:[%s5 + $0x5b0] sm:$0xff] %v2766
    %3115 = vst [vmem:[%s5 + $0x5b8] sm:$0xff] %v2768
    %3116 = vst [vmem:[%s5 + $0x5c0] sm:$0xff] %v1677
    %3117 = vst [vmem:[%s5 + $0x5c8] sm:$0xff] %v1679
    %3118 = vst [vmem:[%s5 + $0x5d0] sm:$0xff] %v2042
    %3119 = vst [vmem:[%s5 + $0x5d8] sm:$0xff] %v2044
    %3120 = vst [vmem:[%s5 + $0x5e0] sm:$0xff] %v2407
    %3121 = vst [vmem:[%s5 + $0x5e8] sm:$0xff] %v2409
    %3122 = vst [vmem:[%s5 + $0x5f0] sm:$0xff] %v2772
    %3123 = vst [vmem:[%s5 + $0x5f8] sm:$0xff] %v2774
    %3124 = vst [vmem:[%s5 + $0x600] sm:$0xff] %v1683
    %3125 = vst [vmem:[%s5 + $0x608] sm:$0xff] %v1685
    %3126 = vst [vmem:[%s5 + $0x610] sm:$0xff] %v2048
    %3127 = vst [vmem:[%s5 + $0x618] sm:$0xff] %v2050
    %3128 = vst [vmem:[%s5 + $0x620] sm:$0xff] %v2413
    %3129 = vst [vmem:[%s5 + $0x628] sm:$0xff] %v2415
    %3130 = vst [vmem:[%s5 + $0x630] sm:$0xff] %v2778
    %3131 = vst [vmem:[%s5 + $0x638] sm:$0xff] %v2780
    %3132 = vst [vmem:[%s5 + $0x640] sm:$0xff] %v1689
    %3133 = vst [vmem:[%s5 + $0x648] sm:$0xff] %v1691
    %3134 = vst [vmem:[%s5 + $0x650] sm:$0xff] %v2054
    %3135 = vst [vmem:[%s5 + $0x658] sm:$0xff] %v2056
    %3136 = vst [vmem:[%s5 + $0x660] sm:$0xff] %v2419
    %3137 = vst [vmem:[%s5 + $0x668] sm:$0xff] %v2421
    %3138 = vst [vmem:[%s5 + $0x670] sm:$0xff] %v2784
    %3139 = vst [vmem:[%s5 + $0x678] sm:$0xff] %v2786
    %3140 = vst [vmem:[%s5 + $0x680] sm:$0xff] %v1695
    %3141 = vst [vmem:[%s5 + $0x688] sm:$0xff] %v1697
    %3142 = vst [vmem:[%s5 + $0x690] sm:$0xff] %v2060
    %3143 = vst [vmem:[%s5 + $0x698] sm:$0xff] %v2062
    %3144 = vst [vmem:[%s5 + $0x6a0] sm:$0xff] %v2425
    %3145 = vst [vmem:[%s5 + $0x6a8] sm:$0xff] %v2427
    %3146 = vst [vmem:[%s5 + $0x6b0] sm:$0xff] %v2790
    %3147 = vst [vmem:[%s5 + $0x6b8] sm:$0xff] %v2792
    %3148 = vst [vmem:[%s5 + $0x6c0] sm:$0xff] %v1701
    %3149 = vst [vmem:[%s5 + $0x6c8] sm:$0xff] %v1703
    %3150 = vst [vmem:[%s5 + $0x6d0] sm:$0xff] %v2066
    %3151 = vst [vmem:[%s5 + $0x6d8] sm:$0xff] %v2068
    %3152 = vst [vmem:[%s5 + $0x6e0] sm:$0xff] %v2431
    %3153 = vst [vmem:[%s5 + $0x6e8] sm:$0xff] %v2433
    %3154 = vst [vmem:[%s5 + $0x6f0] sm:$0xff] %v2796
    %3155 = vst [vmem:[%s5 + $0x6f8] sm:$0xff] %v2798
    %3156 = vst [vmem:[%s5 + $0x700] sm:$0xff] %v1707
    %3157 = vst [vmem:[%s5 + $0x708] sm:$0xff] %v1709
    %3158 = vst [vmem:[%s5 + $0x710] sm:$0xff] %v2072
    %3159 = vst [vmem:[%s5 + $0x718] sm:$0xff] %v2074
    %3160 = vst [vmem:[%s5 + $0x720] sm:$0xff] %v2437
    %3161 = vst [vmem:[%s5 + $0x728] sm:$0xff] %v2439
    %3162 = vst [vmem:[%s5 + $0x730] sm:$0xff] %v2802
    %3163 = vst [vmem:[%s5 + $0x738] sm:$0xff] %v2804
    %3164 = vst [vmem:[%s5 + $0x740] sm:$0xff] %v1713
    %3165 = vst [vmem:[%s5 + $0x748] sm:$0xff] %v1715
    %3166 = vst [vmem:[%s5 + $0x750] sm:$0xff] %v2078
    %3167 = vst [vmem:[%s5 + $0x758] sm:$0xff] %v2080
    %3168 = vst [vmem:[%s5 + $0x760] sm:$0xff] %v2443
    %3169 = vst [vmem:[%s5 + $0x768] sm:$0xff] %v2445
    %3170 = vst [vmem:[%s5 + $0x770] sm:$0xff] %v2808
    %3171 = vst [vmem:[%s5 + $0x778] sm:$0xff] %v2810
    %3172 = vst [vmem:[%s5 + $0x780] sm:$0xff] %v1719
    %3173 = vst [vmem:[%s5 + $0x788] sm:$0xff] %v1721
    %3174 = vst [vmem:[%s5 + $0x790] sm:$0xff] %v2084
    %3175 = vst [vmem:[%s5 + $0x798] sm:$0xff] %v2086
    %3176 = vst [vmem:[%s5 + $0x7a0] sm:$0xff] %v2449
    %3177 = vst [vmem:[%s5 + $0x7a8] sm:$0xff] %v2451
    %3178 = vst [vmem:[%s5 + $0x7b0] sm:$0xff] %v2814
    %3179 = vst [vmem:[%s5 + $0x7b8] sm:$0xff] %v2816
    %3180 = vst [vmem:[%s5 + $0x7c0] sm:$0xff] %v1725
    %3181 = vst [vmem:[%s5 + $0x7c8] sm:$0xff] %v1727
    %3182 = vst [vmem:[%s5 + $0x7d0] sm:$0xff] %v2090
    %3183 = vst [vmem:[%s5 + $0x7d8] sm:$0xff] %v2092
    %3184 = vst [vmem:[%s5 + $0x7e0] sm:$0xff] %v2455
    %3185 = vst [vmem:[%s5 + $0x7e8] sm:$0xff] %v2457
    %3186 = vst [vmem:[%s5 + $0x7f0] sm:$0xff] %v2820
    %3187 = vst [vmem:[%s5 + $0x7f8] sm:$0xff] %v2822
    %3188 = vst [vmem:[%s5 + $0x800] sm:$0xff] %v1731
    %3189 = vst [vmem:[%s5 + $0x808] sm:$0xff] %v1733
    %3190 = vst [vmem:[%s5 + $0x810] sm:$0xff] %v2096
    %3191 = vst [vmem:[%s5 + $0x818] sm:$0xff] %v2098
    %3192 = vst [vmem:[%s5 + $0x820] sm:$0xff] %v2461
    %3193 = vst [vmem:[%s5 + $0x828] sm:$0xff] %v2463
    %3194 = vst [vmem:[%s5 + $0x830] sm:$0xff] %v2826
    %3195 = vst [vmem:[%s5 + $0x838] sm:$0xff] %v2828
    %3196 = vst [vmem:[%s5 + $0x840] sm:$0xff] %v1737
    %3197 = vst [vmem:[%s5 + $0x848] sm:$0xff] %v1739
    %3198 = vst [vmem:[%s5 + $0x850] sm:$0xff] %v2102
    %3199 = vst [vmem:[%s5 + $0x858] sm:$0xff] %v2104
    %3200 = vst [vmem:[%s5 + $0x860] sm:$0xff] %v2467
    %3201 = vst [vmem:[%s5 + $0x868] sm:$0xff] %v2469
    %3202 = vst [vmem:[%s5 + $0x870] sm:$0xff] %v2832
    %3203 = vst [vmem:[%s5 + $0x878] sm:$0xff] %v2834
    %3204 = vst [vmem:[%s5 + $0x880] sm:$0xff] %v1743
    %3205 = vst [vmem:[%s5 + $0x888] sm:$0xff] %v1745
    %3206 = vst [vmem:[%s5 + $0x890] sm:$0xff] %v2108
    %3207 = vst [vmem:[%s5 + $0x898] sm:$0xff] %v2110
    %3208 = vst [vmem:[%s5 + $0x8a0] sm:$0xff] %v2473
    %3209 = vst [vmem:[%s5 + $0x8a8] sm:$0xff] %v2475
    %3210 = vst [vmem:[%s5 + $0x8b0] sm:$0xff] %v2838
    %3211 = vst [vmem:[%s5 + $0x8b8] sm:$0xff] %v2840
    %3212 = vst [vmem:[%s5 + $0x8c0] sm:$0xff] %v1749
    %3213 = vst [vmem:[%s5 + $0x8c8] sm:$0xff] %v1751
    %3214 = vst [vmem:[%s5 + $0x8d0] sm:$0xff] %v2114
    %3215 = vst [vmem:[%s5 + $0x8d8] sm:$0xff] %v2116
    %3216 = vst [vmem:[%s5 + $0x8e0] sm:$0xff] %v2479
    %3217 = vst [vmem:[%s5 + $0x8e8] sm:$0xff] %v2481
    %3218 = vst [vmem:[%s5 + $0x8f0] sm:$0xff] %v2844
    %3219 = vst [vmem:[%s5 + $0x8f8] sm:$0xff] %v2846
    %3220 = vst [vmem:[%s5 + $0x900] sm:$0xff] %v1755
    %3221 = vst [vmem:[%s5 + $0x908] sm:$0xff] %v1757
    %3222 = vst [vmem:[%s5 + $0x910] sm:$0xff] %v2120
    %3223 = vst [vmem:[%s5 + $0x918] sm:$0xff] %v2122
    %3224 = vst [vmem:[%s5 + $0x920] sm:$0xff] %v2485
    %3225 = vst [vmem:[%s5 + $0x928] sm:$0xff] %v2487
    %3226 = vst [vmem:[%s5 + $0x930] sm:$0xff] %v2850
    %3227 = vst [vmem:[%s5 + $0x938] sm:$0xff] %v2852
    %3228 = vst [vmem:[%s5 + $0x940] sm:$0xff] %v1761
    %3229 = vst [vmem:[%s5 + $0x948] sm:$0xff] %v1763
    %3230 = vst [vmem:[%s5 + $0x950] sm:$0xff] %v2126
    %3231 = vst [vmem:[%s5 + $0x958] sm:$0xff] %v2128
    %3232 = vst [vmem:[%s5 + $0x960] sm:$0xff] %v2491
    %3233 = vst [vmem:[%s5 + $0x968] sm:$0xff] %v2493
    %3234 = vst [vmem:[%s5 + $0x970] sm:$0xff] %v2856
    %3235 = vst [vmem:[%s5 + $0x978] sm:$0xff] %v2858
    %3236 = vst [vmem:[%s5 + $0x980] sm:$0xff] %v1767
    %3237 = vst [vmem:[%s5 + $0x988] sm:$0xff] %v1769
    %3238 = vst [vmem:[%s5 + $0x990] sm:$0xff] %v2132
    %3239 = vst [vmem:[%s5 + $0x998] sm:$0xff] %v2134
    %3240 = vst [vmem:[%s5 + $0x9a0] sm:$0xff] %v2497
    %3241 = vst [vmem:[%s5 + $0x9a8] sm:$0xff] %v2499
    %3242 = vst [vmem:[%s5 + $0x9b0] sm:$0xff] %v2862
    %3243 = vst [vmem:[%s5 + $0x9b8] sm:$0xff] %v2864
    %3244 = vst [vmem:[%s5 + $0x9c0] sm:$0xff] %v1773
    %3245 = vst [vmem:[%s5 + $0x9c8] sm:$0xff] %v1775
    %3246 = vst [vmem:[%s5 + $0x9d0] sm:$0xff] %v2138
    %3247 = vst [vmem:[%s5 + $0x9d8] sm:$0xff] %v2140
    %3248 = vst [vmem:[%s5 + $0x9e0] sm:$0xff] %v2503
    %3249 = vst [vmem:[%s5 + $0x9e8] sm:$0xff] %v2505
    %3250 = vst [vmem:[%s5 + $0x9f0] sm:$0xff] %v2868
    %3251 = vst [vmem:[%s5 + $0x9f8] sm:$0xff] %v2870
    %3252 = vst [vmem:[%s5 + $0xa00] sm:$0xff] %v1779
    %3253 = vst [vmem:[%s5 + $0xa08] sm:$0xff] %v1781
    %3254 = vst [vmem:[%s5 + $0xa10] sm:$0xff] %v2144
    %3255 = vst [vmem:[%s5 + $0xa18] sm:$0xff] %v2146
    %3256 = vst [vmem:[%s5 + $0xa20] sm:$0xff] %v2509
    %3257 = vst [vmem:[%s5 + $0xa28] sm:$0xff] %v2511
    %3258 = vst [vmem:[%s5 + $0xa30] sm:$0xff] %v2874
    %3259 = vst [vmem:[%s5 + $0xa38] sm:$0xff] %v2876
    %3260 = vst [vmem:[%s5 + $0xa40] sm:$0xff] %v1785
    %3261 = vst [vmem:[%s5 + $0xa48] sm:$0xff] %v1787
    %3262 = vst [vmem:[%s5 + $0xa50] sm:$0xff] %v2150
    %3263 = vst [vmem:[%s5 + $0xa58] sm:$0xff] %v2152
    %3264 = vst [vmem:[%s5 + $0xa60] sm:$0xff] %v2515
    %3265 = vst [vmem:[%s5 + $0xa68] sm:$0xff] %v2517
    %3266 = vst [vmem:[%s5 + $0xa70] sm:$0xff] %v2880
    %3267 = vst [vmem:[%s5 + $0xa78] sm:$0xff] %v2882
    %3268 = vst [vmem:[%s5 + $0xa80] sm:$0xff] %v1791
    %3269 = vst [vmem:[%s5 + $0xa88] sm:$0xff] %v1793
    %3270 = vst [vmem:[%s5 + $0xa90] sm:$0xff] %v2156
    %3271 = vst [vmem:[%s5 + $0xa98] sm:$0xff] %v2158
    %3272 = vst [vmem:[%s5 + $0xaa0] sm:$0xff] %v2521
    %3273 = vst [vmem:[%s5 + $0xaa8] sm:$0xff] %v2523
    %3274 = vst [vmem:[%s5 + $0xab0] sm:$0xff] %v2886
    %3275 = vst [vmem:[%s5 + $0xab8] sm:$0xff] %v2888
    %3276 = vst [vmem:[%s5 + $0xac0] sm:$0xff] %v1797
    %3277 = vst [vmem:[%s5 + $0xac8] sm:$0xff] %v1799
    %3278 = vst [vmem:[%s5 + $0xad0] sm:$0xff] %v2162
    %3279 = vst [vmem:[%s5 + $0xad8] sm:$0xff] %v2164
    %3280 = vst [vmem:[%s5 + $0xae0] sm:$0xff] %v2527
    %3281 = vst [vmem:[%s5 + $0xae8] sm:$0xff] %v2529
    %3282 = vst [vmem:[%s5 + $0xaf0] sm:$0xff] %v2892
    %3283 = vst [vmem:[%s5 + $0xaf8] sm:$0xff] %v2894
    %3284 = vst [vmem:[%s5 + $0xb00] sm:$0xff] %v1803
    %3285 = vst [vmem:[%s5 + $0xb08] sm:$0xff] %v1805
    %3286 = vst [vmem:[%s5 + $0xb10] sm:$0xff] %v2168
    %3287 = vst [vmem:[%s5 + $0xb18] sm:$0xff] %v2170
    %3288 = vst [vmem:[%s5 + $0xb20] sm:$0xff] %v2533
    %3289 = vst [vmem:[%s5 + $0xb28] sm:$0xff] %v2535
    %3290 = vst [vmem:[%s5 + $0xb30] sm:$0xff] %v2898
    %3291 = vst [vmem:[%s5 + $0xb38] sm:$0xff] %v2900
    %3292 = vst [vmem:[%s5 + $0xb40] sm:$0xff] %v1809
    %3293 = vst [vmem:[%s5 + $0xb48] sm:$0xff] %v1811
    %3294 = vst [vmem:[%s5 + $0xb50] sm:$0xff] %v2174
    %3295 = vst [vmem:[%s5 + $0xb58] sm:$0xff] %v2176
    %3296 = vst [vmem:[%s5 + $0xb60] sm:$0xff] %v2539
    %3297 = vst [vmem:[%s5 + $0xb68] sm:$0xff] %v2541
    %3298 = vst [vmem:[%s5 + $0xb70] sm:$0xff] %v2904
    %3299 = vst [vmem:[%s5 + $0xb78] sm:$0xff] %v2906
    %3300 = vst [vmem:[%s5 + $0xb80] sm:$0xff] %v1815
    %3301 = vst [vmem:[%s5 + $0xb88] sm:$0xff] %v1817
    %3302 = vst [vmem:[%s5 + $0xb90] sm:$0xff] %v2180
    %3303 = vst [vmem:[%s5 + $0xb98] sm:$0xff] %v2182
    %3304 = vst [vmem:[%s5 + $0xba0] sm:$0xff] %v2545
    %3305 = vst [vmem:[%s5 + $0xba8] sm:$0xff] %v2547
    %3306 = vst [vmem:[%s5 + $0xbb0] sm:$0xff] %v2910
    %3307 = vst [vmem:[%s5 + $0xbb8] sm:$0xff] %v2912
    %3308 = vst [vmem:[%s5 + $0xbc0] sm:$0xff] %v1821
    %3309 = vst [vmem:[%s5 + $0xbc8] sm:$0xff] %v1823
    %3310 = vst [vmem:[%s5 + $0xbd0] sm:$0xff] %v2186
    %3311 = vst [vmem:[%s5 + $0xbd8] sm:$0xff] %v2188
    %3312 = vst [vmem:[%s5 + $0xbe0] sm:$0xff] %v2551
    %3313 = vst [vmem:[%s5 + $0xbe8] sm:$0xff] %v2553
    %3314 = vst [vmem:[%s5 + $0xbf0] sm:$0xff] %v2916
    %3315 = vst [vmem:[%s5 + $0xbf8] sm:$0xff] %v2918
    %3316 = vst [vmem:[%s5 + $0xc00] sm:$0xff] %v1827
    %3317 = vst [vmem:[%s5 + $0xc08] sm:$0xff] %v1829
    %3318 = vst [vmem:[%s5 + $0xc10] sm:$0xff] %v2192
    %3319 = vst [vmem:[%s5 + $0xc18] sm:$0xff] %v2194
    %3320 = vst [vmem:[%s5 + $0xc20] sm:$0xff] %v2557
    %3321 = vst [vmem:[%s5 + $0xc28] sm:$0xff] %v2559
    %3322 = vst [vmem:[%s5 + $0xc30] sm:$0xff] %v2922
    %3323 = vst [vmem:[%s5 + $0xc38] sm:$0xff] %v2924
    %3324 = vst [vmem:[%s5 + $0xc40] sm:$0x3] %v1833
    %3325 = vst [vmem:[%s5 + $0xc48] sm:$0x3] %v1835
    %3326 = vst [vmem:[%s5 + $0xc50] sm:$0x3] %v2198
    %3327 = vst [vmem:[%s5 + $0xc58] sm:$0x3] %v2200
    %3328 = vst [vmem:[%s5 + $0xc60] sm:$0x3] %v2563
    %3329 = vst [vmem:[%s5 + $0xc68] sm:$0x3] %v2565
    %3330 = vst [vmem:[%s5 + $0xc70] sm:$0x3] %v2928
    %3331 = vst [vmem:[%s5 + $0xc78] sm:$0x3] %v2930
    // Predicated region
    $region30: #{classification_forward.1} parent=1 // pred_check
      _
    $region31: #{classification_forward.1} parent=1 // pred_check_branch
      %3333 = sbr.rel (0) target = $region33
    $region32: #{classification_forward.1} parent=1 // pred_region
      _
    $region33: #{classification_forward.1} parent=1 // pred_fallthru
      _
    // Predicated region
    $region34: #{classification_forward.1} parent=1 // pred_check
      _
    $region35: #{classification_forward.1} parent=1 // pred_check_branch
      %3335 = sbr.rel (0) target = $region37
    $region36: #{classification_forward.1} parent=1 // pred_region
      _
    $region37: #{classification_forward.1} parent=1 // pred_fallthru
      _
    %3336 = vsyncpa [#allocation3], 1
    %3337 = vsyncpa [#allocation5], 1

</llo_original>
